<compile_context>
chip_gen: v5e
topology: v5e:2x2
jax: 0.10.0
libtpu: 0.0.40
codegen_flags: <defaults>
</compile_context>

<pallas_src>
import functools

import jax
import jax.numpy as jnp
from jax import lax
from jax.experimental import pallas as pl
from jax.experimental.pallas import tpu as pltpu


def _resblock_kernel(xpad_ref, w1_ref, b1_ref, w2_ref, b2_ref, o_ref, mid_ref,
                     *, w_valid):
    # xpad_ref: (1, H+2, Wp, Cp) f32   H-padded, W-padded, channel-padded input
    # w*_ref  : (3, 3*Cp, Cp)    bf16  per-dx, dy-fused weights
    # b*_ref  : (1, Cp)          f32   biases (channel-padded)
    # o_ref   : (1, H, Wp, Cp)         output (input dtype)
    # mid_ref : (H+2, Wp, Cp)    bf16  scratch: H-padded ReLU(conv1) activation
    _, H, Wp, Cp = o_ref.shape

    # Width-border masks (built once, shared by both convs).
    wcol = lax.broadcasted_iota(jnp.int32, (Wp, Cp), 0)
    mask_w_first = wcol == 0           # left image border (dx = -1 tap)
    mask_w_last = wcol == Wp - 1       # roll wrap-around  (dx = +1 tap)

    x_f32 = xpad_ref[0]                       # (H+2, Wp, Cp) — exact residual
    x_bf16 = x_f32.astype(jnp.bfloat16)       # MXU operand

    def conv3x3(padded_bf16, w_ref, init):
        """3x3 'same' conv: one K=3*Cp MXU matmul per dx; the dx shift is
        applied to the f32 partial sums via a sublane roll + border mask.
        `init` seeds the f32 accumulator (bias, or bias + residual)."""
        lhs = jnp.concatenate([padded_bf16[dy:dy + H] for dy in range(3)],
                              axis=-1).reshape(H * Wp, 3 * Cp)
        out = init
        for dx in range(3):
            part = jnp.dot(lhs, w_ref[dx],
                           preferred_element_type=jnp.float32)
            part = part.reshape(H, Wp, Cp)
            if dx == 0:      # out[h, w] += part[h, w-1]; zero at w == 0
                part = jnp.where(mask_w_first, 0.0,
                                 pltpu.roll(part, shift=1, axis=1))
            elif dx == 2:    # out[h, w] += part[h, w+1]; zero at w == Wp-1
                part = jnp.where(mask_w_last, 0.0,
                                 pltpu.roll(part, shift=Wp - 1, axis=1))
            out = out + part
        return out

    # ---- conv1 + bias + ReLU ---------------------------------------------
    y1 = jnp.maximum(conv3x3(x_bf16, w1_ref, b1_ref[...]), 0.0)
    if w_valid != Wp:
        # Padded W columns must behave as zero padding for conv2's +-1 taps.
        y1 = jnp.where(wcol < w_valid, y1, 0.0)

    # Stash the activation in the H-padded scratch.  Only the two halo rows
    # need zeroing; rewriting them every step is ~free and megacore-safe.
    zero_row = jnp.zeros((1, Wp, Cp), jnp.bfloat16)
    mid_ref[pl.ds(0, 1), :, :] = zero_row
    mid_ref[pl.ds(H + 1, 1), :, :] = zero_row
    mid_ref[pl.ds(1, H), :, :] = y1.astype(jnp.bfloat16)

    # ---- conv2: accumulator seeded with bias + exact f32 residual ----------
    init2 = x_f32[1:H + 1] + b2_ref[...]
    y2 = conv3x3(mid_ref[...], w2_ref, init2)
    o_ref[0] = y2.astype(o_ref.dtype)


def resnet_block(x_nchw, w1_oihw, b1, w2_oihw, b2):
    """ResnetBlock forward. x_nchw: (B, C, H, W); weights OIHW like PyTorch."""
    B, C, H, W = x_nchw.shape
    lane, sub = 128, 16
    Cp = -(-C // lane) * lane          # channel pad -> lane-dense MXU / stores
    Wp = -(-W // sub) * sub            # sublane-friendly width
    Hp = H + 2

    # NCHW -> NHWC, zero-pad H by 1, W to Wp, channels to Cp.  Kept in f32 so
    # the residual add inside the kernel is exact; the bf16 MXU cast happens
    # in VMEM.
    x = jnp.transpose(x_nchw, (0, 2, 3, 1)).astype(jnp.float32)
    xpad = jnp.pad(x, ((0, 0), (1, 1), (0, Wp - W), (0, Cp - C)))

    def prep_w(w_oihw):
        w = jnp.transpose(w_oihw, (2, 3, 1, 0))                     # OIHW->HWIO
        w = jnp.pad(w, ((0, 0), (0, 0), (0, Cp - C), (0, Cp - C)))
        # (kh, kw, ci, co) -> (kw, kh*Cp + ci, co): dy-fused, K = 3*Cp per dx.
        w = jnp.transpose(w, (1, 0, 2, 3)).reshape(3, 3 * Cp, Cp)
        return w.astype(jnp.bfloat16)

    w1p, w2p = prep_w(w1_oihw), prep_w(w2_oihw)
    b1p = jnp.pad(b1, (0, Cp - C)).reshape(1, Cp).astype(jnp.float32)
    b2p = jnp.pad(b2, (0, Cp - C)).reshape(1, Cp).astype(jnp.float32)

    # Explicit VMEM budget: double-buffered in/out blocks + weights + scratch
    # + live temps, with 2x headroom, capped at v7x's 64 MiB physical VMEM.
    f4, f2 = 4, 2
    est = (2 * Hp * Wp * Cp * f4              # input block x2 buffers
           + 2 * H * Wp * Cp * f4             # output block x2 buffers
           + 2 * 2 * 3 * 3 * Cp * Cp * f2     # both fused weights x2 buffers
           + Hp * Wp * Cp * f2                # mid scratch
           + Hp * Wp * Cp * (f4 + f2)         # x_f32 / x_bf16 values
           + H * Wp * 3 * Cp * f2             # fused lhs slab
           + 4 * H * Wp * Cp * f4)            # live f32 temps
    vmem_limit = int(min(64 * 2 ** 20, max(32 * 2 ** 20, 2 * est)))

    out_nhwc = pl.pallas_call(
        functools.partial(_resblock_kernel, w_valid=W),
        out_shape=jax.ShapeDtypeStruct((B, H, Wp, Cp), x_nchw.dtype),
        grid_spec=pltpu.PrefetchScalarGridSpec(
            num_scalar_prefetch=0,
            grid=(B,),
            in_specs=[
                pl.BlockSpec((1, Hp, Wp, Cp), lambda b: (b, 0, 0, 0)),
                pl.BlockSpec((3, 3 * Cp, Cp), lambda b: (0, 0, 0)),
                pl.BlockSpec((1, Cp), lambda b: (0, 0)),
                pl.BlockSpec((3, 3 * Cp, Cp), lambda b: (0, 0, 0)),
                pl.BlockSpec((1, Cp), lambda b: (0, 0)),
            ],
            out_specs=pl.BlockSpec((1, H, Wp, Cp), lambda b: (b, 0, 0, 0)),
            scratch_shapes=[pltpu.VMEM((Hp, Wp, Cp), jnp.bfloat16)],
        ),
        compiler_params=pltpu.CompilerParams(
            dimension_semantics=("parallel",),
            vmem_limit_bytes=vmem_limit),
    )(xpad, w1p, b1p, w2p, b2p)

    # Drop W / channel padding, back to NCHW.
    return jnp.transpose(out_nhwc[:, :, :W, :C], (0, 3, 1, 2))


def _reference_f32(x_nchw, w1_oihw, b1, w2_oihw, b2):
    """Pure-JAX f32 reference (NHWC convs)."""
    x = jnp.transpose(x_nchw, (0, 2, 3, 1))
    w1 = jnp.transpose(w1_oihw, (2, 3, 1, 0))
    w2 = jnp.transpose(w2_oihw, (2, 3, 1, 0))
    dn = ("NHWC", "HWIO", "NHWC")
    hi = lax.Precision.HIGHEST
    y = lax.conv_general_dilated(x, w1, (1, 1), "SAME", dimension_numbers=dn,
                                 precision=hi)
    y = jnp.maximum(y + b1[None, None, None, :], 0.0)
    y = lax.conv_general_dilated(y, w2, (1, 1), "SAME", dimension_numbers=dn,
                                 precision=hi)
    y = y + b2[None, None, None, :] + x
    return jnp.transpose(y, (0, 3, 1, 2))


def _reference_bf16(x_nchw, w1_oihw, b1, w2_oihw, b2):
    """Reference with the kernel's numerics: bf16 conv operands, f32
    accumulation, f32 bias adds, exact f32 residual."""
    q = lambda a: a.astype(jnp.bfloat16).astype(jnp.float32)
    x = jnp.transpose(x_nchw, (0, 2, 3, 1))
    w1 = q(jnp.transpose(w1_oihw, (2, 3, 1, 0)))
    w2 = q(jnp.transpose(w2_oihw, (2, 3, 1, 0)))
    dn = ("NHWC", "HWIO", "NHWC")
    hi = lax.Precision.HIGHEST
    y = lax.conv_general_dilated(q(x), w1, (1, 1), "SAME",
                                 dimension_numbers=dn, precision=hi)
    y = jnp.maximum(y + b1[None, None, None, :], 0.0)
    y = lax.conv_general_dilated(q(y), w2, (1, 1), "SAME",
                                 dimension_numbers=dn, precision=hi)
    y = y + b2[None, None, None, :] + x
    return jnp.transpose(y, (0, 3, 1, 2))


if __name__ == "__main__":
    key = jax.random.PRNGKey(0)
    kx, kw1, kb1, kw2, kb2 = jax.random.split(key, 5)

    B, C, H, W, K = 2, 4, 16, 16, 3
    x = jax.random.normal(kx, (B, C, H, W), dtype=jnp.float32)
    # Deterministic synthetic parameters (PyTorch shapes: OIHW weights, (C,) bias).
    fan_in = C * K * K
    bound = 1.0 / (fan_in ** 0.5)
    w1 = jax.random.uniform(kw1, (C, C, K, K), jnp.float32, -bound, bound)
    b1 = jax.random.uniform(kb1, (C,), jnp.float32, -bound, bound)
    w2 = jax.random.uniform(kw2, (C, C, K, K), jnp.float32, -bound, bound)
    b2 = jax.random.uniform(kb2, (C,), jnp.float32, -bound, bound)

    out = jax.block_until_ready(resnet_block(x, w1, b1, w2, b2))
    ref_q = jax.block_until_ready(_reference_bf16(x, w1, b1, w2, b2))
    ref_f = jax.block_until_ready(_reference_f32(x, w1, b1, w2, b2))

    assert out.shape == (B, C, H, W), out.shape
    err_q = float(jnp.max(jnp.abs(out - ref_q)))
    err_f = float(jnp.max(jnp.abs(out - ref_f)))
    # Tight check vs a reference with the kernel's numerics (bf16 MXU operands,
    # f32 accumulation, exact f32 residual); loose sanity check vs pure f32.
    assert jnp.allclose(out, ref_q, atol=1e-3, rtol=1e-3), err_q
    assert jnp.allclose(out, ref_f, atol=5e-2, rtol=5e-2), err_f
    print("KERNEL_OK")
</pallas_src>

<mosaic_0001>
module attributes {stable_mosaic.version = 11 : i64} {
  func.func @_resblock_kernel(%arg0: i32, %arg1: memref<1x18x16x128xf32, #tpu.memory_space<vmem>>, %arg2: memref<3x384x128xbf16, #tpu.memory_space<vmem>>, %arg3: memref<1x128xf32, #tpu.memory_space<vmem>>, %arg4: memref<3x384x128xbf16, #tpu.memory_space<vmem>>, %arg5: memref<1x128xf32, #tpu.memory_space<vmem>>, %arg6: memref<1x16x16x128xf32, #tpu.memory_space<vmem>>, %arg7: memref<18x16x128xbf16, #tpu.memory_space<vmem>>) attributes {dimension_semantics = [#tpu.dimension_semantics<parallel>], iteration_bounds = array<i64: 2>, scalar_prefetch = 0 : i64, scratch_operands = 1 : i64, tpu.core_type = #tpu.core_type<tc>, window_params = [{transform_indices = @transform_0, window_bounds = array<i64: 1, 18, 16, 128>}, {pipeline_mode = #tpu.pipeline_mode<synchronous>, transform_indices = @transform_1, window_bounds = array<i64: 3, 384, 128>}, {pipeline_mode = #tpu.pipeline_mode<synchronous>, transform_indices = @transform_2, window_bounds = array<i64: 1, 128>}, {pipeline_mode = #tpu.pipeline_mode<synchronous>, transform_indices = @transform_3, window_bounds = array<i64: 3, 384, 128>}, {pipeline_mode = #tpu.pipeline_mode<synchronous>, transform_indices = @transform_4, window_bounds = array<i64: 1, 128>}, {transform_indices = @transform_5, window_bounds = array<i64: 1, 16, 16, 128>}]} {
    %0 = tpu.iota {dimensions = array<i32: 0>} : vector<16x128xi32>
    %c0_i32 = arith.constant 0 : i32
    %1 = vector.broadcast %c0_i32 : i32 to vector<16x128xi32>
    %2 = arith.cmpi eq, %0, %1 : vector<16x128xi32>
    %c15_i32 = arith.constant 15 : i32
    %3 = vector.broadcast %c15_i32 : i32 to vector<16x128xi32>
    %4 = arith.cmpi eq, %0, %3 : vector<16x128xi32>
    %c0 = arith.constant 0 : index
    %c0_0 = arith.constant 0 : index
    %c0_1 = arith.constant 0 : index
    %c0_2 = arith.constant 0 : index
    %5 = vector.load %arg1[%c0, %c0_0, %c0_1, %c0_2] : memref<1x18x16x128xf32, #tpu.memory_space<vmem>>, vector<1x18x16x128xf32>
    %6 = vector.shape_cast %5 : vector<1x18x16x128xf32> to vector<18x16x128xf32>
    %7 = arith.truncf %6 : vector<18x16x128xf32> to vector<18x16x128xbf16>
    %c0_3 = arith.constant 0 : index
    %c0_4 = arith.constant 0 : index
    %8 = vector.load %arg3[%c0_3, %c0_4] : memref<1x128xf32, #tpu.memory_space<vmem>>, vector<1x128xf32>
    %9 = vector.extract_strided_slice %7 {offsets = [0, 0, 0], sizes = [16, 16, 128], strides = [1, 1, 1]} : vector<18x16x128xbf16> to vector<16x16x128xbf16>
    %10 = vector.extract_strided_slice %7 {offsets = [1, 0, 0], sizes = [16, 16, 128], strides = [1, 1, 1]} : vector<18x16x128xbf16> to vector<16x16x128xbf16>
    %11 = vector.extract_strided_slice %7 {offsets = [2, 0, 0], sizes = [16, 16, 128], strides = [1, 1, 1]} : vector<18x16x128xbf16> to vector<16x16x128xbf16>
    %12 = tpu.concatenate %9, %10, %11 in 2 : vector<16x16x128xbf16>, vector<16x16x128xbf16>, vector<16x16x128xbf16> -> vector<16x16x384xbf16>
    %13 = vector.shape_cast %12 : vector<16x16x384xbf16> to vector<256x384xbf16>
    %c0_5 = arith.constant 0 : index
    %c0_6 = arith.constant 0 : index
    %c0_7 = arith.constant 0 : index
    %14 = vector.load %arg2[%c0_5, %c0_6, %c0_7] : memref<3x384x128xbf16, #tpu.memory_space<vmem>>, vector<1x384x128xbf16>
    %15 = vector.shape_cast %14 : vector<1x384x128xbf16> to vector<384x128xbf16>
    %cst = arith.constant dense<0.000000e+00> : vector<256x128xf32>
    %16 = tpu.matmul %13, %15, %cst {dimension_numbers = #tpu.dot_dimension_numbers<[1], [0], [0], [1], [0, 0, 1, 1], [], []>} : vector<256x384xbf16>, vector<384x128xbf16>, vector<256x128xf32> -> vector<256x128xf32>
    %17 = vector.shape_cast %16 : vector<256x128xf32> to vector<16x16x128xf32>
    %c1_i32 = arith.constant 1 : i32
    %18 = tpu.dynamic_rotate %17 by %c1_i32 dim 1 : vector<16x16x128xf32>, i32 -> vector<16x16x128xf32>
    %cst_8 = arith.constant 0.000000e+00 : f32
    %19 = vector.shape_cast %2 : vector<16x128xi1> to vector<1x16x128xi1>
    %20 = vector.broadcast %19 : vector<1x16x128xi1> to vector<16x16x128xi1>
    %21 = vector.broadcast %cst_8 : f32 to vector<16x16x128xf32>
    %22 = arith.select %20, %21, %18 : vector<16x16x128xi1>, vector<16x16x128xf32>
    %23 = vector.shape_cast %8 : vector<1x128xf32> to vector<1x1x128xf32>
    %24 = vector.broadcast %23 : vector<1x1x128xf32> to vector<16x16x128xf32>
    %25 = arith.addf %24, %22 : vector<16x16x128xf32>
    %c1 = arith.constant 1 : index
    %c0_9 = arith.constant 0 : index
    %c0_10 = arith.constant 0 : index
    %26 = vector.load %arg2[%c1, %c0_9, %c0_10] : memref<3x384x128xbf16, #tpu.memory_space<vmem>>, vector<1x384x128xbf16>
    %27 = vector.shape_cast %26 : vector<1x384x128xbf16> to vector<384x128xbf16>
    %cst_11 = arith.constant dense<0.000000e+00> : vector<256x128xf32>
    %28 = tpu.matmul %13, %27, %cst_11 {dimension_numbers = #tpu.dot_dimension_numbers<[1], [0], [0], [1], [0, 0, 1, 1], [], []>} : vector<256x384xbf16>, vector<384x128xbf16>, vector<256x128xf32> -> vector<256x128xf32>
    %29 = vector.shape_cast %28 : vector<256x128xf32> to vector<16x16x128xf32>
    %30 = arith.addf %25, %29 : vector<16x16x128xf32>
    %c2 = arith.constant 2 : index
    %c0_12 = arith.constant 0 : index
    %c0_13 = arith.constant 0 : index
    %31 = vector.load %arg2[%c2, %c0_12, %c0_13] : memref<3x384x128xbf16, #tpu.memory_space<vmem>>, vector<1x384x128xbf16>
    %32 = vector.shape_cast %31 : vector<1x384x128xbf16> to vector<384x128xbf16>
    %cst_14 = arith.constant dense<0.000000e+00> : vector<256x128xf32>
    %33 = tpu.matmul %13, %32, %cst_14 {dimension_numbers = #tpu.dot_dimension_numbers<[1], [0], [0], [1], [0, 0, 1, 1], [], []>} : vector<256x384xbf16>, vector<384x128xbf16>, vector<256x128xf32> -> vector<256x128xf32>
    %34 = vector.shape_cast %33 : vector<256x128xf32> to vector<16x16x128xf32>
    %c15_i32_15 = arith.constant 15 : i32
    %35 = tpu.dynamic_rotate %34 by %c15_i32_15 dim 1 : vector<16x16x128xf32>, i32 -> vector<16x16x128xf32>
    %cst_16 = arith.constant 0.000000e+00 : f32
    %36 = vector.shape_cast %4 : vector<16x128xi1> to vector<1x16x128xi1>
    %37 = vector.broadcast %36 : vector<1x16x128xi1> to vector<16x16x128xi1>
    %38 = vector.broadcast %cst_16 : f32 to vector<16x16x128xf32>
    %39 = arith.select %37, %38, %35 : vector<16x16x128xi1>, vector<16x16x128xf32>
    %40 = arith.addf %30, %39 : vector<16x16x128xf32>
    %cst_17 = arith.constant 0.000000e+00 : f32
    %41 = vector.broadcast %cst_17 : f32 to vector<16x16x128xf32>
    %42 = arith.maximumf %40, %41 : vector<16x16x128xf32>
    %cst_18 = arith.constant 0.000000e+00 : bf16
    %43 = vector.broadcast %cst_18 : bf16 to vector<1x16x128xbf16>
    %c0_19 = arith.constant 0 : index
    %c0_20 = arith.constant 0 : index
    %c0_21 = arith.constant 0 : index
    %44 = vector.load %arg7[%c0_19, %c0_20, %c0_21] : memref<18x16x128xbf16, #tpu.memory_space<vmem>>, vector<1x16x128xbf16>
    tpu.vector_store %arg7[%c0_19, %c0_20, %c0_21], %43 {strides = array<i32>} : memref<18x16x128xbf16, #tpu.memory_space<vmem>>, vector<1x16x128xbf16>,
    %c17 = arith.constant 17 : index
    %c0_22 = arith.constant 0 : index
    %c0_23 = arith.constant 0 : index
    %45 = vector.load %arg7[%c17, %c0_22, %c0_23] : memref<18x16x128xbf16, #tpu.memory_space<vmem>>, vector<1x16x128xbf16>
    tpu.vector_store %arg7[%c17, %c0_22, %c0_23], %43 {strides = array<i32>} : memref<18x16x128xbf16, #tpu.memory_space<vmem>>, vector<1x16x128xbf16>,
    %46 = arith.truncf %42 : vector<16x16x128xf32> to vector<16x16x128xbf16>
    %c1_24 = arith.constant 1 : index
    %c0_25 = arith.constant 0 : index
    %c0_26 = arith.constant 0 : index
    %47 = vector.load %arg7[%c1_24, %c0_25, %c0_26] : memref<18x16x128xbf16, #tpu.memory_space<vmem>>, vector<16x16x128xbf16>
    tpu.vector_store %arg7[%c1_24, %c0_25, %c0_26], %46 {strides = array<i32>} : memref<18x16x128xbf16, #tpu.memory_space<vmem>>, vector<16x16x128xbf16>,
    %48 = vector.extract_strided_slice %6 {offsets = [1, 0, 0], sizes = [16, 16, 128], strides = [1, 1, 1]} : vector<18x16x128xf32> to vector<16x16x128xf32>
    %c0_27 = arith.constant 0 : index
    %c0_28 = arith.constant 0 : index
    %49 = vector.load %arg5[%c0_27, %c0_28] : memref<1x128xf32, #tpu.memory_space<vmem>>, vector<1x128xf32>
    %50 = vector.shape_cast %49 : vector<1x128xf32> to vector<1x1x128xf32>
    %51 = vector.broadcast %50 : vector<1x1x128xf32> to vector<16x16x128xf32>
    %52 = arith.addf %48, %51 : vector<16x16x128xf32>
    %c0_29 = arith.constant 0 : index
    %c0_30 = arith.constant 0 : index
    %c0_31 = arith.constant 0 : index
    %53 = vector.load %arg7[%c0_29, %c0_30, %c0_31] : memref<18x16x128xbf16, #tpu.memory_space<vmem>>, vector<18x16x128xbf16>
    %54 = vector.extract_strided_slice %53 {offsets = [0, 0, 0], sizes = [16, 16, 128], strides = [1, 1, 1]} : vector<18x16x128xbf16> to vector<16x16x128xbf16>
    %55 = vector.extract_strided_slice %53 {offsets = [1, 0, 0], sizes = [16, 16, 128], strides = [1, 1, 1]} : vector<18x16x128xbf16> to vector<16x16x128xbf16>
    %56 = vector.extract_strided_slice %53 {offsets = [2, 0, 0], sizes = [16, 16, 128], strides = [1, 1, 1]} : vector<18x16x128xbf16> to vector<16x16x128xbf16>
    %57 = tpu.concatenate %54, %55, %56 in 2 : vector<16x16x128xbf16>, vector<16x16x128xbf16>, vector<16x16x128xbf16> -> vector<16x16x384xbf16>
    %58 = vector.shape_cast %57 : vector<16x16x384xbf16> to vector<256x384xbf16>
    %c0_32 = arith.constant 0 : index
    %c0_33 = arith.constant 0 : index
    %c0_34 = arith.constant 0 : index
    %59 = vector.load %arg4[%c0_32, %c0_33, %c0_34] : memref<3x384x128xbf16, #tpu.memory_space<vmem>>, vector<1x384x128xbf16>
    %60 = vector.shape_cast %59 : vector<1x384x128xbf16> to vector<384x128xbf16>
    %cst_35 = arith.constant dense<0.000000e+00> : vector<256x128xf32>
    %61 = tpu.matmul %58, %60, %cst_35 {dimension_numbers = #tpu.dot_dimension_numbers<[1], [0], [0], [1], [0, 0, 1, 1], [], []>} : vector<256x384xbf16>, vector<384x128xbf16>, vector<256x128xf32> -> vector<256x128xf32>
    %62 = vector.shape_cast %61 : vector<256x128xf32> to vector<16x16x128xf32>
    %c1_i32_36 = arith.constant 1 : i32
    %63 = tpu.dynamic_rotate %62 by %c1_i32_36 dim 1 : vector<16x16x128xf32>, i32 -> vector<16x16x128xf32>
    %cst_37 = arith.constant 0.000000e+00 : f32
    %64 = vector.shape_cast %2 : vector<16x128xi1> to vector<1x16x128xi1>
    %65 = vector.broadcast %64 : vector<1x16x128xi1> to vector<16x16x128xi1>
    %66 = vector.broadcast %cst_37 : f32 to vector<16x16x128xf32>
    %67 = arith.select %65, %66, %63 : vector<16x16x128xi1>, vector<16x16x128xf32>
    %68 = arith.addf %52, %67 : vector<16x16x128xf32>
    %c1_38 = arith.constant 1 : index
    %c0_39 = arith.constant 0 : index
    %c0_40 = arith.constant 0 : index
    %69 = vector.load %arg4[%c1_38, %c0_39, %c0_40] : memref<3x384x128xbf16, #tpu.memory_space<vmem>>, vector<1x384x128xbf16>
    %70 = vector.shape_cast %69 : vector<1x384x128xbf16> to vector<384x128xbf16>
    %cst_41 = arith.constant dense<0.000000e+00> : vector<256x128xf32>
    %71 = tpu.matmul %58, %70, %cst_41 {dimension_numbers = #tpu.dot_dimension_numbers<[1], [0], [0], [1], [0, 0, 1, 1], [], []>} : vector<256x384xbf16>, vector<384x128xbf16>, vector<256x128xf32> -> vector<256x128xf32>
    %72 = vector.shape_cast %71 : vector<256x128xf32> to vector<16x16x128xf32>
    %73 = arith.addf %68, %72 : vector<16x16x128xf32>
    %c2_42 = arith.constant 2 : index
    %c0_43 = arith.constant 0 : index
    %c0_44 = arith.constant 0 : index
    %74 = vector.load %arg4[%c2_42, %c0_43, %c0_44] : memref<3x384x128xbf16, #tpu.memory_space<vmem>>, vector<1x384x128xbf16>
    %75 = vector.shape_cast %74 : vector<1x384x128xbf16> to vector<384x128xbf16>
    %cst_45 = arith.constant dense<0.000000e+00> : vector<256x128xf32>
    %76 = tpu.matmul %58, %75, %cst_45 {dimension_numbers = #tpu.dot_dimension_numbers<[1], [0], [0], [1], [0, 0, 1, 1], [], []>} : vector<256x384xbf16>, vector<384x128xbf16>, vector<256x128xf32> -> vector<256x128xf32>
    %77 = vector.shape_cast %76 : vector<256x128xf32> to vector<16x16x128xf32>
    %c15_i32_46 = arith.constant 15 : i32
    %78 = tpu.dynamic_rotate %77 by %c15_i32_46 dim 1 : vector<16x16x128xf32>, i32 -> vector<16x16x128xf32>
    %cst_47 = arith.constant 0.000000e+00 : f32
    %79 = vector.shape_cast %4 : vector<16x128xi1> to vector<1x16x128xi1>
    %80 = vector.broadcast %79 : vector<1x16x128xi1> to vector<16x16x128xi1>
    %81 = vector.broadcast %cst_47 : f32 to vector<16x16x128xf32>
    %82 = arith.select %80, %81, %78 : vector<16x16x128xi1>, vector<16x16x128xf32>
    %83 = arith.addf %73, %82 : vector<16x16x128xf32>
    %c0_48 = arith.constant 0 : index
    %c0_49 = arith.constant 0 : index
    %c0_50 = arith.constant 0 : index
    %c0_51 = arith.constant 0 : index
    %84 = vector.load %arg6[%c0_48, %c0_49, %c0_50, %c0_51] : memref<1x16x16x128xf32, #tpu.memory_space<vmem>>, vector<1x16x16x128xf32>
    %85 = vector.shape_cast %84 : vector<1x16x16x128xf32> to vector<16x16x128xf32>
    %86 = vector.shape_cast %83 : vector<16x16x128xf32> to vector<1x16x16x128xf32>
    tpu.vector_store %arg6[%c0_48, %c0_49, %c0_50, %c0_51], %86 {strides = array<i32>} : memref<1x16x16x128xf32, #tpu.memory_space<vmem>>, vector<1x16x16x128xf32>,
    return
  }
  func.func @transform_0(%arg0: i32) -> (i32, i32, i32, i32) {
    %c0_i32 = arith.constant 0 : i32
    %c0_i32_0 = arith.constant 0 : i32
    %c0_i32_1 = arith.constant 0 : i32
    %c0_i32_2 = arith.constant 0 : i32
    return %arg0, %c0_i32, %c0_i32_0, %c0_i32_1 : i32, i32, i32, i32
  }
  func.func @transform_1(%arg0: i32) -> (i32, i32, i32) {
    %c0_i32 = arith.constant 0 : i32
    %c0_i32_0 = arith.constant 0 : i32
    %c0_i32_1 = arith.constant 0 : i32
    %c0_i32_2 = arith.constant 0 : i32
    return %c0_i32, %c0_i32_0, %c0_i32_1 : i32, i32, i32
  }
  func.func @transform_2(%arg0: i32) -> (i32, i32) {
    %c0_i32 = arith.constant 0 : i32
    %c0_i32_0 = arith.constant 0 : i32
    %c0_i32_1 = arith.constant 0 : i32
    return %c0_i32, %c0_i32_0 : i32, i32
  }
  func.func @transform_3(%arg0: i32) -> (i32, i32, i32) {
    %c0_i32 = arith.constant 0 : i32
    %c0_i32_0 = arith.constant 0 : i32
    %c0_i32_1 = arith.constant 0 : i32
    %c0_i32_2 = arith.constant 0 : i32
    return %c0_i32, %c0_i32_0, %c0_i32_1 : i32, i32, i32
  }
  func.func @transform_4(%arg0: i32) -> (i32, i32) {
    %c0_i32 = arith.constant 0 : i32
    %c0_i32_0 = arith.constant 0 : i32
    %c0_i32_1 = arith.constant 0 : i32
    return %c0_i32, %c0_i32_0 : i32, i32
  }
  func.func @transform_5(%arg0: i32) -> (i32, i32, i32, i32) {
    %c0_i32 = arith.constant 0 : i32
    %c0_i32_0 = arith.constant 0 : i32
    %c0_i32_1 = arith.constant 0 : i32
    %c0_i32_2 = arith.constant 0 : i32
    return %arg0, %c0_i32, %c0_i32_0, %c0_i32_1 : i32, i32, i32, i32
  }
}

</mosaic_0001>

<llo_original>
// kernel: tpu_custom_call.1
$region0: #{tpu_custom_call.1}
  #allocation0 [shape = 'u32[]', space=smem, size = 0x4, offset = 0x4, fixed_abs, tag = 'smem constant byte address 0x4 - core index']
  #allocation1 [shape = 'u32[72,128]{1,0:T(1,128)}', space=vmem, size = 0x9000, scoped, tag = 'internal scratch']
  #allocation2 [shape = 'bf16[18,16,128]{2,1,0:T(8,128)(2,1)}', space=vmem, size = 0x12000, scoped, tag = 'scratch operand']
  %s0 = inlined_call_operand.hbm [shape: f32[2,18,16,128], index: 0, kind: input, shape index: {}]
  %s1 = inlined_call_operand.hbm [shape: bf16[3,384,128], index: 1, kind: input, shape index: {}]
  %s2 = inlined_call_operand.vmem [shape: f32[1,128], index: 2, kind: input, shape index: {}]
  %s3 = inlined_call_operand.hbm [shape: bf16[3,384,128], index: 3, kind: input, shape index: {}]
  %s4 = inlined_call_operand.vmem [shape: f32[1,128], index: 4, kind: input, shape index: {}]
  %s5 = inlined_call_operand.hbm [shape: f32[2,16,16,128], index: 5, kind: output, shape index: {}]
  %s6 = sld [smem:[#allocation0]]
  $region65: #{tpu_custom_call.1} parent=0
    _
  %s8 = ssub.s32 1, %s6
  %s9 = scalar_select 0, %s8, %s6
  $region1: #{tpu_custom_call.1} parent=0
    #allocation3 [shape = 'u8[294912]{0}', space=vmem, size = 0x48000, scoped, tag = 'input window, operand 0']
    #allocation4 [shape = 's32[2]{0}', space=sflag, size = 0x8, scoped, tag = 'scoped memory for tpu_custom_call.1']
    #allocation5 [shape = 's32[2]{0}', space=sflag, size = 0x8, scoped, tag = 'scoped memory for tpu_custom_call.1']
    #allocation6 [shape = 'u8[294912]{0}', space=vmem, size = 0x48000, scoped, tag = 'input window, operand 1, single buffered']
    #allocation7 [shape = 's32[1]{0}', space=sflag, size = 0x4, scoped, tag = 'scoped memory for tpu_custom_call.1']
    #allocation8 [shape = 'u8[294912]{0}', space=vmem, size = 0x48000, scoped, tag = 'input window, operand 3, single buffered']
    #allocation9 [shape = 'u8[262144]{0}', space=vmem, size = 0x40000, scoped, tag = 'output window, operand 0']
    %10 = vsyncpa [#allocation4], 0
    %s11 = scalar_lea.sflag [#allocation4], 1
    %12 = vsyncpa %s11, 0
    %13 = vsyncpa [#allocation7], 0
    %14 = vsyncpa [#allocation5], 0
    %s15 = scalar_lea.sflag [#allocation5], 1
    %16 = vsyncpa %s15, 0
    loop: start=0, step=1, limit=4
    $region2: #{tpu_custom_call.1} parent=1 // loop_pre_header
      _
    $region3: #{tpu_custom_call.1} parent=1 // loop_header
      %s18 = sphi 0, %s22
      %p19 = scmp.ge.s32.totalorder %s18, 4
      %s28 = sphi 0, %s30
      %s31 = sphi 0, %s28
      %s32 = sphi 0, %s31
      %s48 = sphi 0, %s32
      %s52 = sphi 0, %s52
      %s54 = sphi 0, %s52
      %s55 = sphi 0, %s54
      %s69 = sphi 0, %s55
      %s73 = sphi 0, %s73
      %s75 = sphi 0, %s73
      %s76 = sphi 0, %s75
      %s90 = sphi 0, %s76
      %s94 = sphi 0, %s94
      %s96 = sphi 0, %s94
      %s97 = sphi 0, %s96
      %s111 = sphi 0, %s97
      %s115 = sphi 0, %s115
      %s117 = sphi 0, %s115
      %s118 = sphi 0, %s117
      %s132 = sphi 0, %s118
      %s138 = sphi 0, %s140
      %s141 = sphi 0, %s138
      %s142 = sphi 0, %s141
      %s158 = sphi 0, %s142
    $region4: #{tpu_custom_call.1} parent=1 // loop_header_branch
      %21 = sbr.rel (%p19) target = $region8
    $region5: #{tpu_custom_call.1} parent=1 // loop_body
      %s23 = ssub.s32 %s18, 1
      %s24 = ssub.s32 %s18, 2
      %s25 = sadd.s32 %s18, 1
      %s26 = ssub.s32 %s18, %s25
      %p27 = scmp.eq.s32.totalorder %s26, 0
      %s29 = sadd.s32 %s28, 1
      %s30 = scalar_select %p27, %s28, %s29
      %p33 = pneg %p27
      %p34 = scmp.eq.s32.totalorder %s18, 1
      %p35 = por %p33, %p34
      %p36 = scmp.ne.s32.totalorder %s28, %s31
      %p37 = scmp.eq.s32.totalorder %s18, 0
      %p38 = por %p36, %p37
      %p39 = scmp.ne.s32.totalorder %s28, %s31
      %p40 = scmp.eq.s32.totalorder %s23, 1
      %p41 = por %p39, %p40
      %p42 = scmp.ne.s32.totalorder %s31, %s32
      %p43 = scmp.eq.s32.totalorder %s23, 0
      %p44 = por %p42, %p43
      %p45 = scmp.ne.s32.totalorder %s31, %s32
      %p46 = scmp.eq.s32.totalorder %s24, 1
      %p47 = por %p45, %p46
      %p49 = scmp.ne.s32.totalorder %s32, %s48
      %p50 = scmp.eq.s32.totalorder %s24, 0
      %p51 = por %p49, %p50
      %s53 = sadd.s32 %s52, 1
      %p56 = scmp.eq.s32.totalorder %s18, 1
      %p57 = scmp.ne.s32.totalorder %s52, %s54
      %p58 = scmp.eq.s32.totalorder %s18, 0
      %p59 = por %p57, %p58
      %p60 = scmp.ne.s32.totalorder %s52, %s54
      %p61 = scmp.eq.s32.totalorder %s23, 1
      %p62 = por %p60, %p61
      %p63 = scmp.ne.s32.totalorder %s54, %s55
      %p64 = scmp.eq.s32.totalorder %s23, 0
      %p65 = por %p63, %p64
      %p66 = scmp.ne.s32.totalorder %s54, %s55
      %p67 = scmp.eq.s32.totalorder %s24, 1
      %p68 = por %p66, %p67
      %p70 = scmp.ne.s32.totalorder %s55, %s69
      %p71 = scmp.eq.s32.totalorder %s24, 0
      %p72 = por %p70, %p71
      %s74 = sadd.s32 %s73, 1
      %p77 = scmp.eq.s32.totalorder %s18, 1
      %p78 = scmp.ne.s32.totalorder %s73, %s75
      %p79 = scmp.eq.s32.totalorder %s18, 0
      %p80 = por %p78, %p79
      %p81 = scmp.ne.s32.totalorder %s73, %s75
      %p82 = scmp.eq.s32.totalorder %s23, 1
      %p83 = por %p81, %p82
      %p84 = scmp.ne.s32.totalorder %s75, %s76
      %p85 = scmp.eq.s32.totalorder %s23, 0
      %p86 = por %p84, %p85
      %p87 = scmp.ne.s32.totalorder %s75, %s76
      %p88 = scmp.eq.s32.totalorder %s24, 1
      %p89 = por %p87, %p88
      %p91 = scmp.ne.s32.totalorder %s76, %s90
      %p92 = scmp.eq.s32.totalorder %s24, 0
      %p93 = por %p91, %p92
      %s95 = sadd.s32 %s94, 1
      %p98 = scmp.eq.s32.totalorder %s18, 1
      %p99 = scmp.ne.s32.totalorder %s94, %s96
      %p100 = scmp.eq.s32.totalorder %s18, 0
      %p101 = por %p99, %p100
      %p102 = scmp.ne.s32.totalorder %s94, %s96
      %p103 = scmp.eq.s32.totalorder %s23, 1
      %p104 = por %p102, %p103
      %p105 = scmp.ne.s32.totalorder %s96, %s97
      %p106 = scmp.eq.s32.totalorder %s23, 0
      %p107 = por %p105, %p106
      %p108 = scmp.ne.s32.totalorder %s96, %s97
      %p109 = scmp.eq.s32.totalorder %s24, 1
      %p110 = por %p108, %p109
      %p112 = scmp.ne.s32.totalorder %s97, %s111
      %p113 = scmp.eq.s32.totalorder %s24, 0
      %p114 = por %p112, %p113
      %s116 = sadd.s32 %s115, 1
      %p119 = scmp.eq.s32.totalorder %s18, 1
      %p120 = scmp.ne.s32.totalorder %s115, %s117
      %p121 = scmp.eq.s32.totalorder %s18, 0
      %p122 = por %p120, %p121
      %p123 = scmp.ne.s32.totalorder %s115, %s117
      %p124 = scmp.eq.s32.totalorder %s23, 1
      %p125 = por %p123, %p124
      %p126 = scmp.ne.s32.totalorder %s117, %s118
      %p127 = scmp.eq.s32.totalorder %s23, 0
      %p128 = por %p126, %p127
      %p129 = scmp.ne.s32.totalorder %s117, %s118
      %p130 = scmp.eq.s32.totalorder %s24, 1
      %p131 = por %p129, %p130
      %p133 = scmp.ne.s32.totalorder %s118, %s132
      %p134 = scmp.eq.s32.totalorder %s24, 0
      %p135 = por %p133, %p134
      %s136 = ssub.s32 %s18, %s25
      %p137 = scmp.eq.s32.totalorder %s136, 0
      %s139 = sadd.s32 %s138, 1
      %s140 = scalar_select %p137, %s138, %s139
      %p143 = pneg %p137
      %p144 = scmp.eq.s32.totalorder %s18, 1
      %p145 = por %p143, %p144
      %p146 = scmp.ne.s32.totalorder %s138, %s141
      %p147 = scmp.eq.s32.totalorder %s18, 0
      %p148 = por %p146, %p147
      %p149 = scmp.ne.s32.totalorder %s138, %s141
      %p150 = scmp.eq.s32.totalorder %s23, 1
      %p151 = por %p149, %p150
      %p152 = scmp.ne.s32.totalorder %s141, %s142
      %p153 = scmp.eq.s32.totalorder %s23, 0
      %p154 = por %p152, %p153
      %p155 = scmp.ne.s32.totalorder %s141, %s142
      %p156 = scmp.eq.s32.totalorder %s24, 1
      %p157 = por %p155, %p156
      %p159 = scmp.ne.s32.totalorder %s142, %s158
      %p160 = scmp.eq.s32.totalorder %s24, 0
      %p161 = por %p159, %p160
      %p162 = scmp.le.s32.totalorder 1, %s18
      %p163 = scmp.lt.s32.totalorder %s18, 3
      %p164 = pnand %p162, %p163
      %p165 = pneg %p164
      // Predicated region
      $region9: #{tpu_custom_call.1} parent=5 // pred_check
        _
      $region10: #{tpu_custom_call.1} parent=5 // pred_check_branch
        %167 = sbr.rel (%p164) target = $region12
      $region11: #{tpu_custom_call.1} parent=5 // pred_region
        %s168 = ssub.s32 %s18, 1
        // Predicated region
        $region13: #{tpu_custom_call.1} parent=11 // pred_check
          %p169 = pneg %p65
        $region14: #{tpu_custom_call.1} parent=11 // pred_check_branch
          %171 = sbr.rel (%p169) target = $region16
        $region15: #{tpu_custom_call.1} parent=11 // pred_region
          %173 = vsyncadd [#allocation7], 0
          %s174 = sshll.u32 %s1, 4
          %s175 = int_to_ptr.hbm [resolvable:$true] %s174
          %s176 = sshll.u32 [#allocation6], 4
          %s177 = int_to_ptr.vmem [resolvable:$true] %s176
          %182 = dma.hbm_to_vmem [thread:$0]  %s175, 9216, %s177, [#allocation7], 64, 64, 4
        $region16: #{tpu_custom_call.1} parent=11 // pred_fallthru
          _
        // Predicated region
        $region17: #{tpu_custom_call.1} parent=11 // pred_check
          %p183 = pneg %p86
        $region18: #{tpu_custom_call.1} parent=11 // pred_check_branch
          %185 = sbr.rel (%p183) target = $region20
        $region19: #{tpu_custom_call.1} parent=11 // pred_region
          _
        $region20: #{tpu_custom_call.1} parent=11 // pred_fallthru
          _
        // Predicated region
        $region21: #{tpu_custom_call.1} parent=11 // pred_check
          %p186 = pneg %p107
        $region22: #{tpu_custom_call.1} parent=11 // pred_check_branch
          %188 = sbr.rel (%p186) target = $region24
        $region23: #{tpu_custom_call.1} parent=11 // pred_region
          %190 = vsyncadd [#allocation7], 0
          %s191 = sshll.u32 %s3, 4
          %s192 = int_to_ptr.hbm [resolvable:$true] %s191
          %s193 = sshll.u32 [#allocation8], 4
          %s194 = int_to_ptr.vmem [resolvable:$true] %s193
          %199 = dma.hbm_to_vmem [thread:$0]  %s192, 9216, %s194, [#allocation7], 64, 64, 4
        $region24: #{tpu_custom_call.1} parent=11 // pred_fallthru
          _
        // Predicated region
        $region25: #{tpu_custom_call.1} parent=11 // pred_check
          %p200 = pneg %p128
        $region26: #{tpu_custom_call.1} parent=11 // pred_check_branch
          %202 = sbr.rel (%p200) target = $region28
        $region27: #{tpu_custom_call.1} parent=11 // pred_region
          _
        $region28: #{tpu_custom_call.1} parent=11 // pred_fallthru
          _
      $region12: #{tpu_custom_call.1} parent=5 // pred_fallthru
        _
      %p203 = scmp.lt.s32.totalorder %s18, 2
      // Predicated region
      $region29: #{tpu_custom_call.1} parent=5 // pred_check
        %p204 = pneg %p203
      $region30: #{tpu_custom_call.1} parent=5 // pred_check_branch
        %206 = sbr.rel (%p204) target = $region32
      $region31: #{tpu_custom_call.1} parent=5 // pred_region
        // Predicated region
        $region33: #{tpu_custom_call.1} parent=31 // pred_check
          %p207 = pneg %p38
        $region34: #{tpu_custom_call.1} parent=31 // pred_check_branch
          %209 = sbr.rel (%p207) target = $region36
        $region35: #{tpu_custom_call.1} parent=31 // pred_region
          %s210 = sand.u32 %s28, 1
          %s211 = scalar_lea.sflag [#allocation4], %s210
          %s212 = sand.u32 %s28, 1
          %s213 = smul.addr %s212, 288
          %s214 = scalar_lea.vmem [#allocation3], %s213
          %216 = vsyncadd %s211, 0
          %s217 = smul.addr %s18, 36
          %s218 = smul.addr %s217, 8
          %s219 = scalar_lea.hbm %s0, %s218
          %s220 = sshll.u32 %s219, 4
          %s221 = int_to_ptr.hbm [resolvable:$true] %s220
          %s222 = sshll.u32 %s214, 4
          %s223 = int_to_ptr.vmem [resolvable:$true] %s222
          %228 = dma.hbm_to_vmem [thread:$0]  %s221, 4608, %s223, %s211, 128, 128, 8
        $region36: #{tpu_custom_call.1} parent=31 // pred_fallthru
          _
      $region32: #{tpu_custom_call.1} parent=5 // pred_fallthru
        _
      %p229 = scmp.le.s32.totalorder 1, %s18
      %p230 = scmp.lt.s32.totalorder %s18, 3
      %p231 = pnand %p229, %p230
      %p232 = pneg %p231
      // Predicated region
      $region37: #{tpu_custom_call.1} parent=5 // pred_check
        _
      $region38: #{tpu_custom_call.1} parent=5 // pred_check_branch
        %234 = sbr.rel (%p231) target = $region40
      $region39: #{tpu_custom_call.1} parent=5 // pred_region
        %s235 = ssub.s32 %s18, 1
        %s236 = sand.u32 %s31, 1
        %s237 = scalar_lea.sflag [#allocation4], %s236
        %s238 = sand.u32 %s31, 1
        %s239 = smul.addr %s238, 288
        %s240 = scalar_lea.vmem [#allocation3], %s239
        // Predicated region
        $region41: #{tpu_custom_call.1} parent=39 // pred_check
          %p241 = pneg %p44
        $region42: #{tpu_custom_call.1} parent=39 // pred_check_branch
          %243 = sbr.rel (%p241) target = $region44
        $region43: #{tpu_custom_call.1} parent=39 // pred_region
          %245 = dma.done %s237, 4608
        $region44: #{tpu_custom_call.1} parent=39 // pred_fallthru
          _
        // Predicated region
        $region45: #{tpu_custom_call.1} parent=39 // pred_check
          %p246 = pneg %p65
        $region46: #{tpu_custom_call.1} parent=39 // pred_check_branch
          %248 = sbr.rel (%p246) target = $region48
        $region47: #{tpu_custom_call.1} parent=39 // pred_region
          %250 = dma.done [#allocation7], 9216
        $region48: #{tpu_custom_call.1} parent=39 // pred_fallthru
          _
        // Predicated region
        $region49: #{tpu_custom_call.1} parent=39 // pred_check
          %p251 = pneg %p107
        $region50: #{tpu_custom_call.1} parent=39 // pred_check_branch
          %253 = sbr.rel (%p251) target = $region52
        $region51: #{tpu_custom_call.1} parent=39 // pred_region
          %255 = dma.done [#allocation7], 9216
        $region52: #{tpu_custom_call.1} parent=39 // pred_fallthru
          _
        %s256 = sand.u32 %s31, 1
        %s257 = scalar_lea.sflag [#allocation4], %s256
        %s258 = sand.u32 %s31, 1
        %s259 = smul.addr %s258, 288
        %s260 = scalar_lea.vmem [#allocation3], %s259
        %p261 = pneg %p44
        %p262 = pneg %p41
        %p263 = pneg %p65
        %p264 = pneg %p62
        %p265 = pneg %p86
        %p266 = pneg %p83
        %p267 = pneg %p107
        %p268 = pneg %p104
        %p269 = pneg %p128
        %p270 = pneg %p125
        %p271 = pneg %p154
        %p272 = pneg %p151
        %s273 = sand.u32 %s141, 1
        %s274 = scalar_lea.sflag [#allocation5], %s273
        %s275 = sand.u32 %s141, 1
        %s276 = smul.addr %s275, 256
        %s277 = scalar_lea.vmem [#allocation9], %s276
        %v279 = vlaneseq
        %v280 = vshrl.u32 %v279, 7
        %v281 = vadd.s32 %v280, 8
        %vm282 = vcmp.eq.s32.totalorder %v280, 0
        %vm283 = vcmp.eq.s32.totalorder %v281, 0
        %vm284 = vcmp.eq.s32.totalorder %v280, 15
        %vm285 = vcmp.eq.s32.totalorder %v281, 15
        %v286 = vld [vmem:[%s240] sm:$0xff]
        %v287 = vld [vmem:[%s240 + $0x8] sm:$0xff]
        %v288 = vld [vmem:[%s240 + $0x10] sm:$0xff]
        %v289 = vld [vmem:[%s240 + $0x18] sm:$0xff]
        %v290 = vld [vmem:[%s240 + $0x20] sm:$0xff]
        %v291 = vld [vmem:[%s240 + $0x28] sm:$0xff]
        %v292 = vld [vmem:[%s240 + $0x30] sm:$0xff]
        %v293 = vld [vmem:[%s240 + $0x38] sm:$0xff]
        %v294 = vld [vmem:[%s240 + $0x40] sm:$0xff]
        %v295 = vld [vmem:[%s240 + $0x48] sm:$0xff]
        %v296 = vld [vmem:[%s240 + $0x50] sm:$0xff]
        %v297 = vld [vmem:[%s240 + $0x58] sm:$0xff]
        %v298 = vld [vmem:[%s240 + $0x60] sm:$0xff]
        %v299 = vld [vmem:[%s240 + $0x68] sm:$0xff]
        %v300 = vld [vmem:[%s240 + $0x70] sm:$0xff]
        %v301 = vld [vmem:[%s240 + $0x78] sm:$0xff]
        %v302 = vld [vmem:[%s240 + $0x80] sm:$0xff]
        %v303 = vld [vmem:[%s240 + $0x88] sm:$0xff]
        %v304 = vld [vmem:[%s240 + $0x90] sm:$0xff]
        %v305 = vld [vmem:[%s240 + $0x98] sm:$0xff]
        %v306 = vld [vmem:[%s240 + $0xa0] sm:$0xff]
        %v307 = vld [vmem:[%s240 + $0xa8] sm:$0xff]
        %v308 = vld [vmem:[%s240 + $0xb0] sm:$0xff]
        %v309 = vld [vmem:[%s240 + $0xb8] sm:$0xff]
        %v310 = vld [vmem:[%s240 + $0xc0] sm:$0xff]
        %v311 = vld [vmem:[%s240 + $0xc8] sm:$0xff]
        %v312 = vld [vmem:[%s240 + $0xd0] sm:$0xff]
        %v313 = vld [vmem:[%s240 + $0xd8] sm:$0xff]
        %v314 = vld [vmem:[%s240 + $0xe0] sm:$0xff]
        %v315 = vld [vmem:[%s240 + $0xe8] sm:$0xff]
        %v316 = vld [vmem:[%s240 + $0xf0] sm:$0xff]
        %v317 = vld [vmem:[%s240 + $0xf8] sm:$0xff]
        %v318 = vld [vmem:[%s240 + $0x100] sm:$0xff]
        %v319 = vld [vmem:[%s240 + $0x108] sm:$0xff]
        %v320 = vld [vmem:[%s240 + $0x110] sm:$0xff]
        %v321 = vld [vmem:[%s240 + $0x118] sm:$0xff]
        %v322 = vpack.c.bf16 %v286, %v286
        %v323 = vpack.c.bf16 %v287, %v287
        %v324 = vpack.c.bf16 %v288, %v288
        %v325 = vpack.c.bf16 %v289, %v289
        %v326 = vpack.c.bf16 %v290, %v290
        %v327 = vpack.c.bf16 %v291, %v291
        %v328 = vpack.c.bf16 %v292, %v292
        %v329 = vpack.c.bf16 %v293, %v293
        %v330 = vpack.c.bf16 %v294, %v294
        %v331 = vpack.c.bf16 %v295, %v295
        %v332 = vpack.c.bf16 %v296, %v296
        %v333 = vpack.c.bf16 %v297, %v297
        %v334 = vpack.c.bf16 %v298, %v298
        %v335 = vpack.c.bf16 %v299, %v299
        %v336 = vpack.c.bf16 %v300, %v300
        %v337 = vpack.c.bf16 %v301, %v301
        %v338 = vpack.c.bf16 %v302, %v302
        %v339 = vpack.c.bf16 %v303, %v303
        %v340 = vpack.c.bf16 %v304, %v304
        %v341 = vpack.c.bf16 %v305, %v305
        %v342 = vpack.c.bf16 %v306, %v306
        %v343 = vpack.c.bf16 %v307, %v307
        %v344 = vpack.c.bf16 %v308, %v308
        %v345 = vpack.c.bf16 %v309, %v309
        %v346 = vpack.c.bf16 %v310, %v310
        %v347 = vpack.c.bf16 %v311, %v311
        %v348 = vpack.c.bf16 %v312, %v312
        %v349 = vpack.c.bf16 %v313, %v313
        %v350 = vpack.c.bf16 %v314, %v314
        %v351 = vpack.c.bf16 %v315, %v315
        %v352 = vpack.c.bf16 %v316, %v316
        %v353 = vpack.c.bf16 %v317, %v317
        %v354 = vpack.c.bf16 %v318, %v318
        %v355 = vpack.c.bf16 %v319, %v319
        %v356 = vpack.c.bf16 %v320, %v320
        %v357 = vpack.c.bf16 %v321, %v321
        %v358 = vld [vmem:[%s2] sm:$0x1]
        %v391 = vunpack.c.l.b16 %v322
        %v392 = vunpack.c.l.b16 %v323
        %v393 = vunpack.c.l.b16 %v324
        %v394 = vunpack.c.l.b16 %v325
        %v395 = vunpack.c.l.b16 %v326
        %v396 = vunpack.c.l.b16 %v327
        %v397 = vunpack.c.l.b16 %v328
        %v398 = vunpack.c.l.b16 %v329
        %v399 = vunpack.c.l.b16 %v330
        %v400 = vunpack.c.l.b16 %v331
        %v401 = vunpack.c.l.b16 %v332
        %v402 = vunpack.c.l.b16 %v333
        %v403 = vunpack.c.l.b16 %v334
        %v404 = vunpack.c.l.b16 %v335
        %v405 = vunpack.c.l.b16 %v336
        %v406 = vunpack.c.l.b16 %v337
        %v407 = vunpack.c.l.b16 %v338
        %v408 = vunpack.c.l.b16 %v339
        %v409 = vunpack.c.l.b16 %v340
        %v410 = vunpack.c.l.b16 %v341
        %v411 = vunpack.c.l.b16 %v342
        %v412 = vunpack.c.l.b16 %v343
        %v413 = vunpack.c.l.b16 %v344
        %v414 = vunpack.c.l.b16 %v345
        %v415 = vunpack.c.l.b16 %v346
        %v416 = vunpack.c.l.b16 %v347
        %v417 = vunpack.c.l.b16 %v348
        %v418 = vunpack.c.l.b16 %v349
        %v419 = vunpack.c.l.b16 %v350
        %v420 = vunpack.c.l.b16 %v351
        %v421 = vunpack.c.l.b16 %v352
        %v422 = vunpack.c.l.b16 %v353
        %v423 = vpack.c.b16 %v392, %v391
        %v424 = vpack.c.b16 %v394, %v393
        %v425 = vpack.c.b16 %v396, %v395
        %v426 = vpack.c.b16 %v398, %v397
        %v427 = vpack.c.b16 %v400, %v399
        %v428 = vpack.c.b16 %v402, %v401
        %v429 = vpack.c.b16 %v404, %v403
        %v430 = vpack.c.b16 %v406, %v405
        %v431 = vpack.c.b16 %v408, %v407
        %v432 = vpack.c.b16 %v410, %v409
        %v433 = vpack.c.b16 %v412, %v411
        %v434 = vpack.c.b16 %v414, %v413
        %v435 = vpack.c.b16 %v416, %v415
        %v436 = vpack.c.b16 %v418, %v417
        %v437 = vpack.c.b16 %v420, %v419
        %v438 = vpack.c.b16 %v422, %v421
        %v457 = vunpack.c.l.b16 %v354
        %v458 = vunpack.c.l.b16 %v355
        %v459 = vpack.c.b16 %v458, %v457
        %v463 = vunpack.c.l.b16 %v356
        %v464 = vunpack.c.l.b16 %v357
        %v465 = vpack.c.b16 %v464, %v463
        %v467 = vld [vmem:[#allocation6] sm:$0xf]
        %v468 = vld [vmem:[#allocation6 + $0x4] sm:$0xf]
        %v469 = vld [vmem:[#allocation6 + $0x8] sm:$0xf]
        %v470 = vld [vmem:[#allocation6 + $0xc] sm:$0xf]
        %v471 = vld [vmem:[#allocation6 + $0x10] sm:$0xf]
        %v472 = vld [vmem:[#allocation6 + $0x14] sm:$0xf]
        %v473 = vld [vmem:[#allocation6 + $0x18] sm:$0xf]
        %v474 = vld [vmem:[#allocation6 + $0x1c] sm:$0xf]
        %v475 = vld [vmem:[#allocation6 + $0x20] sm:$0xf]
        %v476 = vld [vmem:[#allocation6 + $0x24] sm:$0xf]
        %v477 = vld [vmem:[#allocation6 + $0x28] sm:$0xf]
        %v478 = vld [vmem:[#allocation6 + $0x2c] sm:$0xf]
        %v479 = vld [vmem:[#allocation6 + $0x30] sm:$0xf]
        %v480 = vld [vmem:[#allocation6 + $0x34] sm:$0xf]
        %v481 = vld [vmem:[#allocation6 + $0x38] sm:$0xf]
        %v482 = vld [vmem:[#allocation6 + $0x3c] sm:$0xf]
        %v483 = vld [vmem:[#allocation6 + $0x40] sm:$0xf]
        %v484 = vld [vmem:[#allocation6 + $0x44] sm:$0xf]
        %v485 = vld [vmem:[#allocation6 + $0x48] sm:$0xf]
        %v486 = vld [vmem:[#allocation6 + $0x4c] sm:$0xf]
        %v487 = vld [vmem:[#allocation6 + $0x50] sm:$0xf]
        %v488 = vld [vmem:[#allocation6 + $0x54] sm:$0xf]
        %v489 = vld [vmem:[#allocation6 + $0x58] sm:$0xf]
        %v490 = vld [vmem:[#allocation6 + $0x5c] sm:$0xf]
        %v491 = vld [vmem:[#allocation6 + $0x60] sm:$0xf]
        %v492 = vld [vmem:[#allocation6 + $0x64] sm:$0xf]
        %v493 = vld [vmem:[#allocation6 + $0x68] sm:$0xf]
        %v494 = vld [vmem:[#allocation6 + $0x6c] sm:$0xf]
        %v495 = vld [vmem:[#allocation6 + $0x70] sm:$0xf]
        %v496 = vld [vmem:[#allocation6 + $0x74] sm:$0xf]
        %v497 = vld [vmem:[#allocation6 + $0x78] sm:$0xf]
        %v498 = vld [vmem:[#allocation6 + $0x7c] sm:$0xf]
        %v499 = vld [vmem:[#allocation6 + $0x80] sm:$0xf]
        %v500 = vld [vmem:[#allocation6 + $0x84] sm:$0xf]
        %v501 = vld [vmem:[#allocation6 + $0x88] sm:$0xf]
        %v502 = vld [vmem:[#allocation6 + $0x8c] sm:$0xf]
        %v503 = vld [vmem:[#allocation6 + $0x90] sm:$0xf]
        %v504 = vld [vmem:[#allocation6 + $0x94] sm:$0xf]
        %v505 = vld [vmem:[#allocation6 + $0x98] sm:$0xf]
        %v506 = vld [vmem:[#allocation6 + $0x9c] sm:$0xf]
        %v507 = vld [vmem:[#allocation6 + $0xa0] sm:$0xf]
        %v508 = vld [vmem:[#allocation6 + $0xa4] sm:$0xf]
        %v509 = vld [vmem:[#allocation6 + $0xa8] sm:$0xf]
        %v510 = vld [vmem:[#allocation6 + $0xac] sm:$0xf]
        %v511 = vld [vmem:[#allocation6 + $0xb0] sm:$0xf]
        %v512 = vld [vmem:[#allocation6 + $0xb4] sm:$0xf]
        %v513 = vld [vmem:[#allocation6 + $0xb8] sm:$0xf]
        %v514 = vld [vmem:[#allocation6 + $0xbc] sm:$0xf]
        %v563 = vunpack.c.l.b16 %v467
        %v564 = vunpack.c.l.b16 %v468
        %v565 = vunpack.c.l.b16 %v469
        %v566 = vunpack.c.l.b16 %v470
        %v567 = vunpack.c.l.b16 %v471
        %v568 = vunpack.c.l.b16 %v472
        %v569 = vunpack.c.l.b16 %v473
        %v570 = vunpack.c.l.b16 %v474
        %v571 = vunpack.c.l.b16 %v475
        %v572 = vunpack.c.l.b16 %v476
        %v573 = vunpack.c.l.b16 %v477
        %v574 = vunpack.c.l.b16 %v478
        %v575 = vunpack.c.l.b16 %v479
        %v576 = vunpack.c.l.b16 %v480
        %v577 = vunpack.c.l.b16 %v481
        %v578 = vunpack.c.l.b16 %v482
        %v579 = vunpack.c.l.b16 %v483
        %v580 = vunpack.c.l.b16 %v484
        %v581 = vunpack.c.l.b16 %v485
        %v582 = vunpack.c.l.b16 %v486
        %v583 = vunpack.c.l.b16 %v487
        %v584 = vunpack.c.l.b16 %v488
        %v585 = vunpack.c.l.b16 %v489
        %v586 = vunpack.c.l.b16 %v490
        %v587 = vunpack.c.l.b16 %v491
        %v588 = vunpack.c.l.b16 %v492
        %v589 = vunpack.c.l.b16 %v493
        %v590 = vunpack.c.l.b16 %v494
        %v591 = vunpack.c.l.b16 %v495
        %v592 = vunpack.c.l.b16 %v496
        %v593 = vunpack.c.l.b16 %v497
        %v594 = vunpack.c.l.b16 %v498
        %v595 = vunpack.c.l.b16 %v499
        %v596 = vunpack.c.l.b16 %v500
        %v597 = vunpack.c.l.b16 %v501
        %v598 = vunpack.c.l.b16 %v502
        %v599 = vunpack.c.l.b16 %v503
        %v600 = vunpack.c.l.b16 %v504
        %v601 = vunpack.c.l.b16 %v505
        %v602 = vunpack.c.l.b16 %v506
        %v603 = vunpack.c.l.b16 %v507
        %v604 = vunpack.c.l.b16 %v508
        %v605 = vunpack.c.l.b16 %v509
        %v606 = vunpack.c.l.b16 %v510
        %v607 = vunpack.c.l.b16 %v511
        %v608 = vunpack.c.l.b16 %v512
        %v609 = vunpack.c.l.b16 %v513
        %v610 = vunpack.c.l.b16 %v514
        %v611 = vpack.c.b16 %v564, %v563
        %v612 = vpack.c.b16 %v566, %v565
        %v613 = vpack.c.b16 %v568, %v567
        %v614 = vpack.c.b16 %v570, %v569
        %v615 = vpack.c.b16 %v572, %v571
        %v616 = vpack.c.b16 %v574, %v573
        %v617 = vpack.c.b16 %v576, %v575
        %v618 = vpack.c.b16 %v578, %v577
        %v619 = vpack.c.b16 %v580, %v579
        %v620 = vpack.c.b16 %v582, %v581
        %v621 = vpack.c.b16 %v584, %v583
        %v622 = vpack.c.b16 %v586, %v585
        %v623 = vpack.c.b16 %v588, %v587
        %v624 = vpack.c.b16 %v590, %v589
        %v625 = vpack.c.b16 %v592, %v591
        %v626 = vpack.c.b16 %v594, %v593
        %v627 = vpack.c.b16 %v596, %v595
        %v628 = vpack.c.b16 %v598, %v597
        %v629 = vpack.c.b16 %v600, %v599
        %v630 = vpack.c.b16 %v602, %v601
        %v631 = vpack.c.b16 %v604, %v603
        %v632 = vpack.c.b16 %v606, %v605
        %v633 = vpack.c.b16 %v608, %v607
        %v634 = vpack.c.b16 %v610, %v609
        %659 = vmatpush.bf16.msra.mxu0 %v618
        %660 = vmatpush.bf16.msra.mxu0 %v617
        %661 = vmatpush.bf16.msra.mxu0 %v616
        %662 = vmatpush.bf16.msra.mxu0 %v615
        %663 = vmatpush.bf16.msra.mxu0 %v614
        %664 = vmatpush.bf16.msra.mxu0 %v613
        %665 = vmatpush.bf16.msra.mxu0 %v612
        %666 = vmatpush.bf16.msra.mxu0 %v611
        %667 = vmatmul.bf16.gmra.mxu0 %v423
        %v668 = vpop.f32.mrf.mxu0
        %v669 = vadd.f32 0.0, %v668
        %v670 = vpop.f32.mrf.mxu0
        %v671 = vadd.f32 0.0, %v670
        %672 = vmatmul.bf16.gmra.mxu0 %v424
        %v673 = vpop.f32.mrf.mxu0
        %v674 = vadd.f32 0.0, %v673
        %v675 = vpop.f32.mrf.mxu0
        %v676 = vadd.f32 0.0, %v675
        %677 = vmatmul.bf16.gmra.mxu0 %v425
        %v678 = vpop.f32.mrf.mxu0
        %v679 = vadd.f32 0.0, %v678
        %v680 = vpop.f32.mrf.mxu0
        %v681 = vadd.f32 0.0, %v680
        %682 = vmatmul.bf16.gmra.mxu0 %v426
        %v683 = vpop.f32.mrf.mxu0
        %v684 = vadd.f32 0.0, %v683
        %v685 = vpop.f32.mrf.mxu0
        %v686 = vadd.f32 0.0, %v685
        %687 = vmatmul.bf16.gmra.mxu0 %v427
        %v688 = vpop.f32.mrf.mxu0
        %v689 = vadd.f32 0.0, %v688
        %v690 = vpop.f32.mrf.mxu0
        %v691 = vadd.f32 0.0, %v690
        %692 = vmatmul.bf16.gmra.mxu0 %v428
        %v693 = vpop.f32.mrf.mxu0
        %v694 = vadd.f32 0.0, %v693
        %v695 = vpop.f32.mrf.mxu0
        %v696 = vadd.f32 0.0, %v695
        %697 = vmatmul.bf16.gmra.mxu0 %v429
        %v698 = vpop.f32.mrf.mxu0
        %v699 = vadd.f32 0.0, %v698
        %v700 = vpop.f32.mrf.mxu0
        %v701 = vadd.f32 0.0, %v700
        %702 = vmatmul.bf16.gmra.mxu0 %v430
        %v703 = vpop.f32.mrf.mxu0
        %v704 = vadd.f32 0.0, %v703
        %v705 = vpop.f32.mrf.mxu0
        %v706 = vadd.f32 0.0, %v705
        %707 = vmatmul.bf16.gmra.mxu0 %v431
        %v708 = vpop.f32.mrf.mxu0
        %v709 = vadd.f32 0.0, %v708
        %v710 = vpop.f32.mrf.mxu0
        %v711 = vadd.f32 0.0, %v710
        %712 = vmatmul.bf16.gmra.mxu0 %v432
        %v713 = vpop.f32.mrf.mxu0
        %v714 = vadd.f32 0.0, %v713
        %v715 = vpop.f32.mrf.mxu0
        %v716 = vadd.f32 0.0, %v715
        %717 = vmatmul.bf16.gmra.mxu0 %v433
        %v718 = vpop.f32.mrf.mxu0
        %v719 = vadd.f32 0.0, %v718
        %v720 = vpop.f32.mrf.mxu0
        %v721 = vadd.f32 0.0, %v720
        %722 = vmatmul.bf16.gmra.mxu0 %v434
        %v723 = vpop.f32.mrf.mxu0
        %v724 = vadd.f32 0.0, %v723
        %v725 = vpop.f32.mrf.mxu0
        %v726 = vadd.f32 0.0, %v725
        %727 = vmatmul.bf16.gmra.mxu0 %v435
        %v728 = vpop.f32.mrf.mxu0
        %v729 = vadd.f32 0.0, %v728
        %v730 = vpop.f32.mrf.mxu0
        %v731 = vadd.f32 0.0, %v730
        %732 = vmatmul.bf16.gmra.mxu0 %v436
        %v733 = vpop.f32.mrf.mxu0
        %v734 = vadd.f32 0.0, %v733
        %v735 = vpop.f32.mrf.mxu0
        %v736 = vadd.f32 0.0, %v735
        %737 = vmatmul.bf16.gmra.mxu0 %v437
        %v738 = vpop.f32.mrf.mxu0
        %v739 = vadd.f32 0.0, %v738
        %v740 = vpop.f32.mrf.mxu0
        %v741 = vadd.f32 0.0, %v740
        %742 = vmatmul.bf16.gmra.mxu0 %v438
        %v743 = vpop.f32.mrf.mxu0
        %v744 = vadd.f32 0.0, %v743
        %v745 = vpop.f32.mrf.mxu0
        %v746 = vadd.f32 0.0, %v745
        %747 = vdwg.mxu0
        %748 = vmatpush.bf16.msra.mxu0 %v626
        %749 = vmatpush.bf16.msra.mxu0 %v625
        %750 = vmatpush.bf16.msra.mxu0 %v624
        %751 = vmatpush.bf16.msra.mxu0 %v623
        %752 = vmatpush.bf16.msra.mxu0 %v622
        %753 = vmatpush.bf16.msra.mxu0 %v621
        %754 = vmatpush.bf16.msra.mxu0 %v620
        %755 = vmatpush.bf16.msra.mxu0 %v619
        %756 = vmatmul.bf16.gmra.mxu0 %v424
        %v757 = vpop.f32.mrf.mxu0
        %v758 = vadd.f32 %v669, %v757
        %v759 = vpop.f32.mrf.mxu0
        %v760 = vadd.f32 %v671, %v759
        %761 = vmatmul.bf16.gmra.mxu0 %v425
        %v762 = vpop.f32.mrf.mxu0
        %v763 = vadd.f32 %v674, %v762
        %v764 = vpop.f32.mrf.mxu0
        %v765 = vadd.f32 %v676, %v764
        %766 = vmatmul.bf16.gmra.mxu0 %v426
        %v767 = vpop.f32.mrf.mxu0
        %v768 = vadd.f32 %v679, %v767
        %v769 = vpop.f32.mrf.mxu0
        %v770 = vadd.f32 %v681, %v769
        %771 = vmatmul.bf16.gmra.mxu0 %v427
        %v772 = vpop.f32.mrf.mxu0
        %v773 = vadd.f32 %v684, %v772
        %v774 = vpop.f32.mrf.mxu0
        %v775 = vadd.f32 %v686, %v774
        %776 = vmatmul.bf16.gmra.mxu0 %v428
        %v777 = vpop.f32.mrf.mxu0
        %v778 = vadd.f32 %v689, %v777
        %v779 = vpop.f32.mrf.mxu0
        %v780 = vadd.f32 %v691, %v779
        %781 = vmatmul.bf16.gmra.mxu0 %v429
        %v782 = vpop.f32.mrf.mxu0
        %v783 = vadd.f32 %v694, %v782
        %v784 = vpop.f32.mrf.mxu0
        %v785 = vadd.f32 %v696, %v784
        %786 = vmatmul.bf16.gmra.mxu0 %v430
        %v787 = vpop.f32.mrf.mxu0
        %v788 = vadd.f32 %v699, %v787
        %v789 = vpop.f32.mrf.mxu0
        %v790 = vadd.f32 %v701, %v789
        %791 = vmatmul.bf16.gmra.mxu0 %v431
        %v792 = vpop.f32.mrf.mxu0
        %v793 = vadd.f32 %v704, %v792
        %v794 = vpop.f32.mrf.mxu0
        %v795 = vadd.f32 %v706, %v794
        %796 = vmatmul.bf16.gmra.mxu0 %v432
        %v797 = vpop.f32.mrf.mxu0
        %v798 = vadd.f32 %v709, %v797
        %v799 = vpop.f32.mrf.mxu0
        %v800 = vadd.f32 %v711, %v799
        %801 = vmatmul.bf16.gmra.mxu0 %v433
        %v802 = vpop.f32.mrf.mxu0
        %v803 = vadd.f32 %v714, %v802
        %v804 = vpop.f32.mrf.mxu0
        %v805 = vadd.f32 %v716, %v804
        %806 = vmatmul.bf16.gmra.mxu0 %v434
        %v807 = vpop.f32.mrf.mxu0
        %v808 = vadd.f32 %v719, %v807
        %v809 = vpop.f32.mrf.mxu0
        %v810 = vadd.f32 %v721, %v809
        %811 = vmatmul.bf16.gmra.mxu0 %v435
        %v812 = vpop.f32.mrf.mxu0
        %v813 = vadd.f32 %v724, %v812
        %v814 = vpop.f32.mrf.mxu0
        %v815 = vadd.f32 %v726, %v814
        %816 = vmatmul.bf16.gmra.mxu0 %v436
        %v817 = vpop.f32.mrf.mxu0
        %v818 = vadd.f32 %v729, %v817
        %v819 = vpop.f32.mrf.mxu0
        %v820 = vadd.f32 %v731, %v819
        %821 = vmatmul.bf16.gmra.mxu0 %v437
        %v822 = vpop.f32.mrf.mxu0
        %v823 = vadd.f32 %v734, %v822
        %v824 = vpop.f32.mrf.mxu0
        %v825 = vadd.f32 %v736, %v824
        %826 = vmatmul.bf16.gmra.mxu0 %v438
        %v827 = vpop.f32.mrf.mxu0
        %v828 = vadd.f32 %v739, %v827
        %v829 = vpop.f32.mrf.mxu0
        %v830 = vadd.f32 %v741, %v829
        %831 = vmatmul.bf16.gmra.mxu0 %v459
        %v832 = vpop.f32.mrf.mxu0
        %v833 = vadd.f32 %v744, %v832
        %v834 = vpop.f32.mrf.mxu0
        %v835 = vadd.f32 %v746, %v834
        %836 = vdwg.mxu0
        %837 = vmatpush.bf16.msra.mxu0 %v634
        %838 = vmatpush.bf16.msra.mxu0 %v633
        %839 = vmatpush.bf16.msra.mxu0 %v632
        %840 = vmatpush.bf16.msra.mxu0 %v631
        %841 = vmatpush.bf16.msra.mxu0 %v630
        %842 = vmatpush.bf16.msra.mxu0 %v629
        %843 = vmatpush.bf16.msra.mxu0 %v628
        %844 = vmatpush.bf16.msra.mxu0 %v627
        %845 = vmatmul.bf16.gmra.mxu0 %v425
        %v846 = vpop.f32.mrf.mxu0
        %v847 = vadd.f32 %v758, %v846
        %v848 = vpop.f32.mrf.mxu0
        %v849 = vadd.f32 %v760, %v848
        %850 = vmatmul.bf16.gmra.mxu0 %v426
        %v851 = vpop.f32.mrf.mxu0
        %v852 = vadd.f32 %v763, %v851
        %v853 = vpop.f32.mrf.mxu0
        %v854 = vadd.f32 %v765, %v853
        %855 = vmatmul.bf16.gmra.mxu0 %v427
        %v856 = vpop.f32.mrf.mxu0
        %v857 = vadd.f32 %v768, %v856
        %v858 = vpop.f32.mrf.mxu0
        %v859 = vadd.f32 %v770, %v858
        %860 = vmatmul.bf16.gmra.mxu0 %v428
        %v861 = vpop.f32.mrf.mxu0
        %v862 = vadd.f32 %v773, %v861
        %v863 = vpop.f32.mrf.mxu0
        %v864 = vadd.f32 %v775, %v863
        %865 = vmatmul.bf16.gmra.mxu0 %v429
        %v866 = vpop.f32.mrf.mxu0
        %v867 = vadd.f32 %v778, %v866
        %v868 = vpop.f32.mrf.mxu0
        %v869 = vadd.f32 %v780, %v868
        %870 = vmatmul.bf16.gmra.mxu0 %v430
        %v871 = vpop.f32.mrf.mxu0
        %v872 = vadd.f32 %v783, %v871
        %v873 = vpop.f32.mrf.mxu0
        %v874 = vadd.f32 %v785, %v873
        %875 = vmatmul.bf16.gmra.mxu0 %v431
        %v876 = vpop.f32.mrf.mxu0
        %v877 = vadd.f32 %v788, %v876
        %v878 = vpop.f32.mrf.mxu0
        %v879 = vadd.f32 %v790, %v878
        %880 = vmatmul.bf16.gmra.mxu0 %v432
        %v881 = vpop.f32.mrf.mxu0
        %v882 = vadd.f32 %v793, %v881
        %v883 = vpop.f32.mrf.mxu0
        %v884 = vadd.f32 %v795, %v883
        %885 = vmatmul.bf16.gmra.mxu0 %v433
        %v886 = vpop.f32.mrf.mxu0
        %v887 = vadd.f32 %v798, %v886
        %v888 = vpop.f32.mrf.mxu0
        %v889 = vadd.f32 %v800, %v888
        %890 = vmatmul.bf16.gmra.mxu0 %v434
        %v891 = vpop.f32.mrf.mxu0
        %v892 = vadd.f32 %v803, %v891
        %v893 = vpop.f32.mrf.mxu0
        %v894 = vadd.f32 %v805, %v893
        %895 = vmatmul.bf16.gmra.mxu0 %v435
        %v896 = vpop.f32.mrf.mxu0
        %v897 = vadd.f32 %v808, %v896
        %v898 = vpop.f32.mrf.mxu0
        %v899 = vadd.f32 %v810, %v898
        %900 = vmatmul.bf16.gmra.mxu0 %v436
        %v901 = vpop.f32.mrf.mxu0
        %v902 = vadd.f32 %v813, %v901
        %v903 = vpop.f32.mrf.mxu0
        %v904 = vadd.f32 %v815, %v903
        %905 = vmatmul.bf16.gmra.mxu0 %v437
        %v906 = vpop.f32.mrf.mxu0
        %v907 = vadd.f32 %v818, %v906
        %v908 = vpop.f32.mrf.mxu0
        %v909 = vadd.f32 %v820, %v908
        %910 = vmatmul.bf16.gmra.mxu0 %v438
        %v911 = vpop.f32.mrf.mxu0
        %v912 = vadd.f32 %v823, %v911
        %v913 = vpop.f32.mrf.mxu0
        %v914 = vadd.f32 %v825, %v913
        %915 = vmatmul.bf16.gmra.mxu0 %v459
        %v916 = vpop.f32.mrf.mxu0
        %v917 = vadd.f32 %v828, %v916
        %v918 = vpop.f32.mrf.mxu0
        %v919 = vadd.f32 %v830, %v918
        %920 = vmatmul.bf16.gmra.mxu0 %v465
        %v921 = vpop.f32.mrf.mxu0
        %v922 = vadd.f32 %v833, %v921
        %v923 = vpop.f32.mrf.mxu0
        %v924 = vadd.f32 %v835, %v923
        %925 = vdwg.mxu0
        %v926 = vrot.slane %v847, 7
        %v927 = vrot.slane %v852, 7
        %v928 = vrot.slane %v857, 7
        %v929 = vrot.slane %v862, 7
        %v930 = vrot.slane %v867, 7
        %v931 = vrot.slane %v872, 7
        %v932 = vrot.slane %v877, 7
        %v933 = vrot.slane %v882, 7
        %v934 = vrot.slane %v887, 7
        %v935 = vrot.slane %v892, 7
        %v936 = vrot.slane %v897, 7
        %v937 = vrot.slane %v902, 7
        %v938 = vrot.slane %v907, 7
        %v939 = vrot.slane %v912, 7
        %v940 = vrot.slane %v917, 7
        %v941 = vrot.slane %v922, 7
        %v942 = vrot.slane %v849, 7
        %v943 = vrot.slane %v854, 7
        %v944 = vrot.slane %v859, 7
        %v945 = vrot.slane %v864, 7
        %v946 = vrot.slane %v869, 7
        %v947 = vrot.slane %v874, 7
        %v948 = vrot.slane %v879, 7
        %v949 = vrot.slane %v884, 7
        %v950 = vrot.slane %v889, 7
        %v951 = vrot.slane %v894, 7
        %v952 = vrot.slane %v899, 7
        %v953 = vrot.slane %v904, 7
        %v954 = vrot.slane %v909, 7
        %v955 = vrot.slane %v914, 7
        %v956 = vrot.slane %v919, 7
        %v957 = vrot.slane %v924, 7
        %vm958 = vcmp.lt.s32.totalorder %v280, 1
        %v959 = vsel %vm958, %v926, %v942
        %v960 = vsel %vm958, %v927, %v943
        %v961 = vsel %vm958, %v928, %v944
        %v962 = vsel %vm958, %v929, %v945
        %v963 = vsel %vm958, %v930, %v946
        %v964 = vsel %vm958, %v931, %v947
        %v965 = vsel %vm958, %v932, %v948
        %v966 = vsel %vm958, %v933, %v949
        %v967 = vsel %vm958, %v934, %v950
        %v968 = vsel %vm958, %v935, %v951
        %v969 = vsel %vm958, %v936, %v952
        %v970 = vsel %vm958, %v937, %v953
        %v971 = vsel %vm958, %v938, %v954
        %v972 = vsel %vm958, %v939, %v955
        %v973 = vsel %vm958, %v940, %v956
        %v974 = vsel %vm958, %v941, %v957
        %v975 = vsel %vm958, %v942, %v926
        %v976 = vsel %vm958, %v943, %v927
        %v977 = vsel %vm958, %v944, %v928
        %v978 = vsel %vm958, %v945, %v929
        %v979 = vsel %vm958, %v946, %v930
        %v980 = vsel %vm958, %v947, %v931
        %v981 = vsel %vm958, %v948, %v932
        %v982 = vsel %vm958, %v949, %v933
        %v983 = vsel %vm958, %v950, %v934
        %v984 = vsel %vm958, %v951, %v935
        %v985 = vsel %vm958, %v952, %v936
        %v986 = vsel %vm958, %v953, %v937
        %v987 = vsel %vm958, %v954, %v938
        %v988 = vsel %vm958, %v955, %v939
        %v989 = vsel %vm958, %v956, %v940
        %v990 = vsel %vm958, %v957, %v941
        %v991 = vsel %vm282, 1, 0
        %v992 = vsel %vm283, 1, 0
        %vm993 = vcmp.eq.s32.totalorder %v991, 1
        %vm994 = vcmp.eq.s32.totalorder %v992, 1
        %v995 = vsel %vm993, 0.0, %v975
        %v996 = vsel %vm994, 0.0, %v959
        %v997 = vsel %vm993, 0.0, %v976
        %v998 = vsel %vm994, 0.0, %v960
        %v999 = vsel %vm993, 0.0, %v977
        %v1000 = vsel %vm994, 0.0, %v961
        %v1001 = vsel %vm993, 0.0, %v978
        %v1002 = vsel %vm994, 0.0, %v962
        %v1003 = vsel %vm993, 0.0, %v979
        %v1004 = vsel %vm994, 0.0, %v963
        %v1005 = vsel %vm993, 0.0, %v980
        %v1006 = vsel %vm994, 0.0, %v964
        %v1007 = vsel %vm993, 0.0, %v981
        %v1008 = vsel %vm994, 0.0, %v965
        %v1009 = vsel %vm993, 0.0, %v982
        %v1010 = vsel %vm994, 0.0, %v966
        %v1011 = vsel %vm993, 0.0, %v983
        %v1012 = vsel %vm994, 0.0, %v967
        %v1013 = vsel %vm993, 0.0, %v984
        %v1014 = vsel %vm994, 0.0, %v968
        %v1015 = vsel %vm993, 0.0, %v985
        %v1016 = vsel %vm994, 0.0, %v969
        %v1017 = vsel %vm993, 0.0, %v986
        %v1018 = vsel %vm994, 0.0, %v970
        %v1019 = vsel %vm993, 0.0, %v987
        %v1020 = vsel %vm994, 0.0, %v971
        %v1021 = vsel %vm993, 0.0, %v988
        %v1022 = vsel %vm994, 0.0, %v972
        %v1023 = vsel %vm993, 0.0, %v989
        %v1024 = vsel %vm994, 0.0, %v973
        %v1025 = vsel %vm993, 0.0, %v990
        %v1026 = vsel %vm994, 0.0, %v974
        %v1028 = vperm.slane %v358, 0
        %v1030 = vadd.f32 %v1028, %v995
        %v1031 = vadd.f32 %v1028, %v996
        %v1032 = vadd.f32 %v1028, %v997
        %v1033 = vadd.f32 %v1028, %v998
        %v1034 = vadd.f32 %v1028, %v999
        %v1035 = vadd.f32 %v1028, %v1000
        %v1036 = vadd.f32 %v1028, %v1001
        %v1037 = vadd.f32 %v1028, %v1002
        %v1038 = vadd.f32 %v1028, %v1003
        %v1039 = vadd.f32 %v1028, %v1004
        %v1040 = vadd.f32 %v1028, %v1005
        %v1041 = vadd.f32 %v1028, %v1006
        %v1042 = vadd.f32 %v1028, %v1007
        %v1043 = vadd.f32 %v1028, %v1008
        %v1044 = vadd.f32 %v1028, %v1009
        %v1045 = vadd.f32 %v1028, %v1010
        %v1046 = vadd.f32 %v1028, %v1011
        %v1047 = vadd.f32 %v1028, %v1012
        %v1048 = vadd.f32 %v1028, %v1013
        %v1049 = vadd.f32 %v1028, %v1014
        %v1050 = vadd.f32 %v1028, %v1015
        %v1051 = vadd.f32 %v1028, %v1016
        %v1052 = vadd.f32 %v1028, %v1017
        %v1053 = vadd.f32 %v1028, %v1018
        %v1054 = vadd.f32 %v1028, %v1019
        %v1055 = vadd.f32 %v1028, %v1020
        %v1056 = vadd.f32 %v1028, %v1021
        %v1057 = vadd.f32 %v1028, %v1022
        %v1058 = vadd.f32 %v1028, %v1023
        %v1059 = vadd.f32 %v1028, %v1024
        %v1060 = vadd.f32 %v1028, %v1025
        %v1061 = vadd.f32 %v1028, %v1026
        %s1062 = scalar_lea.vmem [#allocation6], 192
        %v1063 = vld [vmem:[%s1062] sm:$0xf]
        %v1064 = vld [vmem:[%s1062 + $0x4] sm:$0xf]
        %v1065 = vld [vmem:[%s1062 + $0x8] sm:$0xf]
        %v1066 = vld [vmem:[%s1062 + $0xc] sm:$0xf]
        %v1067 = vld [vmem:[%s1062 + $0x10] sm:$0xf]
        %v1068 = vld [vmem:[%s1062 + $0x14] sm:$0xf]
        %v1069 = vld [vmem:[%s1062 + $0x18] sm:$0xf]
        %v1070 = vld [vmem:[%s1062 + $0x1c] sm:$0xf]
        %v1071 = vld [vmem:[%s1062 + $0x20] sm:$0xf]
        %v1072 = vld [vmem:[%s1062 + $0x24] sm:$0xf]
        %v1073 = vld [vmem:[%s1062 + $0x28] sm:$0xf]
        %v1074 = vld [vmem:[%s1062 + $0x2c] sm:$0xf]
        %v1075 = vld [vmem:[%s1062 + $0x30] sm:$0xf]
        %v1076 = vld [vmem:[%s1062 + $0x34] sm:$0xf]
        %v1077 = vld [vmem:[%s1062 + $0x38] sm:$0xf]
        %v1078 = vld [vmem:[%s1062 + $0x3c] sm:$0xf]
        %v1079 = vld [vmem:[%s1062 + $0x40] sm:$0xf]
        %v1080 = vld [vmem:[%s1062 + $0x44] sm:$0xf]
        %v1081 = vld [vmem:[%s1062 + $0x48] sm:$0xf]
        %v1082 = vld [vmem:[%s1062 + $0x4c] sm:$0xf]
        %v1083 = vld [vmem:[%s1062 + $0x50] sm:$0xf]
        %v1084 = vld [vmem:[%s1062 + $0x54] sm:$0xf]
        %v1085 = vld [vmem:[%s1062 + $0x58] sm:$0xf]
        %v1086 = vld [vmem:[%s1062 + $0x5c] sm:$0xf]
        %v1087 = vld [vmem:[%s1062 + $0x60] sm:$0xf]
        %v1088 = vld [vmem:[%s1062 + $0x64] sm:$0xf]
        %v1089 = vld [vmem:[%s1062 + $0x68] sm:$0xf]
        %v1090 = vld [vmem:[%s1062 + $0x6c] sm:$0xf]
        %v1091 = vld [vmem:[%s1062 + $0x70] sm:$0xf]
        %v1092 = vld [vmem:[%s1062 + $0x74] sm:$0xf]
        %v1093 = vld [vmem:[%s1062 + $0x78] sm:$0xf]
        %v1094 = vld [vmem:[%s1062 + $0x7c] sm:$0xf]
        %v1095 = vld [vmem:[%s1062 + $0x80] sm:$0xf]
        %v1096 = vld [vmem:[%s1062 + $0x84] sm:$0xf]
        %v1097 = vld [vmem:[%s1062 + $0x88] sm:$0xf]
        %v1098 = vld [vmem:[%s1062 + $0x8c] sm:$0xf]
        %v1099 = vld [vmem:[%s1062 + $0x90] sm:$0xf]
        %v1100 = vld [vmem:[%s1062 + $0x94] sm:$0xf]
        %v1101 = vld [vmem:[%s1062 + $0x98] sm:$0xf]
        %v1102 = vld [vmem:[%s1062 + $0x9c] sm:$0xf]
        %v1103 = vld [vmem:[%s1062 + $0xa0] sm:$0xf]
        %v1104 = vld [vmem:[%s1062 + $0xa4] sm:$0xf]
        %v1105 = vld [vmem:[%s1062 + $0xa8] sm:$0xf]
        %v1106 = vld [vmem:[%s1062 + $0xac] sm:$0xf]
        %v1107 = vld [vmem:[%s1062 + $0xb0] sm:$0xf]
        %v1108 = vld [vmem:[%s1062 + $0xb4] sm:$0xf]
        %v1109 = vld [vmem:[%s1062 + $0xb8] sm:$0xf]
        %v1110 = vld [vmem:[%s1062 + $0xbc] sm:$0xf]
        %v1159 = vunpack.c.l.b16 %v1063
        %v1160 = vunpack.c.l.b16 %v1064
        %v1161 = vunpack.c.l.b16 %v1065
        %v1162 = vunpack.c.l.b16 %v1066
        %v1163 = vunpack.c.l.b16 %v1067
        %v1164 = vunpack.c.l.b16 %v1068
        %v1165 = vunpack.c.l.b16 %v1069
        %v1166 = vunpack.c.l.b16 %v1070
        %v1167 = vunpack.c.l.b16 %v1071
        %v1168 = vunpack.c.l.b16 %v1072
        %v1169 = vunpack.c.l.b16 %v1073
        %v1170 = vunpack.c.l.b16 %v1074
        %v1171 = vunpack.c.l.b16 %v1075
        %v1172 = vunpack.c.l.b16 %v1076
        %v1173 = vunpack.c.l.b16 %v1077
        %v1174 = vunpack.c.l.b16 %v1078
        %v1175 = vunpack.c.l.b16 %v1079
        %v1176 = vunpack.c.l.b16 %v1080
        %v1177 = vunpack.c.l.b16 %v1081
        %v1178 = vunpack.c.l.b16 %v1082
        %v1179 = vunpack.c.l.b16 %v1083
        %v1180 = vunpack.c.l.b16 %v1084
        %v1181 = vunpack.c.l.b16 %v1085
        %v1182 = vunpack.c.l.b16 %v1086
        %v1183 = vunpack.c.l.b16 %v1087
        %v1184 = vunpack.c.l.b16 %v1088
        %v1185 = vunpack.c.l.b16 %v1089
        %v1186 = vunpack.c.l.b16 %v1090
        %v1187 = vunpack.c.l.b16 %v1091
        %v1188 = vunpack.c.l.b16 %v1092
        %v1189 = vunpack.c.l.b16 %v1093
        %v1190 = vunpack.c.l.b16 %v1094
        %v1191 = vunpack.c.l.b16 %v1095
        %v1192 = vunpack.c.l.b16 %v1096
        %v1193 = vunpack.c.l.b16 %v1097
        %v1194 = vunpack.c.l.b16 %v1098
        %v1195 = vunpack.c.l.b16 %v1099
        %v1196 = vunpack.c.l.b16 %v1100
        %v1197 = vunpack.c.l.b16 %v1101
        %v1198 = vunpack.c.l.b16 %v1102
        %v1199 = vunpack.c.l.b16 %v1103
        %v1200 = vunpack.c.l.b16 %v1104
        %v1201 = vunpack.c.l.b16 %v1105
        %v1202 = vunpack.c.l.b16 %v1106
        %v1203 = vunpack.c.l.b16 %v1107
        %v1204 = vunpack.c.l.b16 %v1108
        %v1205 = vunpack.c.l.b16 %v1109
        %v1206 = vunpack.c.l.b16 %v1110
        %v1207 = vpack.c.b16 %v1160, %v1159
        %v1208 = vpack.c.b16 %v1162, %v1161
        %v1209 = vpack.c.b16 %v1164, %v1163
        %v1210 = vpack.c.b16 %v1166, %v1165
        %v1211 = vpack.c.b16 %v1168, %v1167
        %v1212 = vpack.c.b16 %v1170, %v1169
        %v1213 = vpack.c.b16 %v1172, %v1171
        %v1214 = vpack.c.b16 %v1174, %v1173
        %v1215 = vpack.c.b16 %v1176, %v1175
        %v1216 = vpack.c.b16 %v1178, %v1177
        %v1217 = vpack.c.b16 %v1180, %v1179
        %v1218 = vpack.c.b16 %v1182, %v1181
        %v1219 = vpack.c.b16 %v1184, %v1183
        %v1220 = vpack.c.b16 %v1186, %v1185
        %v1221 = vpack.c.b16 %v1188, %v1187
        %v1222 = vpack.c.b16 %v1190, %v1189
        %v1223 = vpack.c.b16 %v1192, %v1191
        %v1224 = vpack.c.b16 %v1194, %v1193
        %v1225 = vpack.c.b16 %v1196, %v1195
        %v1226 = vpack.c.b16 %v1198, %v1197
        %v1227 = vpack.c.b16 %v1200, %v1199
        %v1228 = vpack.c.b16 %v1202, %v1201
        %v1229 = vpack.c.b16 %v1204, %v1203
        %v1230 = vpack.c.b16 %v1206, %v1205
        %1255 = vmatpush.bf16.msra.mxu0 %v1214
        %1256 = vmatpush.bf16.msra.mxu0 %v1213
        %1257 = vmatpush.bf16.msra.mxu0 %v1212
        %1258 = vmatpush.bf16.msra.mxu0 %v1211
        %1259 = vmatpush.bf16.msra.mxu0 %v1210
        %1260 = vmatpush.bf16.msra.mxu0 %v1209
        %1261 = vmatpush.bf16.msra.mxu0 %v1208
        %1262 = vmatpush.bf16.msra.mxu0 %v1207
        %1263 = vmatmul.bf16.gmra.mxu0 %v423
        %v1264 = vpop.f32.mrf.mxu0
        %v1265 = vadd.f32 0.0, %v1264
        %v1266 = vpop.f32.mrf.mxu0
        %v1267 = vadd.f32 0.0, %v1266
        %1268 = vmatmul.bf16.gmra.mxu0 %v424
        %v1269 = vpop.f32.mrf.mxu0
        %v1270 = vadd.f32 0.0, %v1269
        %v1271 = vpop.f32.mrf.mxu0
        %v1272 = vadd.f32 0.0, %v1271
        %1273 = vmatmul.bf16.gmra.mxu0 %v425
        %v1274 = vpop.f32.mrf.mxu0
        %v1275 = vadd.f32 0.0, %v1274
        %v1276 = vpop.f32.mrf.mxu0
        %v1277 = vadd.f32 0.0, %v1276
        %1278 = vmatmul.bf16.gmra.mxu0 %v426
        %v1279 = vpop.f32.mrf.mxu0
        %v1280 = vadd.f32 0.0, %v1279
        %v1281 = vpop.f32.mrf.mxu0
        %v1282 = vadd.f32 0.0, %v1281
        %1283 = vmatmul.bf16.gmra.mxu0 %v427
        %v1284 = vpop.f32.mrf.mxu0
        %v1285 = vadd.f32 0.0, %v1284
        %v1286 = vpop.f32.mrf.mxu0
        %v1287 = vadd.f32 0.0, %v1286
        %1288 = vmatmul.bf16.gmra.mxu0 %v428
        %v1289 = vpop.f32.mrf.mxu0
        %v1290 = vadd.f32 0.0, %v1289
        %v1291 = vpop.f32.mrf.mxu0
        %v1292 = vadd.f32 0.0, %v1291
        %1293 = vmatmul.bf16.gmra.mxu0 %v429
        %v1294 = vpop.f32.mrf.mxu0
        %v1295 = vadd.f32 0.0, %v1294
        %v1296 = vpop.f32.mrf.mxu0
        %v1297 = vadd.f32 0.0, %v1296
        %1298 = vmatmul.bf16.gmra.mxu0 %v430
        %v1299 = vpop.f32.mrf.mxu0
        %v1300 = vadd.f32 0.0, %v1299
        %v1301 = vpop.f32.mrf.mxu0
        %v1302 = vadd.f32 0.0, %v1301
        %1303 = vmatmul.bf16.gmra.mxu0 %v431
        %v1304 = vpop.f32.mrf.mxu0
        %v1305 = vadd.f32 0.0, %v1304
        %v1306 = vpop.f32.mrf.mxu0
        %v1307 = vadd.f32 0.0, %v1306
        %1308 = vmatmul.bf16.gmra.mxu0 %v432
        %v1309 = vpop.f32.mrf.mxu0
        %v1310 = vadd.f32 0.0, %v1309
        %v1311 = vpop.f32.mrf.mxu0
        %v1312 = vadd.f32 0.0, %v1311
        %1313 = vmatmul.bf16.gmra.mxu0 %v433
        %v1314 = vpop.f32.mrf.mxu0
        %v1315 = vadd.f32 0.0, %v1314
        %v1316 = vpop.f32.mrf.mxu0
        %v1317 = vadd.f32 0.0, %v1316
        %1318 = vmatmul.bf16.gmra.mxu0 %v434
        %v1319 = vpop.f32.mrf.mxu0
        %v1320 = vadd.f32 0.0, %v1319
        %v1321 = vpop.f32.mrf.mxu0
        %v1322 = vadd.f32 0.0, %v1321
        %1323 = vmatmul.bf16.gmra.mxu0 %v435
        %v1324 = vpop.f32.mrf.mxu0
        %v1325 = vadd.f32 0.0, %v1324
        %v1326 = vpop.f32.mrf.mxu0
        %v1327 = vadd.f32 0.0, %v1326
        %1328 = vmatmul.bf16.gmra.mxu0 %v436
        %v1329 = vpop.f32.mrf.mxu0
        %v1330 = vadd.f32 0.0, %v1329
        %v1331 = vpop.f32.mrf.mxu0
        %v1332 = vadd.f32 0.0, %v1331
        %1333 = vmatmul.bf16.gmra.mxu0 %v437
        %v1334 = vpop.f32.mrf.mxu0
        %v1335 = vadd.f32 0.0, %v1334
        %v1336 = vpop.f32.mrf.mxu0
        %v1337 = vadd.f32 0.0, %v1336
        %1338 = vmatmul.bf16.gmra.mxu0 %v438
        %v1339 = vpop.f32.mrf.mxu0
        %v1340 = vadd.f32 0.0, %v1339
        %v1341 = vpop.f32.mrf.mxu0
        %v1342 = vadd.f32 0.0, %v1341
        %1343 = vdwg.mxu0
        %1344 = vmatpush.bf16.msra.mxu0 %v1222
        %1345 = vmatpush.bf16.msra.mxu0 %v1221
        %1346 = vmatpush.bf16.msra.mxu0 %v1220
        %1347 = vmatpush.bf16.msra.mxu0 %v1219
        %1348 = vmatpush.bf16.msra.mxu0 %v1218
        %1349 = vmatpush.bf16.msra.mxu0 %v1217
        %1350 = vmatpush.bf16.msra.mxu0 %v1216
        %1351 = vmatpush.bf16.msra.mxu0 %v1215
        %1352 = vmatmul.bf16.gmra.mxu0 %v424
        %v1353 = vpop.f32.mrf.mxu0
        %v1354 = vadd.f32 %v1265, %v1353
        %v1355 = vpop.f32.mrf.mxu0
        %v1356 = vadd.f32 %v1267, %v1355
        %1357 = vmatmul.bf16.gmra.mxu0 %v425
        %v1358 = vpop.f32.mrf.mxu0
        %v1359 = vadd.f32 %v1270, %v1358
        %v1360 = vpop.f32.mrf.mxu0
        %v1361 = vadd.f32 %v1272, %v1360
        %1362 = vmatmul.bf16.gmra.mxu0 %v426
        %v1363 = vpop.f32.mrf.mxu0
        %v1364 = vadd.f32 %v1275, %v1363
        %v1365 = vpop.f32.mrf.mxu0
        %v1366 = vadd.f32 %v1277, %v1365
        %1367 = vmatmul.bf16.gmra.mxu0 %v427
        %v1368 = vpop.f32.mrf.mxu0
        %v1369 = vadd.f32 %v1280, %v1368
        %v1370 = vpop.f32.mrf.mxu0
        %v1371 = vadd.f32 %v1282, %v1370
        %1372 = vmatmul.bf16.gmra.mxu0 %v428
        %v1373 = vpop.f32.mrf.mxu0
        %v1374 = vadd.f32 %v1285, %v1373
        %v1375 = vpop.f32.mrf.mxu0
        %v1376 = vadd.f32 %v1287, %v1375
        %1377 = vmatmul.bf16.gmra.mxu0 %v429
        %v1378 = vpop.f32.mrf.mxu0
        %v1379 = vadd.f32 %v1290, %v1378
        %v1380 = vpop.f32.mrf.mxu0
        %v1381 = vadd.f32 %v1292, %v1380
        %1382 = vmatmul.bf16.gmra.mxu0 %v430
        %v1383 = vpop.f32.mrf.mxu0
        %v1384 = vadd.f32 %v1295, %v1383
        %v1385 = vpop.f32.mrf.mxu0
        %v1386 = vadd.f32 %v1297, %v1385
        %1387 = vmatmul.bf16.gmra.mxu0 %v431
        %v1388 = vpop.f32.mrf.mxu0
        %v1389 = vadd.f32 %v1300, %v1388
        %v1390 = vpop.f32.mrf.mxu0
        %v1391 = vadd.f32 %v1302, %v1390
        %1392 = vmatmul.bf16.gmra.mxu0 %v432
        %v1393 = vpop.f32.mrf.mxu0
        %v1394 = vadd.f32 %v1305, %v1393
        %v1395 = vpop.f32.mrf.mxu0
        %v1396 = vadd.f32 %v1307, %v1395
        %1397 = vmatmul.bf16.gmra.mxu0 %v433
        %v1398 = vpop.f32.mrf.mxu0
        %v1399 = vadd.f32 %v1310, %v1398
        %v1400 = vpop.f32.mrf.mxu0
        %v1401 = vadd.f32 %v1312, %v1400
        %1402 = vmatmul.bf16.gmra.mxu0 %v434
        %v1403 = vpop.f32.mrf.mxu0
        %v1404 = vadd.f32 %v1315, %v1403
        %v1405 = vpop.f32.mrf.mxu0
        %v1406 = vadd.f32 %v1317, %v1405
        %1407 = vmatmul.bf16.gmra.mxu0 %v435
        %v1408 = vpop.f32.mrf.mxu0
        %v1409 = vadd.f32 %v1320, %v1408
        %v1410 = vpop.f32.mrf.mxu0
        %v1411 = vadd.f32 %v1322, %v1410
        %1412 = vmatmul.bf16.gmra.mxu0 %v436
        %v1413 = vpop.f32.mrf.mxu0
        %v1414 = vadd.f32 %v1325, %v1413
        %v1415 = vpop.f32.mrf.mxu0
        %v1416 = vadd.f32 %v1327, %v1415
        %1417 = vmatmul.bf16.gmra.mxu0 %v437
        %v1418 = vpop.f32.mrf.mxu0
        %v1419 = vadd.f32 %v1330, %v1418
        %v1420 = vpop.f32.mrf.mxu0
        %v1421 = vadd.f32 %v1332, %v1420
        %1422 = vmatmul.bf16.gmra.mxu0 %v438
        %v1423 = vpop.f32.mrf.mxu0
        %v1424 = vadd.f32 %v1335, %v1423
        %v1425 = vpop.f32.mrf.mxu0
        %v1426 = vadd.f32 %v1337, %v1425
        %1427 = vmatmul.bf16.gmra.mxu0 %v459
        %v1428 = vpop.f32.mrf.mxu0
        %v1429 = vadd.f32 %v1340, %v1428
        %v1430 = vpop.f32.mrf.mxu0
        %v1431 = vadd.f32 %v1342, %v1430
        %1432 = vdwg.mxu0
        %1433 = vmatpush.bf16.msra.mxu0 %v1230
        %1434 = vmatpush.bf16.msra.mxu0 %v1229
        %1435 = vmatpush.bf16.msra.mxu0 %v1228
        %1436 = vmatpush.bf16.msra.mxu0 %v1227
        %1437 = vmatpush.bf16.msra.mxu0 %v1226
        %1438 = vmatpush.bf16.msra.mxu0 %v1225
        %1439 = vmatpush.bf16.msra.mxu0 %v1224
        %1440 = vmatpush.bf16.msra.mxu0 %v1223
        %1441 = vmatmul.bf16.gmra.mxu0 %v425
        %v1442 = vpop.f32.mrf.mxu0
        %v1443 = vadd.f32 %v1354, %v1442
        %v1444 = vpop.f32.mrf.mxu0
        %v1445 = vadd.f32 %v1356, %v1444
        %1446 = vmatmul.bf16.gmra.mxu0 %v426
        %v1447 = vpop.f32.mrf.mxu0
        %v1448 = vadd.f32 %v1359, %v1447
        %v1449 = vpop.f32.mrf.mxu0
        %v1450 = vadd.f32 %v1361, %v1449
        %1451 = vmatmul.bf16.gmra.mxu0 %v427
        %v1452 = vpop.f32.mrf.mxu0
        %v1453 = vadd.f32 %v1364, %v1452
        %v1454 = vpop.f32.mrf.mxu0
        %v1455 = vadd.f32 %v1366, %v1454
        %1456 = vmatmul.bf16.gmra.mxu0 %v428
        %v1457 = vpop.f32.mrf.mxu0
        %v1458 = vadd.f32 %v1369, %v1457
        %v1459 = vpop.f32.mrf.mxu0
        %v1460 = vadd.f32 %v1371, %v1459
        %1461 = vmatmul.bf16.gmra.mxu0 %v429
        %v1462 = vpop.f32.mrf.mxu0
        %v1463 = vadd.f32 %v1374, %v1462
        %v1464 = vpop.f32.mrf.mxu0
        %v1465 = vadd.f32 %v1376, %v1464
        %1466 = vmatmul.bf16.gmra.mxu0 %v430
        %v1467 = vpop.f32.mrf.mxu0
        %v1468 = vadd.f32 %v1379, %v1467
        %v1469 = vpop.f32.mrf.mxu0
        %v1470 = vadd.f32 %v1381, %v1469
        %1471 = vmatmul.bf16.gmra.mxu0 %v431
        %v1472 = vpop.f32.mrf.mxu0
        %v1473 = vadd.f32 %v1384, %v1472
        %v1474 = vpop.f32.mrf.mxu0
        %v1475 = vadd.f32 %v1386, %v1474
        %1476 = vmatmul.bf16.gmra.mxu0 %v432
        %v1477 = vpop.f32.mrf.mxu0
        %v1478 = vadd.f32 %v1389, %v1477
        %v1479 = vpop.f32.mrf.mxu0
        %v1480 = vadd.f32 %v1391, %v1479
        %1481 = vmatmul.bf16.gmra.mxu0 %v433
        %v1482 = vpop.f32.mrf.mxu0
        %v1483 = vadd.f32 %v1394, %v1482
        %v1484 = vpop.f32.mrf.mxu0
        %v1485 = vadd.f32 %v1396, %v1484
        %1486 = vmatmul.bf16.gmra.mxu0 %v434
        %v1487 = vpop.f32.mrf.mxu0
        %v1488 = vadd.f32 %v1399, %v1487
        %v1489 = vpop.f32.mrf.mxu0
        %v1490 = vadd.f32 %v1401, %v1489
        %1491 = vmatmul.bf16.gmra.mxu0 %v435
        %v1492 = vpop.f32.mrf.mxu0
        %v1493 = vadd.f32 %v1404, %v1492
        %v1494 = vpop.f32.mrf.mxu0
        %v1495 = vadd.f32 %v1406, %v1494
        %1496 = vmatmul.bf16.gmra.mxu0 %v436
        %v1497 = vpop.f32.mrf.mxu0
        %v1498 = vadd.f32 %v1409, %v1497
        %v1499 = vpop.f32.mrf.mxu0
        %v1500 = vadd.f32 %v1411, %v1499
        %1501 = vmatmul.bf16.gmra.mxu0 %v437
        %v1502 = vpop.f32.mrf.mxu0
        %v1503 = vadd.f32 %v1414, %v1502
        %v1504 = vpop.f32.mrf.mxu0
        %v1505 = vadd.f32 %v1416, %v1504
        %1506 = vmatmul.bf16.gmra.mxu0 %v438
        %v1507 = vpop.f32.mrf.mxu0
        %v1508 = vadd.f32 %v1419, %v1507
        %v1509 = vpop.f32.mrf.mxu0
        %v1510 = vadd.f32 %v1421, %v1509
        %1511 = vmatmul.bf16.gmra.mxu0 %v459
        %v1512 = vpop.f32.mrf.mxu0
        %v1513 = vadd.f32 %v1424, %v1512
        %v1514 = vpop.f32.mrf.mxu0
        %v1515 = vadd.f32 %v1426, %v1514
        %1516 = vmatmul.bf16.gmra.mxu0 %v465
        %v1517 = vpop.f32.mrf.mxu0
        %v1518 = vadd.f32 %v1429, %v1517
        %v1519 = vpop.f32.mrf.mxu0
        %v1520 = vadd.f32 %v1431, %v1519
        %1521 = vdwg.mxu0
        %v1522 = vadd.f32 %v1030, %v1443
        %v1523 = vadd.f32 %v1031, %v1445
        %v1524 = vadd.f32 %v1032, %v1448
        %v1525 = vadd.f32 %v1033, %v1450
        %v1526 = vadd.f32 %v1034, %v1453
        %v1527 = vadd.f32 %v1035, %v1455
        %v1528 = vadd.f32 %v1036, %v1458
        %v1529 = vadd.f32 %v1037, %v1460
        %v1530 = vadd.f32 %v1038, %v1463
        %v1531 = vadd.f32 %v1039, %v1465
        %v1532 = vadd.f32 %v1040, %v1468
        %v1533 = vadd.f32 %v1041, %v1470
        %v1534 = vadd.f32 %v1042, %v1473
        %v1535 = vadd.f32 %v1043, %v1475
        %v1536 = vadd.f32 %v1044, %v1478
        %v1537 = vadd.f32 %v1045, %v1480
        %v1538 = vadd.f32 %v1046, %v1483
        %v1539 = vadd.f32 %v1047, %v1485
        %v1540 = vadd.f32 %v1048, %v1488
        %v1541 = vadd.f32 %v1049, %v1490
        %v1542 = vadd.f32 %v1050, %v1493
        %v1543 = vadd.f32 %v1051, %v1495
        %v1544 = vadd.f32 %v1052, %v1498
        %v1545 = vadd.f32 %v1053, %v1500
        %v1546 = vadd.f32 %v1054, %v1503
        %v1547 = vadd.f32 %v1055, %v1505
        %v1548 = vadd.f32 %v1056, %v1508
        %v1549 = vadd.f32 %v1057, %v1510
        %v1550 = vadd.f32 %v1058, %v1513
        %v1551 = vadd.f32 %v1059, %v1515
        %v1552 = vadd.f32 %v1060, %v1518
        %v1553 = vadd.f32 %v1061, %v1520
        %s1554 = scalar_lea.vmem [#allocation6], 384
        %v1555 = vld [vmem:[%s1554] sm:$0xf]
        %v1556 = vld [vmem:[%s1554 + $0x4] sm:$0xf]
        %v1557 = vld [vmem:[%s1554 + $0x8] sm:$0xf]
        %v1558 = vld [vmem:[%s1554 + $0xc] sm:$0xf]
        %v1559 = vld [vmem:[%s1554 + $0x10] sm:$0xf]
        %v1560 = vld [vmem:[%s1554 + $0x14] sm:$0xf]
        %v1561 = vld [vmem:[%s1554 + $0x18] sm:$0xf]
        %v1562 = vld [vmem:[%s1554 + $0x1c] sm:$0xf]
        %v1563 = vld [vmem:[%s1554 + $0x20] sm:$0xf]
        %v1564 = vld [vmem:[%s1554 + $0x24] sm:$0xf]
        %v1565 = vld [vmem:[%s1554 + $0x28] sm:$0xf]
        %v1566 = vld [vmem:[%s1554 + $0x2c] sm:$0xf]
        %v1567 = vld [vmem:[%s1554 + $0x30] sm:$0xf]
        %v1568 = vld [vmem:[%s1554 + $0x34] sm:$0xf]
        %v1569 = vld [vmem:[%s1554 + $0x38] sm:$0xf]
        %v1570 = vld [vmem:[%s1554 + $0x3c] sm:$0xf]
        %v1571 = vld [vmem:[%s1554 + $0x40] sm:$0xf]
        %v1572 = vld [vmem:[%s1554 + $0x44] sm:$0xf]
        %v1573 = vld [vmem:[%s1554 + $0x48] sm:$0xf]
        %v1574 = vld [vmem:[%s1554 + $0x4c] sm:$0xf]
        %v1575 = vld [vmem:[%s1554 + $0x50] sm:$0xf]
        %v1576 = vld [vmem:[%s1554 + $0x54] sm:$0xf]
        %v1577 = vld [vmem:[%s1554 + $0x58] sm:$0xf]
        %v1578 = vld [vmem:[%s1554 + $0x5c] sm:$0xf]
        %v1579 = vld [vmem:[%s1554 + $0x60] sm:$0xf]
        %v1580 = vld [vmem:[%s1554 + $0x64] sm:$0xf]
        %v1581 = vld [vmem:[%s1554 + $0x68] sm:$0xf]
        %v1582 = vld [vmem:[%s1554 + $0x6c] sm:$0xf]
        %v1583 = vld [vmem:[%s1554 + $0x70] sm:$0xf]
        %v1584 = vld [vmem:[%s1554 + $0x74] sm:$0xf]
        %v1585 = vld [vmem:[%s1554 + $0x78] sm:$0xf]
        %v1586 = vld [vmem:[%s1554 + $0x7c] sm:$0xf]
        %v1587 = vld [vmem:[%s1554 + $0x80] sm:$0xf]
        %v1588 = vld [vmem:[%s1554 + $0x84] sm:$0xf]
        %v1589 = vld [vmem:[%s1554 + $0x88] sm:$0xf]
        %v1590 = vld [vmem:[%s1554 + $0x8c] sm:$0xf]
        %v1591 = vld [vmem:[%s1554 + $0x90] sm:$0xf]
        %v1592 = vld [vmem:[%s1554 + $0x94] sm:$0xf]
        %v1593 = vld [vmem:[%s1554 + $0x98] sm:$0xf]
        %v1594 = vld [vmem:[%s1554 + $0x9c] sm:$0xf]
        %v1595 = vld [vmem:[%s1554 + $0xa0] sm:$0xf]
        %v1596 = vld [vmem:[%s1554 + $0xa4] sm:$0xf]
        %v1597 = vld [vmem:[%s1554 + $0xa8] sm:$0xf]
        %v1598 = vld [vmem:[%s1554 + $0xac] sm:$0xf]
        %v1599 = vld [vmem:[%s1554 + $0xb0] sm:$0xf]
        %v1600 = vld [vmem:[%s1554 + $0xb4] sm:$0xf]
        %v1601 = vld [vmem:[%s1554 + $0xb8] sm:$0xf]
        %v1602 = vld [vmem:[%s1554 + $0xbc] sm:$0xf]
        %v1651 = vunpack.c.l.b16 %v1555
        %v1652 = vunpack.c.l.b16 %v1556
        %v1653 = vunpack.c.l.b16 %v1557
        %v1654 = vunpack.c.l.b16 %v1558
        %v1655 = vunpack.c.l.b16 %v1559
        %v1656 = vunpack.c.l.b16 %v1560
        %v1657 = vunpack.c.l.b16 %v1561
        %v1658 = vunpack.c.l.b16 %v1562
        %v1659 = vunpack.c.l.b16 %v1563
        %v1660 = vunpack.c.l.b16 %v1564
        %v1661 = vunpack.c.l.b16 %v1565
        %v1662 = vunpack.c.l.b16 %v1566
        %v1663 = vunpack.c.l.b16 %v1567
        %v1664 = vunpack.c.l.b16 %v1568
        %v1665 = vunpack.c.l.b16 %v1569
        %v1666 = vunpack.c.l.b16 %v1570
        %v1667 = vunpack.c.l.b16 %v1571
        %v1668 = vunpack.c.l.b16 %v1572
        %v1669 = vunpack.c.l.b16 %v1573
        %v1670 = vunpack.c.l.b16 %v1574
        %v1671 = vunpack.c.l.b16 %v1575
        %v1672 = vunpack.c.l.b16 %v1576
        %v1673 = vunpack.c.l.b16 %v1577
        %v1674 = vunpack.c.l.b16 %v1578
        %v1675 = vunpack.c.l.b16 %v1579
        %v1676 = vunpack.c.l.b16 %v1580
        %v1677 = vunpack.c.l.b16 %v1581
        %v1678 = vunpack.c.l.b16 %v1582
        %v1679 = vunpack.c.l.b16 %v1583
        %v1680 = vunpack.c.l.b16 %v1584
        %v1681 = vunpack.c.l.b16 %v1585
        %v1682 = vunpack.c.l.b16 %v1586
        %v1683 = vunpack.c.l.b16 %v1587
        %v1684 = vunpack.c.l.b16 %v1588
        %v1685 = vunpack.c.l.b16 %v1589
        %v1686 = vunpack.c.l.b16 %v1590
        %v1687 = vunpack.c.l.b16 %v1591
        %v1688 = vunpack.c.l.b16 %v1592
        %v1689 = vunpack.c.l.b16 %v1593
        %v1690 = vunpack.c.l.b16 %v1594
        %v1691 = vunpack.c.l.b16 %v1595
        %v1692 = vunpack.c.l.b16 %v1596
        %v1693 = vunpack.c.l.b16 %v1597
        %v1694 = vunpack.c.l.b16 %v1598
        %v1695 = vunpack.c.l.b16 %v1599
        %v1696 = vunpack.c.l.b16 %v1600
        %v1697 = vunpack.c.l.b16 %v1601
        %v1698 = vunpack.c.l.b16 %v1602
        %v1699 = vpack.c.b16 %v1652, %v1651
        %v1700 = vpack.c.b16 %v1654, %v1653
        %v1701 = vpack.c.b16 %v1656, %v1655
        %v1702 = vpack.c.b16 %v1658, %v1657
        %v1703 = vpack.c.b16 %v1660, %v1659
        %v1704 = vpack.c.b16 %v1662, %v1661
        %v1705 = vpack.c.b16 %v1664, %v1663
        %v1706 = vpack.c.b16 %v1666, %v1665
        %v1707 = vpack.c.b16 %v1668, %v1667
        %v1708 = vpack.c.b16 %v1670, %v1669
        %v1709 = vpack.c.b16 %v1672, %v1671
        %v1710 = vpack.c.b16 %v1674, %v1673
        %v1711 = vpack.c.b16 %v1676, %v1675
        %v1712 = vpack.c.b16 %v1678, %v1677
        %v1713 = vpack.c.b16 %v1680, %v1679
        %v1714 = vpack.c.b16 %v1682, %v1681
        %v1715 = vpack.c.b16 %v1684, %v1683
        %v1716 = vpack.c.b16 %v1686, %v1685
        %v1717 = vpack.c.b16 %v1688, %v1687
        %v1718 = vpack.c.b16 %v1690, %v1689
        %v1719 = vpack.c.b16 %v1692, %v1691
        %v1720 = vpack.c.b16 %v1694, %v1693
        %v1721 = vpack.c.b16 %v1696, %v1695
        %v1722 = vpack.c.b16 %v1698, %v1697
        %1747 = vmatpush.bf16.msra.mxu0 %v1706
        %1748 = vmatpush.bf16.msra.mxu0 %v1705
        %1749 = vmatpush.bf16.msra.mxu0 %v1704
        %1750 = vmatpush.bf16.msra.mxu0 %v1703
        %1751 = vmatpush.bf16.msra.mxu0 %v1702
        %1752 = vmatpush.bf16.msra.mxu0 %v1701
        %1753 = vmatpush.bf16.msra.mxu0 %v1700
        %1754 = vmatpush.bf16.msra.mxu0 %v1699
        %1755 = vmatmul.bf16.gmra.mxu0 %v423
        %v1756 = vpop.f32.mrf.mxu0
        %v1757 = vadd.f32 0.0, %v1756
        %v1758 = vpop.f32.mrf.mxu0
        %v1759 = vadd.f32 0.0, %v1758
        %1760 = vmatmul.bf16.gmra.mxu0 %v424
        %v1761 = vpop.f32.mrf.mxu0
        %v1762 = vadd.f32 0.0, %v1761
        %v1763 = vpop.f32.mrf.mxu0
        %v1764 = vadd.f32 0.0, %v1763
        %1765 = vmatmul.bf16.gmra.mxu0 %v425
        %v1766 = vpop.f32.mrf.mxu0
        %v1767 = vadd.f32 0.0, %v1766
        %v1768 = vpop.f32.mrf.mxu0
        %v1769 = vadd.f32 0.0, %v1768
        %1770 = vmatmul.bf16.gmra.mxu0 %v426
        %v1771 = vpop.f32.mrf.mxu0
        %v1772 = vadd.f32 0.0, %v1771
        %v1773 = vpop.f32.mrf.mxu0
        %v1774 = vadd.f32 0.0, %v1773
        %1775 = vmatmul.bf16.gmra.mxu0 %v427
        %v1776 = vpop.f32.mrf.mxu0
        %v1777 = vadd.f32 0.0, %v1776
        %v1778 = vpop.f32.mrf.mxu0
        %v1779 = vadd.f32 0.0, %v1778
        %1780 = vmatmul.bf16.gmra.mxu0 %v428
        %v1781 = vpop.f32.mrf.mxu0
        %v1782 = vadd.f32 0.0, %v1781
        %v1783 = vpop.f32.mrf.mxu0
        %v1784 = vadd.f32 0.0, %v1783
        %1785 = vmatmul.bf16.gmra.mxu0 %v429
        %v1786 = vpop.f32.mrf.mxu0
        %v1787 = vadd.f32 0.0, %v1786
        %v1788 = vpop.f32.mrf.mxu0
        %v1789 = vadd.f32 0.0, %v1788
        %1790 = vmatmul.bf16.gmra.mxu0 %v430
        %v1791 = vpop.f32.mrf.mxu0
        %v1792 = vadd.f32 0.0, %v1791
        %v1793 = vpop.f32.mrf.mxu0
        %v1794 = vadd.f32 0.0, %v1793
        %1795 = vmatmul.bf16.gmra.mxu0 %v431
        %v1796 = vpop.f32.mrf.mxu0
        %v1797 = vadd.f32 0.0, %v1796
        %v1798 = vpop.f32.mrf.mxu0
        %v1799 = vadd.f32 0.0, %v1798
        %1800 = vmatmul.bf16.gmra.mxu0 %v432
        %v1801 = vpop.f32.mrf.mxu0
        %v1802 = vadd.f32 0.0, %v1801
        %v1803 = vpop.f32.mrf.mxu0
        %v1804 = vadd.f32 0.0, %v1803
        %1805 = vmatmul.bf16.gmra.mxu0 %v433
        %v1806 = vpop.f32.mrf.mxu0
        %v1807 = vadd.f32 0.0, %v1806
        %v1808 = vpop.f32.mrf.mxu0
        %v1809 = vadd.f32 0.0, %v1808
        %1810 = vmatmul.bf16.gmra.mxu0 %v434
        %v1811 = vpop.f32.mrf.mxu0
        %v1812 = vadd.f32 0.0, %v1811
        %v1813 = vpop.f32.mrf.mxu0
        %v1814 = vadd.f32 0.0, %v1813
        %1815 = vmatmul.bf16.gmra.mxu0 %v435
        %v1816 = vpop.f32.mrf.mxu0
        %v1817 = vadd.f32 0.0, %v1816
        %v1818 = vpop.f32.mrf.mxu0
        %v1819 = vadd.f32 0.0, %v1818
        %1820 = vmatmul.bf16.gmra.mxu0 %v436
        %v1821 = vpop.f32.mrf.mxu0
        %v1822 = vadd.f32 0.0, %v1821
        %v1823 = vpop.f32.mrf.mxu0
        %v1824 = vadd.f32 0.0, %v1823
        %1825 = vmatmul.bf16.gmra.mxu0 %v437
        %v1826 = vpop.f32.mrf.mxu0
        %v1827 = vadd.f32 0.0, %v1826
        %v1828 = vpop.f32.mrf.mxu0
        %v1829 = vadd.f32 0.0, %v1828
        %1830 = vmatmul.bf16.gmra.mxu0 %v438
        %v1831 = vpop.f32.mrf.mxu0
        %v1832 = vadd.f32 0.0, %v1831
        %v1833 = vpop.f32.mrf.mxu0
        %v1834 = vadd.f32 0.0, %v1833
        %1835 = vdwg.mxu0
        %1836 = vmatpush.bf16.msra.mxu0 %v1714
        %1837 = vmatpush.bf16.msra.mxu0 %v1713
        %1838 = vmatpush.bf16.msra.mxu0 %v1712
        %1839 = vmatpush.bf16.msra.mxu0 %v1711
        %1840 = vmatpush.bf16.msra.mxu0 %v1710
        %1841 = vmatpush.bf16.msra.mxu0 %v1709
        %1842 = vmatpush.bf16.msra.mxu0 %v1708
        %1843 = vmatpush.bf16.msra.mxu0 %v1707
        %1844 = vmatmul.bf16.gmra.mxu0 %v424
        %v1845 = vpop.f32.mrf.mxu0
        %v1846 = vadd.f32 %v1757, %v1845
        %v1847 = vpop.f32.mrf.mxu0
        %v1848 = vadd.f32 %v1759, %v1847
        %1849 = vmatmul.bf16.gmra.mxu0 %v425
        %v1850 = vpop.f32.mrf.mxu0
        %v1851 = vadd.f32 %v1762, %v1850
        %v1852 = vpop.f32.mrf.mxu0
        %v1853 = vadd.f32 %v1764, %v1852
        %1854 = vmatmul.bf16.gmra.mxu0 %v426
        %v1855 = vpop.f32.mrf.mxu0
        %v1856 = vadd.f32 %v1767, %v1855
        %v1857 = vpop.f32.mrf.mxu0
        %v1858 = vadd.f32 %v1769, %v1857
        %1859 = vmatmul.bf16.gmra.mxu0 %v427
        %v1860 = vpop.f32.mrf.mxu0
        %v1861 = vadd.f32 %v1772, %v1860
        %v1862 = vpop.f32.mrf.mxu0
        %v1863 = vadd.f32 %v1774, %v1862
        %1864 = vmatmul.bf16.gmra.mxu0 %v428
        %v1865 = vpop.f32.mrf.mxu0
        %v1866 = vadd.f32 %v1777, %v1865
        %v1867 = vpop.f32.mrf.mxu0
        %v1868 = vadd.f32 %v1779, %v1867
        %1869 = vmatmul.bf16.gmra.mxu0 %v429
        %v1870 = vpop.f32.mrf.mxu0
        %v1871 = vadd.f32 %v1782, %v1870
        %v1872 = vpop.f32.mrf.mxu0
        %v1873 = vadd.f32 %v1784, %v1872
        %1874 = vmatmul.bf16.gmra.mxu0 %v430
        %v1875 = vpop.f32.mrf.mxu0
        %v1876 = vadd.f32 %v1787, %v1875
        %v1877 = vpop.f32.mrf.mxu0
        %v1878 = vadd.f32 %v1789, %v1877
        %1879 = vmatmul.bf16.gmra.mxu0 %v431
        %v1880 = vpop.f32.mrf.mxu0
        %v1881 = vadd.f32 %v1792, %v1880
        %v1882 = vpop.f32.mrf.mxu0
        %v1883 = vadd.f32 %v1794, %v1882
        %1884 = vmatmul.bf16.gmra.mxu0 %v432
        %v1885 = vpop.f32.mrf.mxu0
        %v1886 = vadd.f32 %v1797, %v1885
        %v1887 = vpop.f32.mrf.mxu0
        %v1888 = vadd.f32 %v1799, %v1887
        %1889 = vmatmul.bf16.gmra.mxu0 %v433
        %v1890 = vpop.f32.mrf.mxu0
        %v1891 = vadd.f32 %v1802, %v1890
        %v1892 = vpop.f32.mrf.mxu0
        %v1893 = vadd.f32 %v1804, %v1892
        %1894 = vmatmul.bf16.gmra.mxu0 %v434
        %v1895 = vpop.f32.mrf.mxu0
        %v1896 = vadd.f32 %v1807, %v1895
        %v1897 = vpop.f32.mrf.mxu0
        %v1898 = vadd.f32 %v1809, %v1897
        %1899 = vmatmul.bf16.gmra.mxu0 %v435
        %v1900 = vpop.f32.mrf.mxu0
        %v1901 = vadd.f32 %v1812, %v1900
        %v1902 = vpop.f32.mrf.mxu0
        %v1903 = vadd.f32 %v1814, %v1902
        %1904 = vmatmul.bf16.gmra.mxu0 %v436
        %v1905 = vpop.f32.mrf.mxu0
        %v1906 = vadd.f32 %v1817, %v1905
        %v1907 = vpop.f32.mrf.mxu0
        %v1908 = vadd.f32 %v1819, %v1907
        %1909 = vmatmul.bf16.gmra.mxu0 %v437
        %v1910 = vpop.f32.mrf.mxu0
        %v1911 = vadd.f32 %v1822, %v1910
        %v1912 = vpop.f32.mrf.mxu0
        %v1913 = vadd.f32 %v1824, %v1912
        %1914 = vmatmul.bf16.gmra.mxu0 %v438
        %v1915 = vpop.f32.mrf.mxu0
        %v1916 = vadd.f32 %v1827, %v1915
        %v1917 = vpop.f32.mrf.mxu0
        %v1918 = vadd.f32 %v1829, %v1917
        %1919 = vmatmul.bf16.gmra.mxu0 %v459
        %v1920 = vpop.f32.mrf.mxu0
        %v1921 = vadd.f32 %v1832, %v1920
        %v1922 = vpop.f32.mrf.mxu0
        %v1923 = vadd.f32 %v1834, %v1922
        %1924 = vdwg.mxu0
        %1925 = vmatpush.bf16.msra.mxu0 %v1722
        %1926 = vmatpush.bf16.msra.mxu0 %v1721
        %1927 = vmatpush.bf16.msra.mxu0 %v1720
        %1928 = vmatpush.bf16.msra.mxu0 %v1719
        %1929 = vmatpush.bf16.msra.mxu0 %v1718
        %1930 = vmatpush.bf16.msra.mxu0 %v1717
        %1931 = vmatpush.bf16.msra.mxu0 %v1716
        %1932 = vmatpush.bf16.msra.mxu0 %v1715
        %1933 = vmatmul.bf16.gmra.mxu0 %v425
        %v1934 = vpop.f32.mrf.mxu0
        %v1935 = vadd.f32 %v1846, %v1934
        %v1936 = vpop.f32.mrf.mxu0
        %v1937 = vadd.f32 %v1848, %v1936
        %1938 = vmatmul.bf16.gmra.mxu0 %v426
        %v1939 = vpop.f32.mrf.mxu0
        %v1940 = vadd.f32 %v1851, %v1939
        %v1941 = vpop.f32.mrf.mxu0
        %v1942 = vadd.f32 %v1853, %v1941
        %1943 = vmatmul.bf16.gmra.mxu0 %v427
        %v1944 = vpop.f32.mrf.mxu0
        %v1945 = vadd.f32 %v1856, %v1944
        %v1946 = vpop.f32.mrf.mxu0
        %v1947 = vadd.f32 %v1858, %v1946
        %1948 = vmatmul.bf16.gmra.mxu0 %v428
        %v1949 = vpop.f32.mrf.mxu0
        %v1950 = vadd.f32 %v1861, %v1949
        %v1951 = vpop.f32.mrf.mxu0
        %v1952 = vadd.f32 %v1863, %v1951
        %1953 = vmatmul.bf16.gmra.mxu0 %v429
        %v1954 = vpop.f32.mrf.mxu0
        %v1955 = vadd.f32 %v1866, %v1954
        %v1956 = vpop.f32.mrf.mxu0
        %v1957 = vadd.f32 %v1868, %v1956
        %1958 = vmatmul.bf16.gmra.mxu0 %v430
        %v1959 = vpop.f32.mrf.mxu0
        %v1960 = vadd.f32 %v1871, %v1959
        %v1961 = vpop.f32.mrf.mxu0
        %v1962 = vadd.f32 %v1873, %v1961
        %1963 = vmatmul.bf16.gmra.mxu0 %v431
        %v1964 = vpop.f32.mrf.mxu0
        %v1965 = vadd.f32 %v1876, %v1964
        %v1966 = vpop.f32.mrf.mxu0
        %v1967 = vadd.f32 %v1878, %v1966
        %1968 = vmatmul.bf16.gmra.mxu0 %v432
        %v1969 = vpop.f32.mrf.mxu0
        %v1970 = vadd.f32 %v1881, %v1969
        %v1971 = vpop.f32.mrf.mxu0
        %v1972 = vadd.f32 %v1883, %v1971
        %1973 = vmatmul.bf16.gmra.mxu0 %v433
        %v1974 = vpop.f32.mrf.mxu0
        %v1975 = vadd.f32 %v1886, %v1974
        %v1976 = vpop.f32.mrf.mxu0
        %v1977 = vadd.f32 %v1888, %v1976
        %1978 = vmatmul.bf16.gmra.mxu0 %v434
        %v1979 = vpop.f32.mrf.mxu0
        %v1980 = vadd.f32 %v1891, %v1979
        %v1981 = vpop.f32.mrf.mxu0
        %v1982 = vadd.f32 %v1893, %v1981
        %1983 = vmatmul.bf16.gmra.mxu0 %v435
        %v1984 = vpop.f32.mrf.mxu0
        %v1985 = vadd.f32 %v1896, %v1984
        %v1986 = vpop.f32.mrf.mxu0
        %v1987 = vadd.f32 %v1898, %v1986
        %1988 = vmatmul.bf16.gmra.mxu0 %v436
        %v1989 = vpop.f32.mrf.mxu0
        %v1990 = vadd.f32 %v1901, %v1989
        %v1991 = vpop.f32.mrf.mxu0
        %v1992 = vadd.f32 %v1903, %v1991
        %1993 = vmatmul.bf16.gmra.mxu0 %v437
        %v1994 = vpop.f32.mrf.mxu0
        %v1995 = vadd.f32 %v1906, %v1994
        %v1996 = vpop.f32.mrf.mxu0
        %v1997 = vadd.f32 %v1908, %v1996
        %1998 = vmatmul.bf16.gmra.mxu0 %v438
        %v1999 = vpop.f32.mrf.mxu0
        %v2000 = vadd.f32 %v1911, %v1999
        %v2001 = vpop.f32.mrf.mxu0
        %v2002 = vadd.f32 %v1913, %v2001
        %2003 = vmatmul.bf16.gmra.mxu0 %v459
        %v2004 = vpop.f32.mrf.mxu0
        %v2005 = vadd.f32 %v1916, %v2004
        %v2006 = vpop.f32.mrf.mxu0
        %v2007 = vadd.f32 %v1918, %v2006
        %2008 = vmatmul.bf16.gmra.mxu0 %v465
        %v2009 = vpop.f32.mrf.mxu0
        %v2010 = vadd.f32 %v1921, %v2009
        %v2011 = vpop.f32.mrf.mxu0
        %v2012 = vadd.f32 %v1923, %v2011
        %2013 = vdwg.mxu0
        %v2014 = vrot.slane %v1935, 1
        %v2015 = vrot.slane %v1940, 1
        %v2016 = vrot.slane %v1945, 1
        %v2017 = vrot.slane %v1950, 1
        %v2018 = vrot.slane %v1955, 1
        %v2019 = vrot.slane %v1960, 1
        %v2020 = vrot.slane %v1965, 1
        %v2021 = vrot.slane %v1970, 1
        %v2022 = vrot.slane %v1975, 1
        %v2023 = vrot.slane %v1980, 1
        %v2024 = vrot.slane %v1985, 1
        %v2025 = vrot.slane %v1990, 1
        %v2026 = vrot.slane %v1995, 1
        %v2027 = vrot.slane %v2000, 1
        %v2028 = vrot.slane %v2005, 1
        %v2029 = vrot.slane %v2010, 1
        %v2030 = vrot.slane %v1937, 1
        %v2031 = vrot.slane %v1942, 1
        %v2032 = vrot.slane %v1947, 1
        %v2033 = vrot.slane %v1952, 1
        %v2034 = vrot.slane %v1957, 1
        %v2035 = vrot.slane %v1962, 1
        %v2036 = vrot.slane %v1967, 1
        %v2037 = vrot.slane %v1972, 1
        %v2038 = vrot.slane %v1977, 1
        %v2039 = vrot.slane %v1982, 1
        %v2040 = vrot.slane %v1987, 1
        %v2041 = vrot.slane %v1992, 1
        %v2042 = vrot.slane %v1997, 1
        %v2043 = vrot.slane %v2002, 1
        %v2044 = vrot.slane %v2007, 1
        %v2045 = vrot.slane %v2012, 1
        %vm2046 = vcmp.lt.s32.totalorder %v280, 7
        %v2047 = vsel %vm2046, %v2014, %v2030
        %v2048 = vsel %vm2046, %v2015, %v2031
        %v2049 = vsel %vm2046, %v2016, %v2032
        %v2050 = vsel %vm2046, %v2017, %v2033
        %v2051 = vsel %vm2046, %v2018, %v2034
        %v2052 = vsel %vm2046, %v2019, %v2035
        %v2053 = vsel %vm2046, %v2020, %v2036
        %v2054 = vsel %vm2046, %v2021, %v2037
        %v2055 = vsel %vm2046, %v2022, %v2038
        %v2056 = vsel %vm2046, %v2023, %v2039
        %v2057 = vsel %vm2046, %v2024, %v2040
        %v2058 = vsel %vm2046, %v2025, %v2041
        %v2059 = vsel %vm2046, %v2026, %v2042
        %v2060 = vsel %vm2046, %v2027, %v2043
        %v2061 = vsel %vm2046, %v2028, %v2044
        %v2062 = vsel %vm2046, %v2029, %v2045
        %v2063 = vsel %vm2046, %v2030, %v2014
        %v2064 = vsel %vm2046, %v2031, %v2015
        %v2065 = vsel %vm2046, %v2032, %v2016
        %v2066 = vsel %vm2046, %v2033, %v2017
        %v2067 = vsel %vm2046, %v2034, %v2018
        %v2068 = vsel %vm2046, %v2035, %v2019
        %v2069 = vsel %vm2046, %v2036, %v2020
        %v2070 = vsel %vm2046, %v2037, %v2021
        %v2071 = vsel %vm2046, %v2038, %v2022
        %v2072 = vsel %vm2046, %v2039, %v2023
        %v2073 = vsel %vm2046, %v2040, %v2024
        %v2074 = vsel %vm2046, %v2041, %v2025
        %v2075 = vsel %vm2046, %v2042, %v2026
        %v2076 = vsel %vm2046, %v2043, %v2027
        %v2077 = vsel %vm2046, %v2044, %v2028
        %v2078 = vsel %vm2046, %v2045, %v2029
        %v2079 = vsel %vm284, 1, 0
        %v2080 = vsel %vm285, 1, 0
        %vm2081 = vcmp.eq.s32.totalorder %v2079, 1
        %vm2082 = vcmp.eq.s32.totalorder %v2080, 1
        %v2083 = vsel %vm2081, 0.0, %v2047
        %v2084 = vsel %vm2082, 0.0, %v2063
        %v2085 = vsel %vm2081, 0.0, %v2048
        %v2086 = vsel %vm2082, 0.0, %v2064
        %v2087 = vsel %vm2081, 0.0, %v2049
        %v2088 = vsel %vm2082, 0.0, %v2065
        %v2089 = vsel %vm2081, 0.0, %v2050
        %v2090 = vsel %vm2082, 0.0, %v2066
        %v2091 = vsel %vm2081, 0.0, %v2051
        %v2092 = vsel %vm2082, 0.0, %v2067
        %v2093 = vsel %vm2081, 0.0, %v2052
        %v2094 = vsel %vm2082, 0.0, %v2068
        %v2095 = vsel %vm2081, 0.0, %v2053
        %v2096 = vsel %vm2082, 0.0, %v2069
        %v2097 = vsel %vm2081, 0.0, %v2054
        %v2098 = vsel %vm2082, 0.0, %v2070
        %v2099 = vsel %vm2081, 0.0, %v2055
        %v2100 = vsel %vm2082, 0.0, %v2071
        %v2101 = vsel %vm2081, 0.0, %v2056
        %v2102 = vsel %vm2082, 0.0, %v2072
        %v2103 = vsel %vm2081, 0.0, %v2057
        %v2104 = vsel %vm2082, 0.0, %v2073
        %v2105 = vsel %vm2081, 0.0, %v2058
        %v2106 = vsel %vm2082, 0.0, %v2074
        %v2107 = vsel %vm2081, 0.0, %v2059
        %v2108 = vsel %vm2082, 0.0, %v2075
        %v2109 = vsel %vm2081, 0.0, %v2060
        %v2110 = vsel %vm2082, 0.0, %v2076
        %v2111 = vsel %vm2081, 0.0, %v2061
        %v2112 = vsel %vm2082, 0.0, %v2077
        %v2113 = vsel %vm2081, 0.0, %v2062
        %v2114 = vsel %vm2082, 0.0, %v2078
        %v2115 = vadd.f32 %v1522, %v2083
        %v2116 = vadd.f32 %v1523, %v2084
        %v2117 = vadd.f32 %v1524, %v2085
        %v2118 = vadd.f32 %v1525, %v2086
        %v2119 = vadd.f32 %v1526, %v2087
        %v2120 = vadd.f32 %v1527, %v2088
        %v2121 = vadd.f32 %v1528, %v2089
        %v2122 = vadd.f32 %v1529, %v2090
        %v2123 = vadd.f32 %v1530, %v2091
        %v2124 = vadd.f32 %v1531, %v2092
        %v2125 = vadd.f32 %v1532, %v2093
        %v2126 = vadd.f32 %v1533, %v2094
        %v2127 = vadd.f32 %v1534, %v2095
        %v2128 = vadd.f32 %v1535, %v2096
        %v2129 = vadd.f32 %v1536, %v2097
        %v2130 = vadd.f32 %v1537, %v2098
        %v2131 = vadd.f32 %v1538, %v2099
        %v2132 = vadd.f32 %v1539, %v2100
        %v2133 = vadd.f32 %v1540, %v2101
        %v2134 = vadd.f32 %v1541, %v2102
        %v2135 = vadd.f32 %v1542, %v2103
        %v2136 = vadd.f32 %v1543, %v2104
        %v2137 = vadd.f32 %v1544, %v2105
        %v2138 = vadd.f32 %v1545, %v2106
        %v2139 = vadd.f32 %v1546, %v2107
        %v2140 = vadd.f32 %v1547, %v2108
        %v2141 = vadd.f32 %v1548, %v2109
        %v2142 = vadd.f32 %v1549, %v2110
        %v2143 = vadd.f32 %v1550, %v2111
        %v2144 = vadd.f32 %v1551, %v2112
        %v2145 = vadd.f32 %v1552, %v2113
        %v2146 = vadd.f32 %v1553, %v2114
        %v2147 = vmax.f32 %v2115, 0.0
        %v2148 = vmax.f32 %v2116, 0.0
        %v2149 = vmax.f32 %v2117, 0.0
        %v2150 = vmax.f32 %v2118, 0.0
        %v2151 = vmax.f32 %v2119, 0.0
        %v2152 = vmax.f32 %v2120, 0.0
        %v2153 = vmax.f32 %v2121, 0.0
        %v2154 = vmax.f32 %v2122, 0.0
        %v2155 = vmax.f32 %v2123, 0.0
        %v2156 = vmax.f32 %v2124, 0.0
        %v2157 = vmax.f32 %v2125, 0.0
        %v2158 = vmax.f32 %v2126, 0.0
        %v2159 = vmax.f32 %v2127, 0.0
        %v2160 = vmax.f32 %v2128, 0.0
        %v2161 = vmax.f32 %v2129, 0.0
        %v2162 = vmax.f32 %v2130, 0.0
        %v2163 = vmax.f32 %v2131, 0.0
        %v2164 = vmax.f32 %v2132, 0.0
        %v2165 = vmax.f32 %v2133, 0.0
        %v2166 = vmax.f32 %v2134, 0.0
        %v2167 = vmax.f32 %v2135, 0.0
        %v2168 = vmax.f32 %v2136, 0.0
        %v2169 = vmax.f32 %v2137, 0.0
        %v2170 = vmax.f32 %v2138, 0.0
        %v2171 = vmax.f32 %v2139, 0.0
        %v2172 = vmax.f32 %v2140, 0.0
        %v2173 = vmax.f32 %v2141, 0.0
        %v2174 = vmax.f32 %v2142, 0.0
        %v2175 = vmax.f32 %v2143, 0.0
        %v2176 = vmax.f32 %v2144, 0.0
        %v2177 = vmax.f32 %v2145, 0.0
        %v2178 = vmax.f32 %v2146, 0.0
        %2179 = vst [vmem:[#allocation2] sm:$0xf] 0
        %2180 = vst [vmem:[#allocation2 + $0x4] sm:$0xf] 0
        %s2181 = scalar_lea.vmem [#allocation2], 136
        %2182 = vst [vmem:[%s2181] sm:$0xf] 0
        %2183 = vst [vmem:[%s2181 + $0x4] sm:$0xf] 0
        %v2184 = vpack.c.bf16 %v2147, %v2147
        %v2185 = vpack.c.bf16 %v2148, %v2148
        %v2186 = vpack.c.bf16 %v2149, %v2149
        %v2187 = vpack.c.bf16 %v2150, %v2150
        %v2188 = vpack.c.bf16 %v2151, %v2151
        %v2189 = vpack.c.bf16 %v2152, %v2152
        %v2190 = vpack.c.bf16 %v2153, %v2153
        %v2191 = vpack.c.bf16 %v2154, %v2154
        %v2192 = vpack.c.bf16 %v2155, %v2155
        %v2193 = vpack.c.bf16 %v2156, %v2156
        %v2194 = vpack.c.bf16 %v2157, %v2157
        %v2195 = vpack.c.bf16 %v2158, %v2158
        %v2196 = vpack.c.bf16 %v2159, %v2159
        %v2197 = vpack.c.bf16 %v2160, %v2160
        %v2198 = vpack.c.bf16 %v2161, %v2161
        %v2199 = vpack.c.bf16 %v2162, %v2162
        %v2200 = vpack.c.bf16 %v2163, %v2163
        %v2201 = vpack.c.bf16 %v2164, %v2164
        %v2202 = vpack.c.bf16 %v2165, %v2165
        %v2203 = vpack.c.bf16 %v2166, %v2166
        %v2204 = vpack.c.bf16 %v2167, %v2167
        %v2205 = vpack.c.bf16 %v2168, %v2168
        %v2206 = vpack.c.bf16 %v2169, %v2169
        %v2207 = vpack.c.bf16 %v2170, %v2170
        %v2208 = vpack.c.bf16 %v2171, %v2171
        %v2209 = vpack.c.bf16 %v2172, %v2172
        %v2210 = vpack.c.bf16 %v2173, %v2173
        %v2211 = vpack.c.bf16 %v2174, %v2174
        %v2212 = vpack.c.bf16 %v2175, %v2175
        %v2213 = vpack.c.bf16 %v2176, %v2176
        %v2214 = vpack.c.bf16 %v2177, %v2177
        %v2215 = vpack.c.bf16 %v2178, %v2178
        %s2216 = scalar_lea.vmem [#allocation2], 8
        %2217 = vst [vmem:[%s2216] sm:$0xf] %v2184
        %2218 = vst [vmem:[%s2216 + $0x4] sm:$0xf] %v2185
        %2219 = vst [vmem:[%s2216 + $0x8] sm:$0xf] %v2186
        %2220 = vst [vmem:[%s2216 + $0xc] sm:$0xf] %v2187
        %2221 = vst [vmem:[%s2216 + $0x10] sm:$0xf] %v2188
        %2222 = vst [vmem:[%s2216 + $0x14] sm:$0xf] %v2189
        %2223 = vst [vmem:[%s2216 + $0x18] sm:$0xf] %v2190
        %2224 = vst [vmem:[%s2216 + $0x1c] sm:$0xf] %v2191
        %2225 = vst [vmem:[%s2216 + $0x20] sm:$0xf] %v2192
        %2226 = vst [vmem:[%s2216 + $0x24] sm:$0xf] %v2193
        %2227 = vst [vmem:[%s2216 + $0x28] sm:$0xf] %v2194
        %2228 = vst [vmem:[%s2216 + $0x2c] sm:$0xf] %v2195
        %2229 = vst [vmem:[%s2216 + $0x30] sm:$0xf] %v2196
        %2230 = vst [vmem:[%s2216 + $0x34] sm:$0xf] %v2197
        %2231 = vst [vmem:[%s2216 + $0x38] sm:$0xf] %v2198
        %2232 = vst [vmem:[%s2216 + $0x3c] sm:$0xf] %v2199
        %2233 = vst [vmem:[%s2216 + $0x40] sm:$0xf] %v2200
        %2234 = vst [vmem:[%s2216 + $0x44] sm:$0xf] %v2201
        %2235 = vst [vmem:[%s2216 + $0x48] sm:$0xf] %v2202
        %2236 = vst [vmem:[%s2216 + $0x4c] sm:$0xf] %v2203
        %2237 = vst [vmem:[%s2216 + $0x50] sm:$0xf] %v2204
        %2238 = vst [vmem:[%s2216 + $0x54] sm:$0xf] %v2205
        %2239 = vst [vmem:[%s2216 + $0x58] sm:$0xf] %v2206
        %2240 = vst [vmem:[%s2216 + $0x5c] sm:$0xf] %v2207
        %2241 = vst [vmem:[%s2216 + $0x60] sm:$0xf] %v2208
        %2242 = vst [vmem:[%s2216 + $0x64] sm:$0xf] %v2209
        %2243 = vst [vmem:[%s2216 + $0x68] sm:$0xf] %v2210
        %2244 = vst [vmem:[%s2216 + $0x6c] sm:$0xf] %v2211
        %2245 = vst [vmem:[%s2216 + $0x70] sm:$0xf] %v2212
        %2246 = vst [vmem:[%s2216 + $0x74] sm:$0xf] %v2213
        %2247 = vst [vmem:[%s2216 + $0x78] sm:$0xf] %v2214
        %2248 = vst [vmem:[%s2216 + $0x7c] sm:$0xf] %v2215
        %v2249 = vld [vmem:[%s4] sm:$0x1]
        %v2251 = vperm.slane %v2249, 0
        %v2253 = vadd.f32 %v288, %v2251
        %v2254 = vadd.f32 %v289, %v2251
        %v2255 = vadd.f32 %v290, %v2251
        %v2256 = vadd.f32 %v291, %v2251
        %v2257 = vadd.f32 %v292, %v2251
        %v2258 = vadd.f32 %v293, %v2251
        %v2259 = vadd.f32 %v294, %v2251
        %v2260 = vadd.f32 %v295, %v2251
        %v2261 = vadd.f32 %v296, %v2251
        %v2262 = vadd.f32 %v297, %v2251
        %v2263 = vadd.f32 %v298, %v2251
        %v2264 = vadd.f32 %v299, %v2251
        %v2265 = vadd.f32 %v300, %v2251
        %v2266 = vadd.f32 %v301, %v2251
        %v2267 = vadd.f32 %v302, %v2251
        %v2268 = vadd.f32 %v303, %v2251
        %v2269 = vadd.f32 %v304, %v2251
        %v2270 = vadd.f32 %v305, %v2251
        %v2271 = vadd.f32 %v306, %v2251
        %v2272 = vadd.f32 %v307, %v2251
        %v2273 = vadd.f32 %v308, %v2251
        %v2274 = vadd.f32 %v309, %v2251
        %v2275 = vadd.f32 %v310, %v2251
        %v2276 = vadd.f32 %v311, %v2251
        %v2277 = vadd.f32 %v312, %v2251
        %v2278 = vadd.f32 %v313, %v2251
        %v2279 = vadd.f32 %v314, %v2251
        %v2280 = vadd.f32 %v315, %v2251
        %v2281 = vadd.f32 %v316, %v2251
        %v2282 = vadd.f32 %v317, %v2251
        %v2283 = vadd.f32 %v318, %v2251
        %v2284 = vadd.f32 %v319, %v2251
        %v2285 = vld [vmem:[#allocation2] sm:$0xf]
        %v2286 = vld [vmem:[#allocation2 + $0x4] sm:$0xf]
        %v2287 = vld [vmem:[#allocation2 + $0x8] sm:$0xf]
        %v2288 = vld [vmem:[#allocation2 + $0xc] sm:$0xf]
        %v2289 = vld [vmem:[#allocation2 + $0x10] sm:$0xf]
        %v2290 = vld [vmem:[#allocation2 + $0x14] sm:$0xf]
        %v2291 = vld [vmem:[#allocation2 + $0x18] sm:$0xf]
        %v2292 = vld [vmem:[#allocation2 + $0x1c] sm:$0xf]
        %v2293 = vld [vmem:[#allocation2 + $0x20] sm:$0xf]
        %v2294 = vld [vmem:[#allocation2 + $0x24] sm:$0xf]
        %v2295 = vld [vmem:[#allocation2 + $0x28] sm:$0xf]
        %v2296 = vld [vmem:[#allocation2 + $0x2c] sm:$0xf]
        %v2297 = vld [vmem:[#allocation2 + $0x30] sm:$0xf]
        %v2298 = vld [vmem:[#allocation2 + $0x34] sm:$0xf]
        %v2299 = vld [vmem:[#allocation2 + $0x38] sm:$0xf]
        %v2300 = vld [vmem:[#allocation2 + $0x3c] sm:$0xf]
        %v2301 = vld [vmem:[#allocation2 + $0x40] sm:$0xf]
        %v2302 = vld [vmem:[#allocation2 + $0x44] sm:$0xf]
        %v2303 = vld [vmem:[#allocation2 + $0x48] sm:$0xf]
        %v2304 = vld [vmem:[#allocation2 + $0x4c] sm:$0xf]
        %v2305 = vld [vmem:[#allocation2 + $0x50] sm:$0xf]
        %v2306 = vld [vmem:[#allocation2 + $0x54] sm:$0xf]
        %v2307 = vld [vmem:[#allocation2 + $0x58] sm:$0xf]
        %v2308 = vld [vmem:[#allocation2 + $0x5c] sm:$0xf]
        %v2309 = vld [vmem:[#allocation2 + $0x60] sm:$0xf]
        %v2310 = vld [vmem:[#allocation2 + $0x64] sm:$0xf]
        %v2311 = vld [vmem:[#allocation2 + $0x68] sm:$0xf]
        %v2312 = vld [vmem:[#allocation2 + $0x6c] sm:$0xf]
        %v2313 = vld [vmem:[#allocation2 + $0x70] sm:$0xf]
        %v2314 = vld [vmem:[#allocation2 + $0x74] sm:$0xf]
        %v2315 = vld [vmem:[#allocation2 + $0x78] sm:$0xf]
        %v2316 = vld [vmem:[#allocation2 + $0x7c] sm:$0xf]
        %v2317 = vld [vmem:[#allocation2 + $0x80] sm:$0xf]
        %v2318 = vld [vmem:[#allocation2 + $0x84] sm:$0xf]
        %v2319 = vld [vmem:[#allocation2 + $0x88] sm:$0xf]
        %v2320 = vld [vmem:[#allocation2 + $0x8c] sm:$0xf]
        %v2353 = vunpack.c.l.b16 %v2285
        %v2354 = vunpack.c.l.b16 %v2286
        %v2355 = vunpack.c.l.b16 %v2287
        %v2356 = vunpack.c.l.b16 %v2288
        %v2357 = vunpack.c.l.b16 %v2289
        %v2358 = vunpack.c.l.b16 %v2290
        %v2359 = vunpack.c.l.b16 %v2291
        %v2360 = vunpack.c.l.b16 %v2292
        %v2361 = vunpack.c.l.b16 %v2293
        %v2362 = vunpack.c.l.b16 %v2294
        %v2363 = vunpack.c.l.b16 %v2295
        %v2364 = vunpack.c.l.b16 %v2296
        %v2365 = vunpack.c.l.b16 %v2297
        %v2366 = vunpack.c.l.b16 %v2298
        %v2367 = vunpack.c.l.b16 %v2299
        %v2368 = vunpack.c.l.b16 %v2300
        %v2369 = vunpack.c.l.b16 %v2301
        %v2370 = vunpack.c.l.b16 %v2302
        %v2371 = vunpack.c.l.b16 %v2303
        %v2372 = vunpack.c.l.b16 %v2304
        %v2373 = vunpack.c.l.b16 %v2305
        %v2374 = vunpack.c.l.b16 %v2306
        %v2375 = vunpack.c.l.b16 %v2307
        %v2376 = vunpack.c.l.b16 %v2308
        %v2377 = vunpack.c.l.b16 %v2309
        %v2378 = vunpack.c.l.b16 %v2310
        %v2379 = vunpack.c.l.b16 %v2311
        %v2380 = vunpack.c.l.b16 %v2312
        %v2381 = vunpack.c.l.b16 %v2313
        %v2382 = vunpack.c.l.b16 %v2314
        %v2383 = vunpack.c.l.b16 %v2315
        %v2384 = vunpack.c.l.b16 %v2316
        %v2385 = vpack.c.b16 %v2354, %v2353
        %v2386 = vpack.c.b16 %v2356, %v2355
        %v2387 = vpack.c.b16 %v2358, %v2357
        %v2388 = vpack.c.b16 %v2360, %v2359
        %v2389 = vpack.c.b16 %v2362, %v2361
        %v2390 = vpack.c.b16 %v2364, %v2363
        %v2391 = vpack.c.b16 %v2366, %v2365
        %v2392 = vpack.c.b16 %v2368, %v2367
        %v2393 = vpack.c.b16 %v2370, %v2369
        %v2394 = vpack.c.b16 %v2372, %v2371
        %v2395 = vpack.c.b16 %v2374, %v2373
        %v2396 = vpack.c.b16 %v2376, %v2375
        %v2397 = vpack.c.b16 %v2378, %v2377
        %v2398 = vpack.c.b16 %v2380, %v2379
        %v2399 = vpack.c.b16 %v2382, %v2381
        %v2400 = vpack.c.b16 %v2384, %v2383
        %v2419 = vunpack.c.l.b16 %v2317
        %v2420 = vunpack.c.l.b16 %v2318
        %v2421 = vpack.c.b16 %v2420, %v2419
        %v2425 = vunpack.c.l.b16 %v2319
        %v2426 = vunpack.c.l.b16 %v2320
        %v2427 = vpack.c.b16 %v2426, %v2425
        %v2429 = vld [vmem:[#allocation8] sm:$0xf]
        %v2430 = vld [vmem:[#allocation8 + $0x4] sm:$0xf]
        %v2431 = vld [vmem:[#allocation8 + $0x8] sm:$0xf]
        %v2432 = vld [vmem:[#allocation8 + $0xc] sm:$0xf]
        %v2433 = vld [vmem:[#allocation8 + $0x10] sm:$0xf]
        %v2434 = vld [vmem:[#allocation8 + $0x14] sm:$0xf]
        %v2435 = vld [vmem:[#allocation8 + $0x18] sm:$0xf]
        %v2436 = vld [vmem:[#allocation8 + $0x1c] sm:$0xf]
        %v2437 = vld [vmem:[#allocation8 + $0x20] sm:$0xf]
        %v2438 = vld [vmem:[#allocation8 + $0x24] sm:$0xf]
        %v2439 = vld [vmem:[#allocation8 + $0x28] sm:$0xf]
        %v2440 = vld [vmem:[#allocation8 + $0x2c] sm:$0xf]
        %v2441 = vld [vmem:[#allocation8 + $0x30] sm:$0xf]
        %v2442 = vld [vmem:[#allocation8 + $0x34] sm:$0xf]
        %v2443 = vld [vmem:[#allocation8 + $0x38] sm:$0xf]
        %v2444 = vld [vmem:[#allocation8 + $0x3c] sm:$0xf]
        %v2445 = vld [vmem:[#allocation8 + $0x40] sm:$0xf]
        %v2446 = vld [vmem:[#allocation8 + $0x44] sm:$0xf]
        %v2447 = vld [vmem:[#allocation8 + $0x48] sm:$0xf]
        %v2448 = vld [vmem:[#allocation8 + $0x4c] sm:$0xf]
        %v2449 = vld [vmem:[#allocation8 + $0x50] sm:$0xf]
        %v2450 = vld [vmem:[#allocation8 + $0x54] sm:$0xf]
        %v2451 = vld [vmem:[#allocation8 + $0x58] sm:$0xf]
        %v2452 = vld [vmem:[#allocation8 + $0x5c] sm:$0xf]
        %v2453 = vld [vmem:[#allocation8 + $0x60] sm:$0xf]
        %v2454 = vld [vmem:[#allocation8 + $0x64] sm:$0xf]
        %v2455 = vld [vmem:[#allocation8 + $0x68] sm:$0xf]
        %v2456 = vld [vmem:[#allocation8 + $0x6c] sm:$0xf]
        %v2457 = vld [vmem:[#allocation8 + $0x70] sm:$0xf]
        %v2458 = vld [vmem:[#allocation8 + $0x74] sm:$0xf]
        %v2459 = vld [vmem:[#allocation8 + $0x78] sm:$0xf]
        %v2460 = vld [vmem:[#allocation8 + $0x7c] sm:$0xf]
        %v2461 = vld [vmem:[#allocation8 + $0x80] sm:$0xf]
        %v2462 = vld [vmem:[#allocation8 + $0x84] sm:$0xf]
        %v2463 = vld [vmem:[#allocation8 + $0x88] sm:$0xf]
        %v2464 = vld [vmem:[#allocation8 + $0x8c] sm:$0xf]
        %v2465 = vld [vmem:[#allocation8 + $0x90] sm:$0xf]
        %v2466 = vld [vmem:[#allocation8 + $0x94] sm:$0xf]
        %v2467 = vld [vmem:[#allocation8 + $0x98] sm:$0xf]
        %v2468 = vld [vmem:[#allocation8 + $0x9c] sm:$0xf]
        %v2469 = vld [vmem:[#allocation8 + $0xa0] sm:$0xf]
        %v2470 = vld [vmem:[#allocation8 + $0xa4] sm:$0xf]
        %v2471 = vld [vmem:[#allocation8 + $0xa8] sm:$0xf]
        %v2472 = vld [vmem:[#allocation8 + $0xac] sm:$0xf]
        %v2473 = vld [vmem:[#allocation8 + $0xb0] sm:$0xf]
        %v2474 = vld [vmem:[#allocation8 + $0xb4] sm:$0xf]
        %v2475 = vld [vmem:[#allocation8 + $0xb8] sm:$0xf]
        %v2476 = vld [vmem:[#allocation8 + $0xbc] sm:$0xf]
        %v2525 = vunpack.c.l.b16 %v2429
        %v2526 = vunpack.c.l.b16 %v2430
        %v2527 = vunpack.c.l.b16 %v2431
        %v2528 = vunpack.c.l.b16 %v2432
        %v2529 = vunpack.c.l.b16 %v2433
        %v2530 = vunpack.c.l.b16 %v2434
        %v2531 = vunpack.c.l.b16 %v2435
        %v2532 = vunpack.c.l.b16 %v2436
        %v2533 = vunpack.c.l.b16 %v2437
        %v2534 = vunpack.c.l.b16 %v2438
        %v2535 = vunpack.c.l.b16 %v2439
        %v2536 = vunpack.c.l.b16 %v2440
        %v2537 = vunpack.c.l.b16 %v2441
        %v2538 = vunpack.c.l.b16 %v2442
        %v2539 = vunpack.c.l.b16 %v2443
        %v2540 = vunpack.c.l.b16 %v2444
        %v2541 = vunpack.c.l.b16 %v2445
        %v2542 = vunpack.c.l.b16 %v2446
        %v2543 = vunpack.c.l.b16 %v2447
        %v2544 = vunpack.c.l.b16 %v2448
        %v2545 = vunpack.c.l.b16 %v2449
        %v2546 = vunpack.c.l.b16 %v2450
        %v2547 = vunpack.c.l.b16 %v2451
        %v2548 = vunpack.c.l.b16 %v2452
        %v2549 = vunpack.c.l.b16 %v2453
        %v2550 = vunpack.c.l.b16 %v2454
        %v2551 = vunpack.c.l.b16 %v2455
        %v2552 = vunpack.c.l.b16 %v2456
        %v2553 = vunpack.c.l.b16 %v2457
        %v2554 = vunpack.c.l.b16 %v2458
        %v2555 = vunpack.c.l.b16 %v2459
        %v2556 = vunpack.c.l.b16 %v2460
        %v2557 = vunpack.c.l.b16 %v2461
        %v2558 = vunpack.c.l.b16 %v2462
        %v2559 = vunpack.c.l.b16 %v2463
        %v2560 = vunpack.c.l.b16 %v2464
        %v2561 = vunpack.c.l.b16 %v2465
        %v2562 = vunpack.c.l.b16 %v2466
        %v2563 = vunpack.c.l.b16 %v2467
        %v2564 = vunpack.c.l.b16 %v2468
        %v2565 = vunpack.c.l.b16 %v2469
        %v2566 = vunpack.c.l.b16 %v2470
        %v2567 = vunpack.c.l.b16 %v2471
        %v2568 = vunpack.c.l.b16 %v2472
        %v2569 = vunpack.c.l.b16 %v2473
        %v2570 = vunpack.c.l.b16 %v2474
        %v2571 = vunpack.c.l.b16 %v2475
        %v2572 = vunpack.c.l.b16 %v2476
        %v2573 = vpack.c.b16 %v2526, %v2525
        %v2574 = vpack.c.b16 %v2528, %v2527
        %v2575 = vpack.c.b16 %v2530, %v2529
        %v2576 = vpack.c.b16 %v2532, %v2531
        %v2577 = vpack.c.b16 %v2534, %v2533
        %v2578 = vpack.c.b16 %v2536, %v2535
        %v2579 = vpack.c.b16 %v2538, %v2537
        %v2580 = vpack.c.b16 %v2540, %v2539
        %v2581 = vpack.c.b16 %v2542, %v2541
        %v2582 = vpack.c.b16 %v2544, %v2543
        %v2583 = vpack.c.b16 %v2546, %v2545
        %v2584 = vpack.c.b16 %v2548, %v2547
        %v2585 = vpack.c.b16 %v2550, %v2549
        %v2586 = vpack.c.b16 %v2552, %v2551
        %v2587 = vpack.c.b16 %v2554, %v2553
        %v2588 = vpack.c.b16 %v2556, %v2555
        %v2589 = vpack.c.b16 %v2558, %v2557
        %v2590 = vpack.c.b16 %v2560, %v2559
        %v2591 = vpack.c.b16 %v2562, %v2561
        %v2592 = vpack.c.b16 %v2564, %v2563
        %v2593 = vpack.c.b16 %v2566, %v2565
        %v2594 = vpack.c.b16 %v2568, %v2567
        %v2595 = vpack.c.b16 %v2570, %v2569
        %v2596 = vpack.c.b16 %v2572, %v2571
        %2621 = vmatpush.bf16.msra.mxu0 %v2580
        %2622 = vmatpush.bf16.msra.mxu0 %v2579
        %2623 = vmatpush.bf16.msra.mxu0 %v2578
        %2624 = vmatpush.bf16.msra.mxu0 %v2577
        %2625 = vmatpush.bf16.msra.mxu0 %v2576
        %2626 = vmatpush.bf16.msra.mxu0 %v2575
        %2627 = vmatpush.bf16.msra.mxu0 %v2574
        %2628 = vmatpush.bf16.msra.mxu0 %v2573
        %2629 = vmatmul.bf16.gmra.mxu0 %v2385
        %v2630 = vpop.f32.mrf.mxu0
        %v2631 = vadd.f32 0.0, %v2630
        %v2632 = vpop.f32.mrf.mxu0
        %v2633 = vadd.f32 0.0, %v2632
        %2634 = vmatmul.bf16.gmra.mxu0 %v2386
        %v2635 = vpop.f32.mrf.mxu0
        %v2636 = vadd.f32 0.0, %v2635
        %v2637 = vpop.f32.mrf.mxu0
        %v2638 = vadd.f32 0.0, %v2637
        %2639 = vmatmul.bf16.gmra.mxu0 %v2387
        %v2640 = vpop.f32.mrf.mxu0
        %v2641 = vadd.f32 0.0, %v2640
        %v2642 = vpop.f32.mrf.mxu0
        %v2643 = vadd.f32 0.0, %v2642
        %2644 = vmatmul.bf16.gmra.mxu0 %v2388
        %v2645 = vpop.f32.mrf.mxu0
        %v2646 = vadd.f32 0.0, %v2645
        %v2647 = vpop.f32.mrf.mxu0
        %v2648 = vadd.f32 0.0, %v2647
        %2649 = vmatmul.bf16.gmra.mxu0 %v2389
        %v2650 = vpop.f32.mrf.mxu0
        %v2651 = vadd.f32 0.0, %v2650
        %v2652 = vpop.f32.mrf.mxu0
        %v2653 = vadd.f32 0.0, %v2652
        %2654 = vmatmul.bf16.gmra.mxu0 %v2390
        %v2655 = vpop.f32.mrf.mxu0
        %v2656 = vadd.f32 0.0, %v2655
        %v2657 = vpop.f32.mrf.mxu0
        %v2658 = vadd.f32 0.0, %v2657
        %2659 = vmatmul.bf16.gmra.mxu0 %v2391
        %v2660 = vpop.f32.mrf.mxu0
        %v2661 = vadd.f32 0.0, %v2660
        %v2662 = vpop.f32.mrf.mxu0
        %v2663 = vadd.f32 0.0, %v2662
        %2664 = vmatmul.bf16.gmra.mxu0 %v2392
        %v2665 = vpop.f32.mrf.mxu0
        %v2666 = vadd.f32 0.0, %v2665
        %v2667 = vpop.f32.mrf.mxu0
        %v2668 = vadd.f32 0.0, %v2667
        %2669 = vmatmul.bf16.gmra.mxu0 %v2393
        %v2670 = vpop.f32.mrf.mxu0
        %v2671 = vadd.f32 0.0, %v2670
        %v2672 = vpop.f32.mrf.mxu0
        %v2673 = vadd.f32 0.0, %v2672
        %2674 = vmatmul.bf16.gmra.mxu0 %v2394
        %v2675 = vpop.f32.mrf.mxu0
        %v2676 = vadd.f32 0.0, %v2675
        %v2677 = vpop.f32.mrf.mxu0
        %v2678 = vadd.f32 0.0, %v2677
        %2679 = vmatmul.bf16.gmra.mxu0 %v2395
        %v2680 = vpop.f32.mrf.mxu0
        %v2681 = vadd.f32 0.0, %v2680
        %v2682 = vpop.f32.mrf.mxu0
        %v2683 = vadd.f32 0.0, %v2682
        %2684 = vmatmul.bf16.gmra.mxu0 %v2396
        %v2685 = vpop.f32.mrf.mxu0
        %v2686 = vadd.f32 0.0, %v2685
        %v2687 = vpop.f32.mrf.mxu0
        %v2688 = vadd.f32 0.0, %v2687
        %2689 = vmatmul.bf16.gmra.mxu0 %v2397
        %v2690 = vpop.f32.mrf.mxu0
        %v2691 = vadd.f32 0.0, %v2690
        %v2692 = vpop.f32.mrf.mxu0
        %v2693 = vadd.f32 0.0, %v2692
        %2694 = vmatmul.bf16.gmra.mxu0 %v2398
        %v2695 = vpop.f32.mrf.mxu0
        %v2696 = vadd.f32 0.0, %v2695
        %v2697 = vpop.f32.mrf.mxu0
        %v2698 = vadd.f32 0.0, %v2697
        %2699 = vmatmul.bf16.gmra.mxu0 %v2399
        %v2700 = vpop.f32.mrf.mxu0
        %v2701 = vadd.f32 0.0, %v2700
        %v2702 = vpop.f32.mrf.mxu0
        %v2703 = vadd.f32 0.0, %v2702
        %2704 = vmatmul.bf16.gmra.mxu0 %v2400
        %v2705 = vpop.f32.mrf.mxu0
        %v2706 = vadd.f32 0.0, %v2705
        %v2707 = vpop.f32.mrf.mxu0
        %v2708 = vadd.f32 0.0, %v2707
        %2709 = vdwg.mxu0
        %2710 = vmatpush.bf16.msra.mxu0 %v2588
        %2711 = vmatpush.bf16.msra.mxu0 %v2587
        %2712 = vmatpush.bf16.msra.mxu0 %v2586
        %2713 = vmatpush.bf16.msra.mxu0 %v2585
        %2714 = vmatpush.bf16.msra.mxu0 %v2584
        %2715 = vmatpush.bf16.msra.mxu0 %v2583
        %2716 = vmatpush.bf16.msra.mxu0 %v2582
        %2717 = vmatpush.bf16.msra.mxu0 %v2581
        %2718 = vmatmul.bf16.gmra.mxu0 %v2386
        %v2719 = vpop.f32.mrf.mxu0
        %v2720 = vadd.f32 %v2631, %v2719
        %v2721 = vpop.f32.mrf.mxu0
        %v2722 = vadd.f32 %v2633, %v2721
        %2723 = vmatmul.bf16.gmra.mxu0 %v2387
        %v2724 = vpop.f32.mrf.mxu0
        %v2725 = vadd.f32 %v2636, %v2724
        %v2726 = vpop.f32.mrf.mxu0
        %v2727 = vadd.f32 %v2638, %v2726
        %2728 = vmatmul.bf16.gmra.mxu0 %v2388
        %v2729 = vpop.f32.mrf.mxu0
        %v2730 = vadd.f32 %v2641, %v2729
        %v2731 = vpop.f32.mrf.mxu0
        %v2732 = vadd.f32 %v2643, %v2731
        %2733 = vmatmul.bf16.gmra.mxu0 %v2389
        %v2734 = vpop.f32.mrf.mxu0
        %v2735 = vadd.f32 %v2646, %v2734
        %v2736 = vpop.f32.mrf.mxu0
        %v2737 = vadd.f32 %v2648, %v2736
        %2738 = vmatmul.bf16.gmra.mxu0 %v2390
        %v2739 = vpop.f32.mrf.mxu0
        %v2740 = vadd.f32 %v2651, %v2739
        %v2741 = vpop.f32.mrf.mxu0
        %v2742 = vadd.f32 %v2653, %v2741
        %2743 = vmatmul.bf16.gmra.mxu0 %v2391
        %v2744 = vpop.f32.mrf.mxu0
        %v2745 = vadd.f32 %v2656, %v2744
        %v2746 = vpop.f32.mrf.mxu0
        %v2747 = vadd.f32 %v2658, %v2746
        %2748 = vmatmul.bf16.gmra.mxu0 %v2392
        %v2749 = vpop.f32.mrf.mxu0
        %v2750 = vadd.f32 %v2661, %v2749
        %v2751 = vpop.f32.mrf.mxu0
        %v2752 = vadd.f32 %v2663, %v2751
        %2753 = vmatmul.bf16.gmra.mxu0 %v2393
        %v2754 = vpop.f32.mrf.mxu0
        %v2755 = vadd.f32 %v2666, %v2754
        %v2756 = vpop.f32.mrf.mxu0
        %v2757 = vadd.f32 %v2668, %v2756
        %2758 = vmatmul.bf16.gmra.mxu0 %v2394
        %v2759 = vpop.f32.mrf.mxu0
        %v2760 = vadd.f32 %v2671, %v2759
        %v2761 = vpop.f32.mrf.mxu0
        %v2762 = vadd.f32 %v2673, %v2761
        %2763 = vmatmul.bf16.gmra.mxu0 %v2395
        %v2764 = vpop.f32.mrf.mxu0
        %v2765 = vadd.f32 %v2676, %v2764
        %v2766 = vpop.f32.mrf.mxu0
        %v2767 = vadd.f32 %v2678, %v2766
        %2768 = vmatmul.bf16.gmra.mxu0 %v2396
        %v2769 = vpop.f32.mrf.mxu0
        %v2770 = vadd.f32 %v2681, %v2769
        %v2771 = vpop.f32.mrf.mxu0
        %v2772 = vadd.f32 %v2683, %v2771
        %2773 = vmatmul.bf16.gmra.mxu0 %v2397
        %v2774 = vpop.f32.mrf.mxu0
        %v2775 = vadd.f32 %v2686, %v2774
        %v2776 = vpop.f32.mrf.mxu0
        %v2777 = vadd.f32 %v2688, %v2776
        %2778 = vmatmul.bf16.gmra.mxu0 %v2398
        %v2779 = vpop.f32.mrf.mxu0
        %v2780 = vadd.f32 %v2691, %v2779
        %v2781 = vpop.f32.mrf.mxu0
        %v2782 = vadd.f32 %v2693, %v2781
        %2783 = vmatmul.bf16.gmra.mxu0 %v2399
        %v2784 = vpop.f32.mrf.mxu0
        %v2785 = vadd.f32 %v2696, %v2784
        %v2786 = vpop.f32.mrf.mxu0
        %v2787 = vadd.f32 %v2698, %v2786
        %2788 = vmatmul.bf16.gmra.mxu0 %v2400
        %v2789 = vpop.f32.mrf.mxu0
        %v2790 = vadd.f32 %v2701, %v2789
        %v2791 = vpop.f32.mrf.mxu0
        %v2792 = vadd.f32 %v2703, %v2791
        %2793 = vmatmul.bf16.gmra.mxu0 %v2421
        %v2794 = vpop.f32.mrf.mxu0
        %v2795 = vadd.f32 %v2706, %v2794
        %v2796 = vpop.f32.mrf.mxu0
        %v2797 = vadd.f32 %v2708, %v2796
        %2798 = vdwg.mxu0
        %2799 = vmatpush.bf16.msra.mxu0 %v2596
        %2800 = vmatpush.bf16.msra.mxu0 %v2595
        %2801 = vmatpush.bf16.msra.mxu0 %v2594
        %2802 = vmatpush.bf16.msra.mxu0 %v2593
        %2803 = vmatpush.bf16.msra.mxu0 %v2592
        %2804 = vmatpush.bf16.msra.mxu0 %v2591
        %2805 = vmatpush.bf16.msra.mxu0 %v2590
        %2806 = vmatpush.bf16.msra.mxu0 %v2589
        %2807 = vmatmul.bf16.gmra.mxu0 %v2387
        %v2808 = vpop.f32.mrf.mxu0
        %v2809 = vadd.f32 %v2720, %v2808
        %v2810 = vpop.f32.mrf.mxu0
        %v2811 = vadd.f32 %v2722, %v2810
        %2812 = vmatmul.bf16.gmra.mxu0 %v2388
        %v2813 = vpop.f32.mrf.mxu0
        %v2814 = vadd.f32 %v2725, %v2813
        %v2815 = vpop.f32.mrf.mxu0
        %v2816 = vadd.f32 %v2727, %v2815
        %2817 = vmatmul.bf16.gmra.mxu0 %v2389
        %v2818 = vpop.f32.mrf.mxu0
        %v2819 = vadd.f32 %v2730, %v2818
        %v2820 = vpop.f32.mrf.mxu0
        %v2821 = vadd.f32 %v2732, %v2820
        %2822 = vmatmul.bf16.gmra.mxu0 %v2390
        %v2823 = vpop.f32.mrf.mxu0
        %v2824 = vadd.f32 %v2735, %v2823
        %v2825 = vpop.f32.mrf.mxu0
        %v2826 = vadd.f32 %v2737, %v2825
        %2827 = vmatmul.bf16.gmra.mxu0 %v2391
        %v2828 = vpop.f32.mrf.mxu0
        %v2829 = vadd.f32 %v2740, %v2828
        %v2830 = vpop.f32.mrf.mxu0
        %v2831 = vadd.f32 %v2742, %v2830
        %2832 = vmatmul.bf16.gmra.mxu0 %v2392
        %v2833 = vpop.f32.mrf.mxu0
        %v2834 = vadd.f32 %v2745, %v2833
        %v2835 = vpop.f32.mrf.mxu0
        %v2836 = vadd.f32 %v2747, %v2835
        %2837 = vmatmul.bf16.gmra.mxu0 %v2393
        %v2838 = vpop.f32.mrf.mxu0
        %v2839 = vadd.f32 %v2750, %v2838
        %v2840 = vpop.f32.mrf.mxu0
        %v2841 = vadd.f32 %v2752, %v2840
        %2842 = vmatmul.bf16.gmra.mxu0 %v2394
        %v2843 = vpop.f32.mrf.mxu0
        %v2844 = vadd.f32 %v2755, %v2843
        %v2845 = vpop.f32.mrf.mxu0
        %v2846 = vadd.f32 %v2757, %v2845
        %2847 = vmatmul.bf16.gmra.mxu0 %v2395
        %v2848 = vpop.f32.mrf.mxu0
        %v2849 = vadd.f32 %v2760, %v2848
        %v2850 = vpop.f32.mrf.mxu0
        %v2851 = vadd.f32 %v2762, %v2850
        %2852 = vmatmul.bf16.gmra.mxu0 %v2396
        %v2853 = vpop.f32.mrf.mxu0
        %v2854 = vadd.f32 %v2765, %v2853
        %v2855 = vpop.f32.mrf.mxu0
        %v2856 = vadd.f32 %v2767, %v2855
        %2857 = vmatmul.bf16.gmra.mxu0 %v2397
        %v2858 = vpop.f32.mrf.mxu0
        %v2859 = vadd.f32 %v2770, %v2858
        %v2860 = vpop.f32.mrf.mxu0
        %v2861 = vadd.f32 %v2772, %v2860
        %2862 = vmatmul.bf16.gmra.mxu0 %v2398
        %v2863 = vpop.f32.mrf.mxu0
        %v2864 = vadd.f32 %v2775, %v2863
        %v2865 = vpop.f32.mrf.mxu0
        %v2866 = vadd.f32 %v2777, %v2865
        %2867 = vmatmul.bf16.gmra.mxu0 %v2399
        %v2868 = vpop.f32.mrf.mxu0
        %v2869 = vadd.f32 %v2780, %v2868
        %v2870 = vpop.f32.mrf.mxu0
        %v2871 = vadd.f32 %v2782, %v2870
        %2872 = vmatmul.bf16.gmra.mxu0 %v2400
        %v2873 = vpop.f32.mrf.mxu0
        %v2874 = vadd.f32 %v2785, %v2873
        %v2875 = vpop.f32.mrf.mxu0
        %v2876 = vadd.f32 %v2787, %v2875
        %2877 = vmatmul.bf16.gmra.mxu0 %v2421
        %v2878 = vpop.f32.mrf.mxu0
        %v2879 = vadd.f32 %v2790, %v2878
        %v2880 = vpop.f32.mrf.mxu0
        %v2881 = vadd.f32 %v2792, %v2880
        %2882 = vmatmul.bf16.gmra.mxu0 %v2427
        %v2883 = vpop.f32.mrf.mxu0
        %v2884 = vadd.f32 %v2795, %v2883
        %v2885 = vpop.f32.mrf.mxu0
        %v2886 = vadd.f32 %v2797, %v2885
        %2887 = vdwg.mxu0
        %v2888 = vrot.slane %v2809, 7
        %v2889 = vrot.slane %v2814, 7
        %v2890 = vrot.slane %v2819, 7
        %v2891 = vrot.slane %v2824, 7
        %v2892 = vrot.slane %v2829, 7
        %v2893 = vrot.slane %v2834, 7
        %v2894 = vrot.slane %v2839, 7
        %v2895 = vrot.slane %v2844, 7
        %v2896 = vrot.slane %v2849, 7
        %v2897 = vrot.slane %v2854, 7
        %v2898 = vrot.slane %v2859, 7
        %v2899 = vrot.slane %v2864, 7
        %v2900 = vrot.slane %v2869, 7
        %v2901 = vrot.slane %v2874, 7
        %v2902 = vrot.slane %v2879, 7
        %v2903 = vrot.slane %v2884, 7
        %v2904 = vrot.slane %v2811, 7
        %v2905 = vrot.slane %v2816, 7
        %v2906 = vrot.slane %v2821, 7
        %v2907 = vrot.slane %v2826, 7
        %v2908 = vrot.slane %v2831, 7
        %v2909 = vrot.slane %v2836, 7
        %v2910 = vrot.slane %v2841, 7
        %v2911 = vrot.slane %v2846, 7
        %v2912 = vrot.slane %v2851, 7
        %v2913 = vrot.slane %v2856, 7
        %v2914 = vrot.slane %v2861, 7
        %v2915 = vrot.slane %v2866, 7
        %v2916 = vrot.slane %v2871, 7
        %v2917 = vrot.slane %v2876, 7
        %v2918 = vrot.slane %v2881, 7
        %v2919 = vrot.slane %v2886, 7
        %v2920 = vsel %vm958, %v2888, %v2904
        %v2921 = vsel %vm958, %v2889, %v2905
        %v2922 = vsel %vm958, %v2890, %v2906
        %v2923 = vsel %vm958, %v2891, %v2907
        %v2924 = vsel %vm958, %v2892, %v2908
        %v2925 = vsel %vm958, %v2893, %v2909
        %v2926 = vsel %vm958, %v2894, %v2910
        %v2927 = vsel %vm958, %v2895, %v2911
        %v2928 = vsel %vm958, %v2896, %v2912
        %v2929 = vsel %vm958, %v2897, %v2913
        %v2930 = vsel %vm958, %v2898, %v2914
        %v2931 = vsel %vm958, %v2899, %v2915
        %v2932 = vsel %vm958, %v2900, %v2916
        %v2933 = vsel %vm958, %v2901, %v2917
        %v2934 = vsel %vm958, %v2902, %v2918
        %v2935 = vsel %vm958, %v2903, %v2919
        %v2936 = vsel %vm958, %v2904, %v2888
        %v2937 = vsel %vm958, %v2905, %v2889
        %v2938 = vsel %vm958, %v2906, %v2890
        %v2939 = vsel %vm958, %v2907, %v2891
        %v2940 = vsel %vm958, %v2908, %v2892
        %v2941 = vsel %vm958, %v2909, %v2893
        %v2942 = vsel %vm958, %v2910, %v2894
        %v2943 = vsel %vm958, %v2911, %v2895
        %v2944 = vsel %vm958, %v2912, %v2896
        %v2945 = vsel %vm958, %v2913, %v2897
        %v2946 = vsel %vm958, %v2914, %v2898
        %v2947 = vsel %vm958, %v2915, %v2899
        %v2948 = vsel %vm958, %v2916, %v2900
        %v2949 = vsel %vm958, %v2917, %v2901
        %v2950 = vsel %vm958, %v2918, %v2902
        %v2951 = vsel %vm958, %v2919, %v2903
        %v2952 = vsel %vm993, 0.0, %v2936
        %v2953 = vsel %vm994, 0.0, %v2920
        %v2954 = vsel %vm993, 0.0, %v2937
        %v2955 = vsel %vm994, 0.0, %v2921
        %v2956 = vsel %vm993, 0.0, %v2938
        %v2957 = vsel %vm994, 0.0, %v2922
        %v2958 = vsel %vm993, 0.0, %v2939
        %v2959 = vsel %vm994, 0.0, %v2923
        %v2960 = vsel %vm993, 0.0, %v2940
        %v2961 = vsel %vm994, 0.0, %v2924
        %v2962 = vsel %vm993, 0.0, %v2941
        %v2963 = vsel %vm994, 0.0, %v2925
        %v2964 = vsel %vm993, 0.0, %v2942
        %v2965 = vsel %vm994, 0.0, %v2926
        %v2966 = vsel %vm993, 0.0, %v2943
        %v2967 = vsel %vm994, 0.0, %v2927
        %v2968 = vsel %vm993, 0.0, %v2944
        %v2969 = vsel %vm994, 0.0, %v2928
        %v2970 = vsel %vm993, 0.0, %v2945
        %v2971 = vsel %vm994, 0.0, %v2929
        %v2972 = vsel %vm993, 0.0, %v2946
        %v2973 = vsel %vm994, 0.0, %v2930
        %v2974 = vsel %vm993, 0.0, %v2947
        %v2975 = vsel %vm994, 0.0, %v2931
        %v2976 = vsel %vm993, 0.0, %v2948
        %v2977 = vsel %vm994, 0.0, %v2932
        %v2978 = vsel %vm993, 0.0, %v2949
        %v2979 = vsel %vm994, 0.0, %v2933
        %v2980 = vsel %vm993, 0.0, %v2950
        %v2981 = vsel %vm994, 0.0, %v2934
        %v2982 = vsel %vm993, 0.0, %v2951
        %v2983 = vsel %vm994, 0.0, %v2935
        %v2984 = vadd.f32 %v2253, %v2952
        %v2985 = vadd.f32 %v2254, %v2953
        %v2986 = vadd.f32 %v2255, %v2954
        %v2987 = vadd.f32 %v2256, %v2955
        %v2988 = vadd.f32 %v2257, %v2956
        %v2989 = vadd.f32 %v2258, %v2957
        %v2990 = vadd.f32 %v2259, %v2958
        %v2991 = vadd.f32 %v2260, %v2959
        %v2992 = vadd.f32 %v2261, %v2960
        %v2993 = vadd.f32 %v2262, %v2961
        %v2994 = vadd.f32 %v2263, %v2962
        %v2995 = vadd.f32 %v2264, %v2963
        %v2996 = vadd.f32 %v2265, %v2964
        %v2997 = vadd.f32 %v2266, %v2965
        %v2998 = vadd.f32 %v2267, %v2966
        %v2999 = vadd.f32 %v2268, %v2967
        %v3000 = vadd.f32 %v2269, %v2968
        %v3001 = vadd.f32 %v2270, %v2969
        %v3002 = vadd.f32 %v2271, %v2970
        %v3003 = vadd.f32 %v2272, %v2971
        %v3004 = vadd.f32 %v2273, %v2972
        %v3005 = vadd.f32 %v2274, %v2973
        %v3006 = vadd.f32 %v2275, %v2974
        %v3007 = vadd.f32 %v2276, %v2975
        %v3008 = vadd.f32 %v2277, %v2976
        %v3009 = vadd.f32 %v2278, %v2977
        %v3010 = vadd.f32 %v2279, %v2978
        %v3011 = vadd.f32 %v2280, %v2979
        %v3012 = vadd.f32 %v2281, %v2980
        %v3013 = vadd.f32 %v2282, %v2981
        %v3014 = vadd.f32 %v2283, %v2982
        %v3015 = vadd.f32 %v2284, %v2983
        %s3016 = scalar_lea.vmem [#allocation8], 192
        %v3017 = vld [vmem:[%s3016] sm:$0xf]
        %v3018 = vld [vmem:[%s3016 + $0x4] sm:$0xf]
        %v3019 = vld [vmem:[%s3016 + $0x8] sm:$0xf]
        %v3020 = vld [vmem:[%s3016 + $0xc] sm:$0xf]
        %v3021 = vld [vmem:[%s3016 + $0x10] sm:$0xf]
        %v3022 = vld [vmem:[%s3016 + $0x14] sm:$0xf]
        %v3023 = vld [vmem:[%s3016 + $0x18] sm:$0xf]
        %v3024 = vld [vmem:[%s3016 + $0x1c] sm:$0xf]
        %v3025 = vld [vmem:[%s3016 + $0x20] sm:$0xf]
        %v3026 = vld [vmem:[%s3016 + $0x24] sm:$0xf]
        %v3027 = vld [vmem:[%s3016 + $0x28] sm:$0xf]
        %v3028 = vld [vmem:[%s3016 + $0x2c] sm:$0xf]
        %v3029 = vld [vmem:[%s3016 + $0x30] sm:$0xf]
        %v3030 = vld [vmem:[%s3016 + $0x34] sm:$0xf]
        %v3031 = vld [vmem:[%s3016 + $0x38] sm:$0xf]
        %v3032 = vld [vmem:[%s3016 + $0x3c] sm:$0xf]
        %v3033 = vld [vmem:[%s3016 + $0x40] sm:$0xf]
        %v3034 = vld [vmem:[%s3016 + $0x44] sm:$0xf]
        %v3035 = vld [vmem:[%s3016 + $0x48] sm:$0xf]
        %v3036 = vld [vmem:[%s3016 + $0x4c] sm:$0xf]
        %v3037 = vld [vmem:[%s3016 + $0x50] sm:$0xf]
        %v3038 = vld [vmem:[%s3016 + $0x54] sm:$0xf]
        %v3039 = vld [vmem:[%s3016 + $0x58] sm:$0xf]
        %v3040 = vld [vmem:[%s3016 + $0x5c] sm:$0xf]
        %v3041 = vld [vmem:[%s3016 + $0x60] sm:$0xf]
        %v3042 = vld [vmem:[%s3016 + $0x64] sm:$0xf]
        %v3043 = vld [vmem:[%s3016 + $0x68] sm:$0xf]
        %v3044 = vld [vmem:[%s3016 + $0x6c] sm:$0xf]
        %v3045 = vld [vmem:[%s3016 + $0x70] sm:$0xf]
        %v3046 = vld [vmem:[%s3016 + $0x74] sm:$0xf]
        %v3047 = vld [vmem:[%s3016 + $0x78] sm:$0xf]
        %v3048 = vld [vmem:[%s3016 + $0x7c] sm:$0xf]
        %v3049 = vld [vmem:[%s3016 + $0x80] sm:$0xf]
        %v3050 = vld [vmem:[%s3016 + $0x84] sm:$0xf]
        %v3051 = vld [vmem:[%s3016 + $0x88] sm:$0xf]
        %v3052 = vld [vmem:[%s3016 + $0x8c] sm:$0xf]
        %v3053 = vld [vmem:[%s3016 + $0x90] sm:$0xf]
        %v3054 = vld [vmem:[%s3016 + $0x94] sm:$0xf]
        %v3055 = vld [vmem:[%s3016 + $0x98] sm:$0xf]
        %v3056 = vld [vmem:[%s3016 + $0x9c] sm:$0xf]
        %v3057 = vld [vmem:[%s3016 + $0xa0] sm:$0xf]
        %v3058 = vld [vmem:[%s3016 + $0xa4] sm:$0xf]
        %v3059 = vld [vmem:[%s3016 + $0xa8] sm:$0xf]
        %v3060 = vld [vmem:[%s3016 + $0xac] sm:$0xf]
        %v3061 = vld [vmem:[%s3016 + $0xb0] sm:$0xf]
        %v3062 = vld [vmem:[%s3016 + $0xb4] sm:$0xf]
        %v3063 = vld [vmem:[%s3016 + $0xb8] sm:$0xf]
        %v3064 = vld [vmem:[%s3016 + $0xbc] sm:$0xf]
        %v3113 = vunpack.c.l.b16 %v3017
        %v3114 = vunpack.c.l.b16 %v3018
        %v3115 = vunpack.c.l.b16 %v3019
        %v3116 = vunpack.c.l.b16 %v3020
        %v3117 = vunpack.c.l.b16 %v3021
        %v3118 = vunpack.c.l.b16 %v3022
        %v3119 = vunpack.c.l.b16 %v3023
        %v3120 = vunpack.c.l.b16 %v3024
        %v3121 = vunpack.c.l.b16 %v3025
        %v3122 = vunpack.c.l.b16 %v3026
        %v3123 = vunpack.c.l.b16 %v3027
        %v3124 = vunpack.c.l.b16 %v3028
        %v3125 = vunpack.c.l.b16 %v3029
        %v3126 = vunpack.c.l.b16 %v3030
        %v3127 = vunpack.c.l.b16 %v3031
        %v3128 = vunpack.c.l.b16 %v3032
        %v3129 = vunpack.c.l.b16 %v3033
        %v3130 = vunpack.c.l.b16 %v3034
        %v3131 = vunpack.c.l.b16 %v3035
        %v3132 = vunpack.c.l.b16 %v3036
        %v3133 = vunpack.c.l.b16 %v3037
        %v3134 = vunpack.c.l.b16 %v3038
        %v3135 = vunpack.c.l.b16 %v3039
        %v3136 = vunpack.c.l.b16 %v3040
        %v3137 = vunpack.c.l.b16 %v3041
        %v3138 = vunpack.c.l.b16 %v3042
        %v3139 = vunpack.c.l.b16 %v3043
        %v3140 = vunpack.c.l.b16 %v3044
        %v3141 = vunpack.c.l.b16 %v3045
        %v3142 = vunpack.c.l.b16 %v3046
        %v3143 = vunpack.c.l.b16 %v3047
        %v3144 = vunpack.c.l.b16 %v3048
        %v3145 = vunpack.c.l.b16 %v3049
        %v3146 = vunpack.c.l.b16 %v3050
        %v3147 = vunpack.c.l.b16 %v3051
        %v3148 = vunpack.c.l.b16 %v3052
        %v3149 = vunpack.c.l.b16 %v3053
        %v3150 = vunpack.c.l.b16 %v3054
        %v3151 = vunpack.c.l.b16 %v3055
        %v3152 = vunpack.c.l.b16 %v3056
        %v3153 = vunpack.c.l.b16 %v3057
        %v3154 = vunpack.c.l.b16 %v3058
        %v3155 = vunpack.c.l.b16 %v3059
        %v3156 = vunpack.c.l.b16 %v3060
        %v3157 = vunpack.c.l.b16 %v3061
        %v3158 = vunpack.c.l.b16 %v3062
        %v3159 = vunpack.c.l.b16 %v3063
        %v3160 = vunpack.c.l.b16 %v3064
        %v3161 = vpack.c.b16 %v3114, %v3113
        %v3162 = vpack.c.b16 %v3116, %v3115
        %v3163 = vpack.c.b16 %v3118, %v3117
        %v3164 = vpack.c.b16 %v3120, %v3119
        %v3165 = vpack.c.b16 %v3122, %v3121
        %v3166 = vpack.c.b16 %v3124, %v3123
        %v3167 = vpack.c.b16 %v3126, %v3125
        %v3168 = vpack.c.b16 %v3128, %v3127
        %v3169 = vpack.c.b16 %v3130, %v3129
        %v3170 = vpack.c.b16 %v3132, %v3131
        %v3171 = vpack.c.b16 %v3134, %v3133
        %v3172 = vpack.c.b16 %v3136, %v3135
        %v3173 = vpack.c.b16 %v3138, %v3137
        %v3174 = vpack.c.b16 %v3140, %v3139
        %v3175 = vpack.c.b16 %v3142, %v3141
        %v3176 = vpack.c.b16 %v3144, %v3143
        %v3177 = vpack.c.b16 %v3146, %v3145
        %v3178 = vpack.c.b16 %v3148, %v3147
        %v3179 = vpack.c.b16 %v3150, %v3149
        %v3180 = vpack.c.b16 %v3152, %v3151
        %v3181 = vpack.c.b16 %v3154, %v3153
        %v3182 = vpack.c.b16 %v3156, %v3155
        %v3183 = vpack.c.b16 %v3158, %v3157
        %v3184 = vpack.c.b16 %v3160, %v3159
        %3209 = vmatpush.bf16.msra.mxu0 %v3168
        %3210 = vmatpush.bf16.msra.mxu0 %v3167
        %3211 = vmatpush.bf16.msra.mxu0 %v3166
        %3212 = vmatpush.bf16.msra.mxu0 %v3165
        %3213 = vmatpush.bf16.msra.mxu0 %v3164
        %3214 = vmatpush.bf16.msra.mxu0 %v3163
        %3215 = vmatpush.bf16.msra.mxu0 %v3162
        %3216 = vmatpush.bf16.msra.mxu0 %v3161
        %3217 = vmatmul.bf16.gmra.mxu0 %v2385
        %v3218 = vpop.f32.mrf.mxu0
        %v3219 = vadd.f32 0.0, %v3218
        %v3220 = vpop.f32.mrf.mxu0
        %v3221 = vadd.f32 0.0, %v3220
        %3222 = vmatmul.bf16.gmra.mxu0 %v2386
        %v3223 = vpop.f32.mrf.mxu0
        %v3224 = vadd.f32 0.0, %v3223
        %v3225 = vpop.f32.mrf.mxu0
        %v3226 = vadd.f32 0.0, %v3225
        %3227 = vmatmul.bf16.gmra.mxu0 %v2387
        %v3228 = vpop.f32.mrf.mxu0
        %v3229 = vadd.f32 0.0, %v3228
        %v3230 = vpop.f32.mrf.mxu0
        %v3231 = vadd.f32 0.0, %v3230
        %3232 = vmatmul.bf16.gmra.mxu0 %v2388
        %v3233 = vpop.f32.mrf.mxu0
        %v3234 = vadd.f32 0.0, %v3233
        %v3235 = vpop.f32.mrf.mxu0
        %v3236 = vadd.f32 0.0, %v3235
        %3237 = vmatmul.bf16.gmra.mxu0 %v2389
        %v3238 = vpop.f32.mrf.mxu0
        %v3239 = vadd.f32 0.0, %v3238
        %v3240 = vpop.f32.mrf.mxu0
        %v3241 = vadd.f32 0.0, %v3240
        %3242 = vmatmul.bf16.gmra.mxu0 %v2390
        %v3243 = vpop.f32.mrf.mxu0
        %v3244 = vadd.f32 0.0, %v3243
        %v3245 = vpop.f32.mrf.mxu0
        %v3246 = vadd.f32 0.0, %v3245
        %3247 = vmatmul.bf16.gmra.mxu0 %v2391
        %v3248 = vpop.f32.mrf.mxu0
        %v3249 = vadd.f32 0.0, %v3248
        %v3250 = vpop.f32.mrf.mxu0
        %v3251 = vadd.f32 0.0, %v3250
        %3252 = vmatmul.bf16.gmra.mxu0 %v2392
        %v3253 = vpop.f32.mrf.mxu0
        %v3254 = vadd.f32 0.0, %v3253
        %v3255 = vpop.f32.mrf.mxu0
        %v3256 = vadd.f32 0.0, %v3255
        %3257 = vmatmul.bf16.gmra.mxu0 %v2393
        %v3258 = vpop.f32.mrf.mxu0
        %v3259 = vadd.f32 0.0, %v3258
        %v3260 = vpop.f32.mrf.mxu0
        %v3261 = vadd.f32 0.0, %v3260
        %3262 = vmatmul.bf16.gmra.mxu0 %v2394
        %v3263 = vpop.f32.mrf.mxu0
        %v3264 = vadd.f32 0.0, %v3263
        %v3265 = vpop.f32.mrf.mxu0
        %v3266 = vadd.f32 0.0, %v3265
        %3267 = vmatmul.bf16.gmra.mxu0 %v2395
        %v3268 = vpop.f32.mrf.mxu0
        %v3269 = vadd.f32 0.0, %v3268
        %v3270 = vpop.f32.mrf.mxu0
        %v3271 = vadd.f32 0.0, %v3270
        %3272 = vmatmul.bf16.gmra.mxu0 %v2396
        %v3273 = vpop.f32.mrf.mxu0
        %v3274 = vadd.f32 0.0, %v3273
        %v3275 = vpop.f32.mrf.mxu0
        %v3276 = vadd.f32 0.0, %v3275
        %3277 = vmatmul.bf16.gmra.mxu0 %v2397
        %v3278 = vpop.f32.mrf.mxu0
        %v3279 = vadd.f32 0.0, %v3278
        %v3280 = vpop.f32.mrf.mxu0
        %v3281 = vadd.f32 0.0, %v3280
        %3282 = vmatmul.bf16.gmra.mxu0 %v2398
        %v3283 = vpop.f32.mrf.mxu0
        %v3284 = vadd.f32 0.0, %v3283
        %v3285 = vpop.f32.mrf.mxu0
        %v3286 = vadd.f32 0.0, %v3285
        %3287 = vmatmul.bf16.gmra.mxu0 %v2399
        %v3288 = vpop.f32.mrf.mxu0
        %v3289 = vadd.f32 0.0, %v3288
        %v3290 = vpop.f32.mrf.mxu0
        %v3291 = vadd.f32 0.0, %v3290
        %3292 = vmatmul.bf16.gmra.mxu0 %v2400
        %v3293 = vpop.f32.mrf.mxu0
        %v3294 = vadd.f32 0.0, %v3293
        %v3295 = vpop.f32.mrf.mxu0
        %v3296 = vadd.f32 0.0, %v3295
        %3297 = vdwg.mxu0
        %3298 = vmatpush.bf16.msra.mxu0 %v3176
        %3299 = vmatpush.bf16.msra.mxu0 %v3175
        %3300 = vmatpush.bf16.msra.mxu0 %v3174
        %3301 = vmatpush.bf16.msra.mxu0 %v3173
        %3302 = vmatpush.bf16.msra.mxu0 %v3172
        %3303 = vmatpush.bf16.msra.mxu0 %v3171
        %3304 = vmatpush.bf16.msra.mxu0 %v3170
        %3305 = vmatpush.bf16.msra.mxu0 %v3169
        %3306 = vmatmul.bf16.gmra.mxu0 %v2386
        %v3307 = vpop.f32.mrf.mxu0
        %v3308 = vadd.f32 %v3219, %v3307
        %v3309 = vpop.f32.mrf.mxu0
        %v3310 = vadd.f32 %v3221, %v3309
        %3311 = vmatmul.bf16.gmra.mxu0 %v2387
        %v3312 = vpop.f32.mrf.mxu0
        %v3313 = vadd.f32 %v3224, %v3312
        %v3314 = vpop.f32.mrf.mxu0
        %v3315 = vadd.f32 %v3226, %v3314
        %3316 = vmatmul.bf16.gmra.mxu0 %v2388
        %v3317 = vpop.f32.mrf.mxu0
        %v3318 = vadd.f32 %v3229, %v3317
        %v3319 = vpop.f32.mrf.mxu0
        %v3320 = vadd.f32 %v3231, %v3319
        %3321 = vmatmul.bf16.gmra.mxu0 %v2389
        %v3322 = vpop.f32.mrf.mxu0
        %v3323 = vadd.f32 %v3234, %v3322
        %v3324 = vpop.f32.mrf.mxu0
        %v3325 = vadd.f32 %v3236, %v3324
        %3326 = vmatmul.bf16.gmra.mxu0 %v2390
        %v3327 = vpop.f32.mrf.mxu0
        %v3328 = vadd.f32 %v3239, %v3327
        %v3329 = vpop.f32.mrf.mxu0
        %v3330 = vadd.f32 %v3241, %v3329
        %3331 = vmatmul.bf16.gmra.mxu0 %v2391
        %v3332 = vpop.f32.mrf.mxu0
        %v3333 = vadd.f32 %v3244, %v3332
        %v3334 = vpop.f32.mrf.mxu0
        %v3335 = vadd.f32 %v3246, %v3334
        %3336 = vmatmul.bf16.gmra.mxu0 %v2392
        %v3337 = vpop.f32.mrf.mxu0
        %v3338 = vadd.f32 %v3249, %v3337
        %v3339 = vpop.f32.mrf.mxu0
        %v3340 = vadd.f32 %v3251, %v3339
        %3341 = vmatmul.bf16.gmra.mxu0 %v2393
        %v3342 = vpop.f32.mrf.mxu0
        %v3343 = vadd.f32 %v3254, %v3342
        %v3344 = vpop.f32.mrf.mxu0
        %v3345 = vadd.f32 %v3256, %v3344
        %3346 = vmatmul.bf16.gmra.mxu0 %v2394
        %v3347 = vpop.f32.mrf.mxu0
        %v3348 = vadd.f32 %v3259, %v3347
        %v3349 = vpop.f32.mrf.mxu0
        %v3350 = vadd.f32 %v3261, %v3349
        %3351 = vmatmul.bf16.gmra.mxu0 %v2395
        %v3352 = vpop.f32.mrf.mxu0
        %v3353 = vadd.f32 %v3264, %v3352
        %v3354 = vpop.f32.mrf.mxu0
        %v3355 = vadd.f32 %v3266, %v3354
        %3356 = vmatmul.bf16.gmra.mxu0 %v2396
        %v3357 = vpop.f32.mrf.mxu0
        %v3358 = vadd.f32 %v3269, %v3357
        %v3359 = vpop.f32.mrf.mxu0
        %v3360 = vadd.f32 %v3271, %v3359
        %3361 = vmatmul.bf16.gmra.mxu0 %v2397
        %v3362 = vpop.f32.mrf.mxu0
        %v3363 = vadd.f32 %v3274, %v3362
        %v3364 = vpop.f32.mrf.mxu0
        %v3365 = vadd.f32 %v3276, %v3364
        %3366 = vmatmul.bf16.gmra.mxu0 %v2398
        %v3367 = vpop.f32.mrf.mxu0
        %v3368 = vadd.f32 %v3279, %v3367
        %v3369 = vpop.f32.mrf.mxu0
        %v3370 = vadd.f32 %v3281, %v3369
        %3371 = vmatmul.bf16.gmra.mxu0 %v2399
        %v3372 = vpop.f32.mrf.mxu0
        %v3373 = vadd.f32 %v3284, %v3372
        %v3374 = vpop.f32.mrf.mxu0
        %v3375 = vadd.f32 %v3286, %v3374
        %3376 = vmatmul.bf16.gmra.mxu0 %v2400
        %v3377 = vpop.f32.mrf.mxu0
        %v3378 = vadd.f32 %v3289, %v3377
        %v3379 = vpop.f32.mrf.mxu0
        %v3380 = vadd.f32 %v3291, %v3379
        %3381 = vmatmul.bf16.gmra.mxu0 %v2421
        %v3382 = vpop.f32.mrf.mxu0
        %v3383 = vadd.f32 %v3294, %v3382
        %v3384 = vpop.f32.mrf.mxu0
        %v3385 = vadd.f32 %v3296, %v3384
        %3386 = vdwg.mxu0
        %3387 = vmatpush.bf16.msra.mxu0 %v3184
        %3388 = vmatpush.bf16.msra.mxu0 %v3183
        %3389 = vmatpush.bf16.msra.mxu0 %v3182
        %3390 = vmatpush.bf16.msra.mxu0 %v3181
        %3391 = vmatpush.bf16.msra.mxu0 %v3180
        %3392 = vmatpush.bf16.msra.mxu0 %v3179
        %3393 = vmatpush.bf16.msra.mxu0 %v3178
        %3394 = vmatpush.bf16.msra.mxu0 %v3177
        %3395 = vmatmul.bf16.gmra.mxu0 %v2387
        %v3396 = vpop.f32.mrf.mxu0
        %v3397 = vadd.f32 %v3308, %v3396
        %v3398 = vpop.f32.mrf.mxu0
        %v3399 = vadd.f32 %v3310, %v3398
        %3400 = vmatmul.bf16.gmra.mxu0 %v2388
        %v3401 = vpop.f32.mrf.mxu0
        %v3402 = vadd.f32 %v3313, %v3401
        %v3403 = vpop.f32.mrf.mxu0
        %v3404 = vadd.f32 %v3315, %v3403
        %3405 = vmatmul.bf16.gmra.mxu0 %v2389
        %v3406 = vpop.f32.mrf.mxu0
        %v3407 = vadd.f32 %v3318, %v3406
        %v3408 = vpop.f32.mrf.mxu0
        %v3409 = vadd.f32 %v3320, %v3408
        %3410 = vmatmul.bf16.gmra.mxu0 %v2390
        %v3411 = vpop.f32.mrf.mxu0
        %v3412 = vadd.f32 %v3323, %v3411
        %v3413 = vpop.f32.mrf.mxu0
        %v3414 = vadd.f32 %v3325, %v3413
        %3415 = vmatmul.bf16.gmra.mxu0 %v2391
        %v3416 = vpop.f32.mrf.mxu0
        %v3417 = vadd.f32 %v3328, %v3416
        %v3418 = vpop.f32.mrf.mxu0
        %v3419 = vadd.f32 %v3330, %v3418
        %3420 = vmatmul.bf16.gmra.mxu0 %v2392
        %v3421 = vpop.f32.mrf.mxu0
        %v3422 = vadd.f32 %v3333, %v3421
        %v3423 = vpop.f32.mrf.mxu0
        %v3424 = vadd.f32 %v3335, %v3423
        %3425 = vmatmul.bf16.gmra.mxu0 %v2393
        %v3426 = vpop.f32.mrf.mxu0
        %v3427 = vadd.f32 %v3338, %v3426
        %v3428 = vpop.f32.mrf.mxu0
        %v3429 = vadd.f32 %v3340, %v3428
        %3430 = vmatmul.bf16.gmra.mxu0 %v2394
        %v3431 = vpop.f32.mrf.mxu0
        %v3432 = vadd.f32 %v3343, %v3431
        %v3433 = vpop.f32.mrf.mxu0
        %v3434 = vadd.f32 %v3345, %v3433
        %3435 = vmatmul.bf16.gmra.mxu0 %v2395
        %v3436 = vpop.f32.mrf.mxu0
        %v3437 = vadd.f32 %v3348, %v3436
        %v3438 = vpop.f32.mrf.mxu0
        %v3439 = vadd.f32 %v3350, %v3438
        %3440 = vmatmul.bf16.gmra.mxu0 %v2396
        %v3441 = vpop.f32.mrf.mxu0
        %v3442 = vadd.f32 %v3353, %v3441
        %v3443 = vpop.f32.mrf.mxu0
        %v3444 = vadd.f32 %v3355, %v3443
        %3445 = vmatmul.bf16.gmra.mxu0 %v2397
        %v3446 = vpop.f32.mrf.mxu0
        %v3447 = vadd.f32 %v3358, %v3446
        %v3448 = vpop.f32.mrf.mxu0
        %v3449 = vadd.f32 %v3360, %v3448
        %3450 = vmatmul.bf16.gmra.mxu0 %v2398
        %v3451 = vpop.f32.mrf.mxu0
        %v3452 = vadd.f32 %v3363, %v3451
        %v3453 = vpop.f32.mrf.mxu0
        %v3454 = vadd.f32 %v3365, %v3453
        %3455 = vmatmul.bf16.gmra.mxu0 %v2399
        %v3456 = vpop.f32.mrf.mxu0
        %v3457 = vadd.f32 %v3368, %v3456
        %v3458 = vpop.f32.mrf.mxu0
        %v3459 = vadd.f32 %v3370, %v3458
        %3460 = vmatmul.bf16.gmra.mxu0 %v2400
        %v3461 = vpop.f32.mrf.mxu0
        %v3462 = vadd.f32 %v3373, %v3461
        %v3463 = vpop.f32.mrf.mxu0
        %v3464 = vadd.f32 %v3375, %v3463
        %3465 = vmatmul.bf16.gmra.mxu0 %v2421
        %v3466 = vpop.f32.mrf.mxu0
        %v3467 = vadd.f32 %v3378, %v3466
        %v3468 = vpop.f32.mrf.mxu0
        %v3469 = vadd.f32 %v3380, %v3468
        %3470 = vmatmul.bf16.gmra.mxu0 %v2427
        %v3471 = vpop.f32.mrf.mxu0
        %v3472 = vadd.f32 %v3383, %v3471
        %v3473 = vpop.f32.mrf.mxu0
        %v3474 = vadd.f32 %v3385, %v3473
        %3475 = vdwg.mxu0
        %v3476 = vadd.f32 %v2984, %v3397
        %v3477 = vadd.f32 %v2985, %v3399
        %v3478 = vadd.f32 %v2986, %v3402
        %v3479 = vadd.f32 %v2987, %v3404
        %v3480 = vadd.f32 %v2988, %v3407
        %v3481 = vadd.f32 %v2989, %v3409
        %v3482 = vadd.f32 %v2990, %v3412
        %v3483 = vadd.f32 %v2991, %v3414
        %v3484 = vadd.f32 %v2992, %v3417
        %v3485 = vadd.f32 %v2993, %v3419
        %v3486 = vadd.f32 %v2994, %v3422
        %v3487 = vadd.f32 %v2995, %v3424
        %v3488 = vadd.f32 %v2996, %v3427
        %v3489 = vadd.f32 %v2997, %v3429
        %v3490 = vadd.f32 %v2998, %v3432
        %v3491 = vadd.f32 %v2999, %v3434
        %v3492 = vadd.f32 %v3000, %v3437
        %v3493 = vadd.f32 %v3001, %v3439
        %v3494 = vadd.f32 %v3002, %v3442
        %v3495 = vadd.f32 %v3003, %v3444
        %v3496 = vadd.f32 %v3004, %v3447
        %v3497 = vadd.f32 %v3005, %v3449
        %v3498 = vadd.f32 %v3006, %v3452
        %v3499 = vadd.f32 %v3007, %v3454
        %v3500 = vadd.f32 %v3008, %v3457
        %v3501 = vadd.f32 %v3009, %v3459
        %v3502 = vadd.f32 %v3010, %v3462
        %v3503 = vadd.f32 %v3011, %v3464
        %v3504 = vadd.f32 %v3012, %v3467
        %v3505 = vadd.f32 %v3013, %v3469
        %v3506 = vadd.f32 %v3014, %v3472
        %v3507 = vadd.f32 %v3015, %v3474
        %s3508 = scalar_lea.vmem [#allocation8], 384
        %v3509 = vld [vmem:[%s3508] sm:$0xf]
        %v3510 = vld [vmem:[%s3508 + $0x4] sm:$0xf]
        %v3511 = vld [vmem:[%s3508 + $0x8] sm:$0xf]
        %v3512 = vld [vmem:[%s3508 + $0xc] sm:$0xf]
        %v3513 = vld [vmem:[%s3508 + $0x10] sm:$0xf]
        %v3514 = vld [vmem:[%s3508 + $0x14] sm:$0xf]
        %v3515 = vld [vmem:[%s3508 + $0x18] sm:$0xf]
        %v3516 = vld [vmem:[%s3508 + $0x1c] sm:$0xf]
        %v3517 = vld [vmem:[%s3508 + $0x20] sm:$0xf]
        %v3518 = vld [vmem:[%s3508 + $0x24] sm:$0xf]
        %v3519 = vld [vmem:[%s3508 + $0x28] sm:$0xf]
        %v3520 = vld [vmem:[%s3508 + $0x2c] sm:$0xf]
        %v3521 = vld [vmem:[%s3508 + $0x30] sm:$0xf]
        %v3522 = vld [vmem:[%s3508 + $0x34] sm:$0xf]
        %v3523 = vld [vmem:[%s3508 + $0x38] sm:$0xf]
        %v3524 = vld [vmem:[%s3508 + $0x3c] sm:$0xf]
        %v3525 = vld [vmem:[%s3508 + $0x40] sm:$0xf]
        %v3526 = vld [vmem:[%s3508 + $0x44] sm:$0xf]
        %v3527 = vld [vmem:[%s3508 + $0x48] sm:$0xf]
        %v3528 = vld [vmem:[%s3508 + $0x4c] sm:$0xf]
        %v3529 = vld [vmem:[%s3508 + $0x50] sm:$0xf]
        %v3530 = vld [vmem:[%s3508 + $0x54] sm:$0xf]
        %v3531 = vld [vmem:[%s3508 + $0x58] sm:$0xf]
        %v3532 = vld [vmem:[%s3508 + $0x5c] sm:$0xf]
        %v3533 = vld [vmem:[%s3508 + $0x60] sm:$0xf]
        %v3534 = vld [vmem:[%s3508 + $0x64] sm:$0xf]
        %v3535 = vld [vmem:[%s3508 + $0x68] sm:$0xf]
        %v3536 = vld [vmem:[%s3508 + $0x6c] sm:$0xf]
        %v3537 = vld [vmem:[%s3508 + $0x70] sm:$0xf]
        %v3538 = vld [vmem:[%s3508 + $0x74] sm:$0xf]
        %v3539 = vld [vmem:[%s3508 + $0x78] sm:$0xf]
        %v3540 = vld [vmem:[%s3508 + $0x7c] sm:$0xf]
        %v3541 = vld [vmem:[%s3508 + $0x80] sm:$0xf]
        %v3542 = vld [vmem:[%s3508 + $0x84] sm:$0xf]
        %v3543 = vld [vmem:[%s3508 + $0x88] sm:$0xf]
        %v3544 = vld [vmem:[%s3508 + $0x8c] sm:$0xf]
        %v3545 = vld [vmem:[%s3508 + $0x90] sm:$0xf]
        %v3546 = vld [vmem:[%s3508 + $0x94] sm:$0xf]
        %v3547 = vld [vmem:[%s3508 + $0x98] sm:$0xf]
        %v3548 = vld [vmem:[%s3508 + $0x9c] sm:$0xf]
        %v3549 = vld [vmem:[%s3508 + $0xa0] sm:$0xf]
        %v3550 = vld [vmem:[%s3508 + $0xa4] sm:$0xf]
        %v3551 = vld [vmem:[%s3508 + $0xa8] sm:$0xf]
        %v3552 = vld [vmem:[%s3508 + $0xac] sm:$0xf]
        %v3553 = vld [vmem:[%s3508 + $0xb0] sm:$0xf]
        %v3554 = vld [vmem:[%s3508 + $0xb4] sm:$0xf]
        %v3555 = vld [vmem:[%s3508 + $0xb8] sm:$0xf]
        %v3556 = vld [vmem:[%s3508 + $0xbc] sm:$0xf]
        %v3605 = vunpack.c.l.b16 %v3509
        %v3606 = vunpack.c.l.b16 %v3510
        %v3607 = vunpack.c.l.b16 %v3511
        %v3608 = vunpack.c.l.b16 %v3512
        %v3609 = vunpack.c.l.b16 %v3513
        %v3610 = vunpack.c.l.b16 %v3514
        %v3611 = vunpack.c.l.b16 %v3515
        %v3612 = vunpack.c.l.b16 %v3516
        %v3613 = vunpack.c.l.b16 %v3517
        %v3614 = vunpack.c.l.b16 %v3518
        %v3615 = vunpack.c.l.b16 %v3519
        %v3616 = vunpack.c.l.b16 %v3520
        %v3617 = vunpack.c.l.b16 %v3521
        %v3618 = vunpack.c.l.b16 %v3522
        %v3619 = vunpack.c.l.b16 %v3523
        %v3620 = vunpack.c.l.b16 %v3524
        %v3621 = vunpack.c.l.b16 %v3525
        %v3622 = vunpack.c.l.b16 %v3526
        %v3623 = vunpack.c.l.b16 %v3527
        %v3624 = vunpack.c.l.b16 %v3528
        %v3625 = vunpack.c.l.b16 %v3529
        %v3626 = vunpack.c.l.b16 %v3530
        %v3627 = vunpack.c.l.b16 %v3531
        %v3628 = vunpack.c.l.b16 %v3532
        %v3629 = vunpack.c.l.b16 %v3533
        %v3630 = vunpack.c.l.b16 %v3534
        %v3631 = vunpack.c.l.b16 %v3535
        %v3632 = vunpack.c.l.b16 %v3536
        %v3633 = vunpack.c.l.b16 %v3537
        %v3634 = vunpack.c.l.b16 %v3538
        %v3635 = vunpack.c.l.b16 %v3539
        %v3636 = vunpack.c.l.b16 %v3540
        %v3637 = vunpack.c.l.b16 %v3541
        %v3638 = vunpack.c.l.b16 %v3542
        %v3639 = vunpack.c.l.b16 %v3543
        %v3640 = vunpack.c.l.b16 %v3544
        %v3641 = vunpack.c.l.b16 %v3545
        %v3642 = vunpack.c.l.b16 %v3546
        %v3643 = vunpack.c.l.b16 %v3547
        %v3644 = vunpack.c.l.b16 %v3548
        %v3645 = vunpack.c.l.b16 %v3549
        %v3646 = vunpack.c.l.b16 %v3550
        %v3647 = vunpack.c.l.b16 %v3551
        %v3648 = vunpack.c.l.b16 %v3552
        %v3649 = vunpack.c.l.b16 %v3553
        %v3650 = vunpack.c.l.b16 %v3554
        %v3651 = vunpack.c.l.b16 %v3555
        %v3652 = vunpack.c.l.b16 %v3556
        %v3653 = vpack.c.b16 %v3606, %v3605
        %v3654 = vpack.c.b16 %v3608, %v3607
        %v3655 = vpack.c.b16 %v3610, %v3609
        %v3656 = vpack.c.b16 %v3612, %v3611
        %v3657 = vpack.c.b16 %v3614, %v3613
        %v3658 = vpack.c.b16 %v3616, %v3615
        %v3659 = vpack.c.b16 %v3618, %v3617
        %v3660 = vpack.c.b16 %v3620, %v3619
        %v3661 = vpack.c.b16 %v3622, %v3621
        %v3662 = vpack.c.b16 %v3624, %v3623
        %v3663 = vpack.c.b16 %v3626, %v3625
        %v3664 = vpack.c.b16 %v3628, %v3627
        %v3665 = vpack.c.b16 %v3630, %v3629
        %v3666 = vpack.c.b16 %v3632, %v3631
        %v3667 = vpack.c.b16 %v3634, %v3633
        %v3668 = vpack.c.b16 %v3636, %v3635
        %v3669 = vpack.c.b16 %v3638, %v3637
        %v3670 = vpack.c.b16 %v3640, %v3639
        %v3671 = vpack.c.b16 %v3642, %v3641
        %v3672 = vpack.c.b16 %v3644, %v3643
        %v3673 = vpack.c.b16 %v3646, %v3645
        %v3674 = vpack.c.b16 %v3648, %v3647
        %v3675 = vpack.c.b16 %v3650, %v3649
        %v3676 = vpack.c.b16 %v3652, %v3651
        %3701 = vmatpush.bf16.msra.mxu0 %v3660
        %3702 = vmatpush.bf16.msra.mxu0 %v3659
        %3703 = vmatpush.bf16.msra.mxu0 %v3658
        %3704 = vmatpush.bf16.msra.mxu0 %v3657
        %3705 = vmatpush.bf16.msra.mxu0 %v3656
        %3706 = vmatpush.bf16.msra.mxu0 %v3655
        %3707 = vmatpush.bf16.msra.mxu0 %v3654
        %3708 = vmatpush.bf16.msra.mxu0 %v3653
        %3709 = vmatmul.bf16.gmra.mxu0 %v2385
        %v3710 = vpop.f32.mrf.mxu0
        %v3711 = vadd.f32 0.0, %v3710
        %v3712 = vpop.f32.mrf.mxu0
        %v3713 = vadd.f32 0.0, %v3712
        %3714 = vmatmul.bf16.gmra.mxu0 %v2386
        %v3715 = vpop.f32.mrf.mxu0
        %v3716 = vadd.f32 0.0, %v3715
        %v3717 = vpop.f32.mrf.mxu0
        %v3718 = vadd.f32 0.0, %v3717
        %3719 = vmatmul.bf16.gmra.mxu0 %v2387
        %v3720 = vpop.f32.mrf.mxu0
        %v3721 = vadd.f32 0.0, %v3720
        %v3722 = vpop.f32.mrf.mxu0
        %v3723 = vadd.f32 0.0, %v3722
        %3724 = vmatmul.bf16.gmra.mxu0 %v2388
        %v3725 = vpop.f32.mrf.mxu0
        %v3726 = vadd.f32 0.0, %v3725
        %v3727 = vpop.f32.mrf.mxu0
        %v3728 = vadd.f32 0.0, %v3727
        %3729 = vmatmul.bf16.gmra.mxu0 %v2389
        %v3730 = vpop.f32.mrf.mxu0
        %v3731 = vadd.f32 0.0, %v3730
        %v3732 = vpop.f32.mrf.mxu0
        %v3733 = vadd.f32 0.0, %v3732
        %3734 = vmatmul.bf16.gmra.mxu0 %v2390
        %v3735 = vpop.f32.mrf.mxu0
        %v3736 = vadd.f32 0.0, %v3735
        %v3737 = vpop.f32.mrf.mxu0
        %v3738 = vadd.f32 0.0, %v3737
        %3739 = vmatmul.bf16.gmra.mxu0 %v2391
        %v3740 = vpop.f32.mrf.mxu0
        %v3741 = vadd.f32 0.0, %v3740
        %v3742 = vpop.f32.mrf.mxu0
        %v3743 = vadd.f32 0.0, %v3742
        %3744 = vmatmul.bf16.gmra.mxu0 %v2392
        %v3745 = vpop.f32.mrf.mxu0
        %v3746 = vadd.f32 0.0, %v3745
        %v3747 = vpop.f32.mrf.mxu0
        %v3748 = vadd.f32 0.0, %v3747
        %3749 = vmatmul.bf16.gmra.mxu0 %v2393
        %v3750 = vpop.f32.mrf.mxu0
        %v3751 = vadd.f32 0.0, %v3750
        %v3752 = vpop.f32.mrf.mxu0
        %v3753 = vadd.f32 0.0, %v3752
        %3754 = vmatmul.bf16.gmra.mxu0 %v2394
        %v3755 = vpop.f32.mrf.mxu0
        %v3756 = vadd.f32 0.0, %v3755
        %v3757 = vpop.f32.mrf.mxu0
        %v3758 = vadd.f32 0.0, %v3757
        %3759 = vmatmul.bf16.gmra.mxu0 %v2395
        %v3760 = vpop.f32.mrf.mxu0
        %v3761 = vadd.f32 0.0, %v3760
        %v3762 = vpop.f32.mrf.mxu0
        %v3763 = vadd.f32 0.0, %v3762
        %3764 = vmatmul.bf16.gmra.mxu0 %v2396
        %v3765 = vpop.f32.mrf.mxu0
        %v3766 = vadd.f32 0.0, %v3765
        %v3767 = vpop.f32.mrf.mxu0
        %v3768 = vadd.f32 0.0, %v3767
        %3769 = vmatmul.bf16.gmra.mxu0 %v2397
        %v3770 = vpop.f32.mrf.mxu0
        %v3771 = vadd.f32 0.0, %v3770
        %v3772 = vpop.f32.mrf.mxu0
        %v3773 = vadd.f32 0.0, %v3772
        %3774 = vmatmul.bf16.gmra.mxu0 %v2398
        %v3775 = vpop.f32.mrf.mxu0
        %v3776 = vadd.f32 0.0, %v3775
        %v3777 = vpop.f32.mrf.mxu0
        %v3778 = vadd.f32 0.0, %v3777
        %3779 = vmatmul.bf16.gmra.mxu0 %v2399
        %v3780 = vpop.f32.mrf.mxu0
        %v3781 = vadd.f32 0.0, %v3780
        %v3782 = vpop.f32.mrf.mxu0
        %v3783 = vadd.f32 0.0, %v3782
        %3784 = vmatmul.bf16.gmra.mxu0 %v2400
        %v3785 = vpop.f32.mrf.mxu0
        %v3786 = vadd.f32 0.0, %v3785
        %v3787 = vpop.f32.mrf.mxu0
        %v3788 = vadd.f32 0.0, %v3787
        %3789 = vdwg.mxu0
        %3790 = vmatpush.bf16.msra.mxu0 %v3668
        %3791 = vmatpush.bf16.msra.mxu0 %v3667
        %3792 = vmatpush.bf16.msra.mxu0 %v3666
        %3793 = vmatpush.bf16.msra.mxu0 %v3665
        %3794 = vmatpush.bf16.msra.mxu0 %v3664
        %3795 = vmatpush.bf16.msra.mxu0 %v3663
        %3796 = vmatpush.bf16.msra.mxu0 %v3662
        %3797 = vmatpush.bf16.msra.mxu0 %v3661
        %3798 = vmatmul.bf16.gmra.mxu0 %v2386
        %v3799 = vpop.f32.mrf.mxu0
        %v3800 = vadd.f32 %v3711, %v3799
        %v3801 = vpop.f32.mrf.mxu0
        %v3802 = vadd.f32 %v3713, %v3801
        %3803 = vmatmul.bf16.gmra.mxu0 %v2387
        %v3804 = vpop.f32.mrf.mxu0
        %v3805 = vadd.f32 %v3716, %v3804
        %v3806 = vpop.f32.mrf.mxu0
        %v3807 = vadd.f32 %v3718, %v3806
        %3808 = vmatmul.bf16.gmra.mxu0 %v2388
        %v3809 = vpop.f32.mrf.mxu0
        %v3810 = vadd.f32 %v3721, %v3809
        %v3811 = vpop.f32.mrf.mxu0
        %v3812 = vadd.f32 %v3723, %v3811
        %3813 = vmatmul.bf16.gmra.mxu0 %v2389
        %v3814 = vpop.f32.mrf.mxu0
        %v3815 = vadd.f32 %v3726, %v3814
        %v3816 = vpop.f32.mrf.mxu0
        %v3817 = vadd.f32 %v3728, %v3816
        %3818 = vmatmul.bf16.gmra.mxu0 %v2390
        %v3819 = vpop.f32.mrf.mxu0
        %v3820 = vadd.f32 %v3731, %v3819
        %v3821 = vpop.f32.mrf.mxu0
        %v3822 = vadd.f32 %v3733, %v3821
        %3823 = vmatmul.bf16.gmra.mxu0 %v2391
        %v3824 = vpop.f32.mrf.mxu0
        %v3825 = vadd.f32 %v3736, %v3824
        %v3826 = vpop.f32.mrf.mxu0
        %v3827 = vadd.f32 %v3738, %v3826
        %3828 = vmatmul.bf16.gmra.mxu0 %v2392
        %v3829 = vpop.f32.mrf.mxu0
        %v3830 = vadd.f32 %v3741, %v3829
        %v3831 = vpop.f32.mrf.mxu0
        %v3832 = vadd.f32 %v3743, %v3831
        %3833 = vmatmul.bf16.gmra.mxu0 %v2393
        %v3834 = vpop.f32.mrf.mxu0
        %v3835 = vadd.f32 %v3746, %v3834
        %v3836 = vpop.f32.mrf.mxu0
        %v3837 = vadd.f32 %v3748, %v3836
        %3838 = vmatmul.bf16.gmra.mxu0 %v2394
        %v3839 = vpop.f32.mrf.mxu0
        %v3840 = vadd.f32 %v3751, %v3839
        %v3841 = vpop.f32.mrf.mxu0
        %v3842 = vadd.f32 %v3753, %v3841
        %3843 = vmatmul.bf16.gmra.mxu0 %v2395
        %v3844 = vpop.f32.mrf.mxu0
        %v3845 = vadd.f32 %v3756, %v3844
        %v3846 = vpop.f32.mrf.mxu0
        %v3847 = vadd.f32 %v3758, %v3846
        %3848 = vmatmul.bf16.gmra.mxu0 %v2396
        %v3849 = vpop.f32.mrf.mxu0
        %v3850 = vadd.f32 %v3761, %v3849
        %v3851 = vpop.f32.mrf.mxu0
        %v3852 = vadd.f32 %v3763, %v3851
        %3853 = vmatmul.bf16.gmra.mxu0 %v2397
        %v3854 = vpop.f32.mrf.mxu0
        %v3855 = vadd.f32 %v3766, %v3854
        %v3856 = vpop.f32.mrf.mxu0
        %v3857 = vadd.f32 %v3768, %v3856
        %3858 = vmatmul.bf16.gmra.mxu0 %v2398
        %v3859 = vpop.f32.mrf.mxu0
        %v3860 = vadd.f32 %v3771, %v3859
        %v3861 = vpop.f32.mrf.mxu0
        %v3862 = vadd.f32 %v3773, %v3861
        %3863 = vmatmul.bf16.gmra.mxu0 %v2399
        %v3864 = vpop.f32.mrf.mxu0
        %v3865 = vadd.f32 %v3776, %v3864
        %v3866 = vpop.f32.mrf.mxu0
        %v3867 = vadd.f32 %v3778, %v3866
        %3868 = vmatmul.bf16.gmra.mxu0 %v2400
        %v3869 = vpop.f32.mrf.mxu0
        %v3870 = vadd.f32 %v3781, %v3869
        %v3871 = vpop.f32.mrf.mxu0
        %v3872 = vadd.f32 %v3783, %v3871
        %3873 = vmatmul.bf16.gmra.mxu0 %v2421
        %v3874 = vpop.f32.mrf.mxu0
        %v3875 = vadd.f32 %v3786, %v3874
        %v3876 = vpop.f32.mrf.mxu0
        %v3877 = vadd.f32 %v3788, %v3876
        %3878 = vdwg.mxu0
        %3879 = vmatpush.bf16.msra.mxu0 %v3676
        %3880 = vmatpush.bf16.msra.mxu0 %v3675
        %3881 = vmatpush.bf16.msra.mxu0 %v3674
        %3882 = vmatpush.bf16.msra.mxu0 %v3673
        %3883 = vmatpush.bf16.msra.mxu0 %v3672
        %3884 = vmatpush.bf16.msra.mxu0 %v3671
        %3885 = vmatpush.bf16.msra.mxu0 %v3670
        %3886 = vmatpush.bf16.msra.mxu0 %v3669
        %3887 = vmatmul.bf16.gmra.mxu0 %v2387
        %v3888 = vpop.f32.mrf.mxu0
        %v3889 = vadd.f32 %v3800, %v3888
        %v3890 = vpop.f32.mrf.mxu0
        %v3891 = vadd.f32 %v3802, %v3890
        %3892 = vmatmul.bf16.gmra.mxu0 %v2388
        %v3893 = vpop.f32.mrf.mxu0
        %v3894 = vadd.f32 %v3805, %v3893
        %v3895 = vpop.f32.mrf.mxu0
        %v3896 = vadd.f32 %v3807, %v3895
        %3897 = vmatmul.bf16.gmra.mxu0 %v2389
        %v3898 = vpop.f32.mrf.mxu0
        %v3899 = vadd.f32 %v3810, %v3898
        %v3900 = vpop.f32.mrf.mxu0
        %v3901 = vadd.f32 %v3812, %v3900
        %3902 = vmatmul.bf16.gmra.mxu0 %v2390
        %v3903 = vpop.f32.mrf.mxu0
        %v3904 = vadd.f32 %v3815, %v3903
        %v3905 = vpop.f32.mrf.mxu0
        %v3906 = vadd.f32 %v3817, %v3905
        %3907 = vmatmul.bf16.gmra.mxu0 %v2391
        %v3908 = vpop.f32.mrf.mxu0
        %v3909 = vadd.f32 %v3820, %v3908
        %v3910 = vpop.f32.mrf.mxu0
        %v3911 = vadd.f32 %v3822, %v3910
        %3912 = vmatmul.bf16.gmra.mxu0 %v2392
        %v3913 = vpop.f32.mrf.mxu0
        %v3914 = vadd.f32 %v3825, %v3913
        %v3915 = vpop.f32.mrf.mxu0
        %v3916 = vadd.f32 %v3827, %v3915
        %3917 = vmatmul.bf16.gmra.mxu0 %v2393
        %v3918 = vpop.f32.mrf.mxu0
        %v3919 = vadd.f32 %v3830, %v3918
        %v3920 = vpop.f32.mrf.mxu0
        %v3921 = vadd.f32 %v3832, %v3920
        %3922 = vmatmul.bf16.gmra.mxu0 %v2394
        %v3923 = vpop.f32.mrf.mxu0
        %v3924 = vadd.f32 %v3835, %v3923
        %v3925 = vpop.f32.mrf.mxu0
        %v3926 = vadd.f32 %v3837, %v3925
        %3927 = vmatmul.bf16.gmra.mxu0 %v2395
        %v3928 = vpop.f32.mrf.mxu0
        %v3929 = vadd.f32 %v3840, %v3928
        %v3930 = vpop.f32.mrf.mxu0
        %v3931 = vadd.f32 %v3842, %v3930
        %3932 = vmatmul.bf16.gmra.mxu0 %v2396
        %v3933 = vpop.f32.mrf.mxu0
        %v3934 = vadd.f32 %v3845, %v3933
        %v3935 = vpop.f32.mrf.mxu0
        %v3936 = vadd.f32 %v3847, %v3935
        %3937 = vmatmul.bf16.gmra.mxu0 %v2397
        %v3938 = vpop.f32.mrf.mxu0
        %v3939 = vadd.f32 %v3850, %v3938
        %v3940 = vpop.f32.mrf.mxu0
        %v3941 = vadd.f32 %v3852, %v3940
        %3942 = vmatmul.bf16.gmra.mxu0 %v2398
        %v3943 = vpop.f32.mrf.mxu0
        %v3944 = vadd.f32 %v3855, %v3943
        %v3945 = vpop.f32.mrf.mxu0
        %v3946 = vadd.f32 %v3857, %v3945
        %3947 = vmatmul.bf16.gmra.mxu0 %v2399
        %v3948 = vpop.f32.mrf.mxu0
        %v3949 = vadd.f32 %v3860, %v3948
        %v3950 = vpop.f32.mrf.mxu0
        %v3951 = vadd.f32 %v3862, %v3950
        %3952 = vmatmul.bf16.gmra.mxu0 %v2400
        %v3953 = vpop.f32.mrf.mxu0
        %v3954 = vadd.f32 %v3865, %v3953
        %v3955 = vpop.f32.mrf.mxu0
        %v3956 = vadd.f32 %v3867, %v3955
        %3957 = vmatmul.bf16.gmra.mxu0 %v2421
        %v3958 = vpop.f32.mrf.mxu0
        %v3959 = vadd.f32 %v3870, %v3958
        %v3960 = vpop.f32.mrf.mxu0
        %v3961 = vadd.f32 %v3872, %v3960
        %3962 = vmatmul.bf16.gmra.mxu0 %v2427
        %v3963 = vpop.f32.mrf.mxu0
        %v3964 = vadd.f32 %v3875, %v3963
        %v3965 = vpop.f32.mrf.mxu0
        %v3966 = vadd.f32 %v3877, %v3965
        %3967 = vdwg.mxu0
        %v3968 = vrot.slane %v3889, 1
        %v3969 = vrot.slane %v3894, 1
        %v3970 = vrot.slane %v3899, 1
        %v3971 = vrot.slane %v3904, 1
        %v3972 = vrot.slane %v3909, 1
        %v3973 = vrot.slane %v3914, 1
        %v3974 = vrot.slane %v3919, 1
        %v3975 = vrot.slane %v3924, 1
        %v3976 = vrot.slane %v3929, 1
        %v3977 = vrot.slane %v3934, 1
        %v3978 = vrot.slane %v3939, 1
        %v3979 = vrot.slane %v3944, 1
        %v3980 = vrot.slane %v3949, 1
        %v3981 = vrot.slane %v3954, 1
        %v3982 = vrot.slane %v3959, 1
        %v3983 = vrot.slane %v3964, 1
        %v3984 = vrot.slane %v3891, 1
        %v3985 = vrot.slane %v3896, 1
        %v3986 = vrot.slane %v3901, 1
        %v3987 = vrot.slane %v3906, 1
        %v3988 = vrot.slane %v3911, 1
        %v3989 = vrot.slane %v3916, 1
        %v3990 = vrot.slane %v3921, 1
        %v3991 = vrot.slane %v3926, 1
        %v3992 = vrot.slane %v3931, 1
        %v3993 = vrot.slane %v3936, 1
        %v3994 = vrot.slane %v3941, 1
        %v3995 = vrot.slane %v3946, 1
        %v3996 = vrot.slane %v3951, 1
        %v3997 = vrot.slane %v3956, 1
        %v3998 = vrot.slane %v3961, 1
        %v3999 = vrot.slane %v3966, 1
        %v4000 = vsel %vm2046, %v3968, %v3984
        %v4001 = vsel %vm2046, %v3969, %v3985
        %v4002 = vsel %vm2046, %v3970, %v3986
        %v4003 = vsel %vm2046, %v3971, %v3987
        %v4004 = vsel %vm2046, %v3972, %v3988
        %v4005 = vsel %vm2046, %v3973, %v3989
        %v4006 = vsel %vm2046, %v3974, %v3990
        %v4007 = vsel %vm2046, %v3975, %v3991
        %v4008 = vsel %vm2046, %v3976, %v3992
        %v4009 = vsel %vm2046, %v3977, %v3993
        %v4010 = vsel %vm2046, %v3978, %v3994
        %v4011 = vsel %vm2046, %v3979, %v3995
        %v4012 = vsel %vm2046, %v3980, %v3996
        %v4013 = vsel %vm2046, %v3981, %v3997
        %v4014 = vsel %vm2046, %v3982, %v3998
        %v4015 = vsel %vm2046, %v3983, %v3999
        %v4016 = vsel %vm2046, %v3984, %v3968
        %v4017 = vsel %vm2046, %v3985, %v3969
        %v4018 = vsel %vm2046, %v3986, %v3970
        %v4019 = vsel %vm2046, %v3987, %v3971
        %v4020 = vsel %vm2046, %v3988, %v3972
        %v4021 = vsel %vm2046, %v3989, %v3973
        %v4022 = vsel %vm2046, %v3990, %v3974
        %v4023 = vsel %vm2046, %v3991, %v3975
        %v4024 = vsel %vm2046, %v3992, %v3976
        %v4025 = vsel %vm2046, %v3993, %v3977
        %v4026 = vsel %vm2046, %v3994, %v3978
        %v4027 = vsel %vm2046, %v3995, %v3979
        %v4028 = vsel %vm2046, %v3996, %v3980
        %v4029 = vsel %vm2046, %v3997, %v3981
        %v4030 = vsel %vm2046, %v3998, %v3982
        %v4031 = vsel %vm2046, %v3999, %v3983
        %v4032 = vsel %vm2081, 0.0, %v4000
        %v4033 = vsel %vm2082, 0.0, %v4016
        %v4034 = vsel %vm2081, 0.0, %v4001
        %v4035 = vsel %vm2082, 0.0, %v4017
        %v4036 = vsel %vm2081, 0.0, %v4002
        %v4037 = vsel %vm2082, 0.0, %v4018
        %v4038 = vsel %vm2081, 0.0, %v4003
        %v4039 = vsel %vm2082, 0.0, %v4019
        %v4040 = vsel %vm2081, 0.0, %v4004
        %v4041 = vsel %vm2082, 0.0, %v4020
        %v4042 = vsel %vm2081, 0.0, %v4005
        %v4043 = vsel %vm2082, 0.0, %v4021
        %v4044 = vsel %vm2081, 0.0, %v4006
        %v4045 = vsel %vm2082, 0.0, %v4022
        %v4046 = vsel %vm2081, 0.0, %v4007
        %v4047 = vsel %vm2082, 0.0, %v4023
        %v4048 = vsel %vm2081, 0.0, %v4008
        %v4049 = vsel %vm2082, 0.0, %v4024
        %v4050 = vsel %vm2081, 0.0, %v4009
        %v4051 = vsel %vm2082, 0.0, %v4025
        %v4052 = vsel %vm2081, 0.0, %v4010
        %v4053 = vsel %vm2082, 0.0, %v4026
        %v4054 = vsel %vm2081, 0.0, %v4011
        %v4055 = vsel %vm2082, 0.0, %v4027
        %v4056 = vsel %vm2081, 0.0, %v4012
        %v4057 = vsel %vm2082, 0.0, %v4028
        %v4058 = vsel %vm2081, 0.0, %v4013
        %v4059 = vsel %vm2082, 0.0, %v4029
        %v4060 = vsel %vm2081, 0.0, %v4014
        %v4061 = vsel %vm2082, 0.0, %v4030
        %v4062 = vsel %vm2081, 0.0, %v4015
        %v4063 = vsel %vm2082, 0.0, %v4031
        %v4064 = vadd.f32 %v3476, %v4032
        %v4065 = vadd.f32 %v3477, %v4033
        %v4066 = vadd.f32 %v3478, %v4034
        %v4067 = vadd.f32 %v3479, %v4035
        %v4068 = vadd.f32 %v3480, %v4036
        %v4069 = vadd.f32 %v3481, %v4037
        %v4070 = vadd.f32 %v3482, %v4038
        %v4071 = vadd.f32 %v3483, %v4039
        %v4072 = vadd.f32 %v3484, %v4040
        %v4073 = vadd.f32 %v3485, %v4041
        %v4074 = vadd.f32 %v3486, %v4042
        %v4075 = vadd.f32 %v3487, %v4043
        %v4076 = vadd.f32 %v3488, %v4044
        %v4077 = vadd.f32 %v3489, %v4045
        %v4078 = vadd.f32 %v3490, %v4046
        %v4079 = vadd.f32 %v3491, %v4047
        %v4080 = vadd.f32 %v3492, %v4048
        %v4081 = vadd.f32 %v3493, %v4049
        %v4082 = vadd.f32 %v3494, %v4050
        %v4083 = vadd.f32 %v3495, %v4051
        %v4084 = vadd.f32 %v3496, %v4052
        %v4085 = vadd.f32 %v3497, %v4053
        %v4086 = vadd.f32 %v3498, %v4054
        %v4087 = vadd.f32 %v3499, %v4055
        %v4088 = vadd.f32 %v3500, %v4056
        %v4089 = vadd.f32 %v3501, %v4057
        %v4090 = vadd.f32 %v3502, %v4058
        %v4091 = vadd.f32 %v3503, %v4059
        %v4092 = vadd.f32 %v3504, %v4060
        %v4093 = vadd.f32 %v3505, %v4061
        %v4094 = vadd.f32 %v3506, %v4062
        %v4095 = vadd.f32 %v3507, %v4063
        %4096 = vst [vmem:[%s277] sm:$0xff] %v4064
        %4097 = vst [vmem:[%s277 + $0x8] sm:$0xff] %v4065
        %4098 = vst [vmem:[%s277 + $0x10] sm:$0xff] %v4066
        %4099 = vst [vmem:[%s277 + $0x18] sm:$0xff] %v4067
        %4100 = vst [vmem:[%s277 + $0x20] sm:$0xff] %v4068
        %4101 = vst [vmem:[%s277 + $0x28] sm:$0xff] %v4069
        %4102 = vst [vmem:[%s277 + $0x30] sm:$0xff] %v4070
        %4103 = vst [vmem:[%s277 + $0x38] sm:$0xff] %v4071
        %4104 = vst [vmem:[%s277 + $0x40] sm:$0xff] %v4072
        %4105 = vst [vmem:[%s277 + $0x48] sm:$0xff] %v4073
        %4106 = vst [vmem:[%s277 + $0x50] sm:$0xff] %v4074
        %4107 = vst [vmem:[%s277 + $0x58] sm:$0xff] %v4075
        %4108 = vst [vmem:[%s277 + $0x60] sm:$0xff] %v4076
        %4109 = vst [vmem:[%s277 + $0x68] sm:$0xff] %v4077
        %4110 = vst [vmem:[%s277 + $0x70] sm:$0xff] %v4078
        %4111 = vst [vmem:[%s277 + $0x78] sm:$0xff] %v4079
        %4112 = vst [vmem:[%s277 + $0x80] sm:$0xff] %v4080
        %4113 = vst [vmem:[%s277 + $0x88] sm:$0xff] %v4081
        %4114 = vst [vmem:[%s277 + $0x90] sm:$0xff] %v4082
        %4115 = vst [vmem:[%s277 + $0x98] sm:$0xff] %v4083
        %4116 = vst [vmem:[%s277 + $0xa0] sm:$0xff] %v4084
        %4117 = vst [vmem:[%s277 + $0xa8] sm:$0xff] %v4085
        %4118 = vst [vmem:[%s277 + $0xb0] sm:$0xff] %v4086
        %4119 = vst [vmem:[%s277 + $0xb8] sm:$0xff] %v4087
        %4120 = vst [vmem:[%s277 + $0xc0] sm:$0xff] %v4088
        %4121 = vst [vmem:[%s277 + $0xc8] sm:$0xff] %v4089
        %4122 = vst [vmem:[%s277 + $0xd0] sm:$0xff] %v4090
        %4123 = vst [vmem:[%s277 + $0xd8] sm:$0xff] %v4091
        %4124 = vst [vmem:[%s277 + $0xe0] sm:$0xff] %v4092
        %4125 = vst [vmem:[%s277 + $0xe8] sm:$0xff] %v4093
        %4126 = vst [vmem:[%s277 + $0xf0] sm:$0xff] %v4094
        %4127 = vst [vmem:[%s277 + $0xf8] sm:$0xff] %v4095
        %s4128 = sand.u32 %s141, 1
        %s4129 = scalar_lea.sflag [#allocation5], %s4128
        %s4130 = sand.u32 %s141, 1
        %s4131 = smul.addr %s4130, 256
        %s4132 = scalar_lea.vmem [#allocation9], %s4131
        // Predicated region
        $region53: #{tpu_custom_call.1} parent=39 // pred_check
          %p4133 = pneg %p151
        $region54: #{tpu_custom_call.1} parent=39 // pred_check_branch
          %4135 = sbr.rel (%p4133) target = $region56
        $region55: #{tpu_custom_call.1} parent=39 // pred_region
          %4137 = vsyncadd %s4129, 0
          %s4138 = smul.addr %s23, 32
          %s4139 = smul.addr %s4138, 8
          %s4140 = scalar_lea.hbm %s5, %s4139
          %s4141 = sshll.u32 %s4132, 4
          %s4142 = int_to_ptr.vmem [resolvable:$true] %s4141
          %s4143 = sshll.u32 %s4140, 4
          %s4144 = int_to_ptr.hbm [resolvable:$true] %s4143
          %4149 = dma.vmem_to_hbm [thread:$0]  %s4142, 4096, %s4144, %s4129, 128, 128, 8
        $region56: #{tpu_custom_call.1} parent=39 // pred_fallthru
          _
      $region40: #{tpu_custom_call.1} parent=5 // pred_fallthru
        _
      %p4150 = scmp.le.s32.totalorder 2, %s18
      // Predicated region
      $region57: #{tpu_custom_call.1} parent=5 // pred_check
        %p4151 = pneg %p4150
      $region58: #{tpu_custom_call.1} parent=5 // pred_check_branch
        %4153 = sbr.rel (%p4151) target = $region60
      $region59: #{tpu_custom_call.1} parent=5 // pred_region
        %s4154 = ssub.s32 %s18, 2
        // Predicated region
        $region61: #{tpu_custom_call.1} parent=59 // pred_check
          %p4155 = pneg %p157
        $region62: #{tpu_custom_call.1} parent=59 // pred_check_branch
          %4157 = sbr.rel (%p4155) target = $region64
        $region63: #{tpu_custom_call.1} parent=59 // pred_region
          %s4158 = sand.u32 %s142, 1
          %s4159 = scalar_lea.sflag [#allocation5], %s4158
          %s4160 = sand.u32 %s142, 1
          %s4161 = smul.addr %s4160, 256
          %s4162 = scalar_lea.vmem [#allocation9], %s4161
          %4164 = dma.done %s4159, 4096
        $region64: #{tpu_custom_call.1} parent=59 // pred_fallthru
          _
      $region60: #{tpu_custom_call.1} parent=5 // pred_fallthru
        _
    $region6: #{tpu_custom_call.1} parent=1 // loop_footer
      %s22 = sadd.s32 1, %s18
    $region7: #{tpu_custom_call.1} parent=1 // loop_footer_branch
      %17 = sbr.rel target = $region3
    $region8: #{tpu_custom_call.1} parent=1 // loop_exit
      _
    %4165 = vsyncpa [#allocation4], 1
    %s4166 = scalar_lea.sflag [#allocation4], 1
    %4167 = vsyncpa %s4166, 1
    %4168 = vsyncpa [#allocation7], 1
    %4169 = vsyncpa [#allocation5], 1
    %s4170 = scalar_lea.sflag [#allocation5], 1
    %4171 = vsyncpa %s4170, 1

</llo_original>
